<compile_context>
chip_gen: v7x
topology: tpu7x:2x2x1
jax: 0.10.0
libtpu: 0.0.40
codegen_flags: <defaults>
</compile_context>

<pallas_src>
import jax
import jax.numpy as jnp
import numpy as np
from jax.experimental import pallas as pl
from jax.experimental.pallas import tpu as pltpu

N, C, H, W = 2, 8, 16, 16      # batch, channels_in == channels_out, spatial
K = 3                          # kernelsize
EPS = 1e-5
A_COEF = 1.0
B_COEF = 1.0

Hp = H + 2                     # padded rows (ring of width 1)
WP = 24                        # padded row stride (>= W + 2; H*WP = 384 = 3*128)
L_IMG = 512                    # per-image flat length (lane-tile aligned)
L_OUT = N * L_IMG              # output lanes (1024 = 8*128 -> unmasked vst)
L_IN = L_OUT + 128             # input lanes (zero tail so all slices stay in bounds)
RES_OFF = WP + 1               # lane offset of x[i, j] inside the padded layout
TAP_MAX = (K - 1) * WP + (K - 1)

# static layout invariants (VMEM accesses have no runtime bounds check)
assert WP >= W + 2
assert L_IMG >= Hp * WP                              # padded image fits its block
assert L_IMG >= (H + K - 2) * WP + (W + K - 1)       # valid-output taps stay in-block
assert L_IN >= L_OUT + TAP_MAX                       # every tap slice in bounds
assert L_IN >= L_OUT + RES_OFF                       # residual slice in bounds
assert L_OUT % 128 == 0 and L_IN % 128 == 0


def resblock_kernel(xp_ref, mask_ref, bn_ref, w1t_ref, w2t_ref, o_ref):
    xp = xp_ref[...]                                   # (C, L_IN) f32 padded input
    mask = mask_ref[...]                               # (1, L_IN) f32 interior mask
    bn = bn_ref[...]                                   # (C, 4) folded BN params
    s1, t1 = bn[:, 0:1], bn[:, 1:2]
    s2, t2 = bn[:, 2:3], bn[:, 3:4]

    # bn1 + relu, then conv1 (1x1 transposed conv == channel-mix matmul, whole batch)
    h = jnp.maximum(xp * s1 + t1, 0.0)
    h = jnp.dot(w1t_ref[...], h, preferred_element_type=jnp.float32)   # (C, L_IN)
    # dropout1: identity in eval mode
    # bn2 + relu; zero the padding ring / slack lanes so the conv2 taps see zeros
    h = jnp.maximum(h * s2 + t2, 0.0) * mask

    # conv2: 3x3 transposed conv (stride 1, pad 1) == conv of the zero-padded
    # activation with the spatially flipped kernel.  Nine accumulated
    # (C,C)@(C,L_OUT) dots over the lane-shifted tap windows (no stacked
    # operand materialization; chained acc += dot accumulates in MRB on v7x).
    offs = [p * WP + q for p in range(K) for q in range(K)]
    acc = jnp.dot(w2t_ref[0], h[:, offs[0]:offs[0] + L_OUT],
                  preferred_element_type=jnp.float32)                  # (C, L_OUT)
    for t in range(1, K * K):
        off = offs[t]
        acc = acc + jnp.dot(w2t_ref[t], h[:, off:off + L_OUT],
                            preferred_element_type=jnp.float32)
    # dropout2: identity in eval mode

    # residual (upsample=None): x in output layout is xp lane-shifted by RES_OFF
    resid = xp[:, RES_OFF:RES_OFF + L_OUT]
    if A_COEF == 1.0 and B_COEF == 1.0:                # compile-time constant fold
        o_ref[...] = resid + acc
    else:
        o_ref[...] = A_COEF * resid + B_COEF * acc
    # TODO(synk): train-mode Dropout2d / batch-stat BatchNorm need RNG + batch
    # reductions and are intentionally not reproduced (eval-mode forward only).


def prepare_constants(params):
    """One-time (module-init) precompute: folded BN, flipped weights, mask."""
    (g1, b1, m1, v1, g2, b2, m2, v2, w1, w2) = params

    inv1 = 1.0 / jnp.sqrt(v1 + EPS)
    inv2 = 1.0 / jnp.sqrt(v2 + EPS)
    # folded BN affine params packed into a single (C, 4) array: [s1, t1, s2, t2]
    bn = jnp.stack([g1 * inv1, b1 - m1 * g1 * inv1,
                    g2 * inv2, b2 - m2 * g2 * inv2], axis=1).astype(jnp.float32)

    # ConvTranspose2d 1x1:  y[co] = sum_ci x[ci] * w1[ci, co]  ->  matrix [co, ci]
    w1t = jnp.transpose(w1[:, :, 0, 0], (1, 0)).astype(jnp.float32)
    # ConvTranspose2d KxK (s=1, p=1) == conv over the zero-padded input with the
    # flipped kernel; per-tap matrices w2taps[p*K+q][co, ci] = w2[ci, co, K-1-p, K-1-q]
    w2taps = jnp.transpose(w2[:, :, ::-1, ::-1], (2, 3, 1, 0)
                           ).reshape(K * K, C, C).astype(jnp.float32)

    # interior-pixel mask, one row, broadcast over channels inside the kernel
    m2d = jnp.pad(jnp.ones((H, W), jnp.float32), ((1, 1), (1, WP - W - 1)))
    m_img = jnp.pad(m2d.reshape(Hp * WP), (0, L_IMG - Hp * WP))
    mask = jnp.pad(jnp.tile(m_img, N), (0, L_IN - L_OUT)).reshape(1, L_IN)
    return bn, w1t, w2taps, mask


@jax.jit
def resblock_forward(x, bn, w1t, w2taps, mask):
    # zero-padded images flattened with row stride WP, one L_IMG block per image,
    # channels on sublanes, batch folded into lanes, 128-lane zero tail.
    # (For production, adopt this (C, L) padded layout as the persistent
    # inter-layer activation format so it is produced/consumed only once.)
    xt = jnp.transpose(x, (1, 0, 2, 3))                               # (C, N, H, W)
    xpad = jnp.pad(xt, ((0, 0), (0, 0), (1, 1), (1, WP - W - 1)))     # (C, N, Hp, WP)
    xflat = jnp.pad(xpad.reshape(C, N, Hp * WP),
                    ((0, 0), (0, 0), (0, L_IMG - Hp * WP)))           # (C, N, L_IMG)
    xp = jnp.pad(xflat.reshape(C, L_OUT), ((0, 0), (0, L_IN - L_OUT)))  # (C, L_IN)

    vmem = pl.BlockSpec(memory_space=pltpu.MemorySpace.VMEM)
    out_flat = pl.pallas_call(
        resblock_kernel,
        out_shape=jax.ShapeDtypeStruct((C, L_OUT), jnp.float32),
        in_specs=[vmem] * 5,
        out_specs=vmem,
    )(xp, mask, bn, w1t, w2taps)

    # drop the per-row / per-image slack lanes and restore NCHW
    out = out_flat.reshape(C, N, L_IMG)[:, :, :H * WP]
    out = out.reshape(C, N, H, WP)[:, :, :, :W]
    return jnp.transpose(out, (1, 0, 2, 3))


def reference_forward(x, params):
    """Pure-JAX reference following PyTorch op definitions directly (NCHW)."""
    (g1, b1, m1, v1, g2, b2, m2, v2, w1, w2) = params

    def bn(t, g, bta, m, v):
        inv = 1.0 / jnp.sqrt(v + EPS)
        return ((t - m[None, :, None, None]) * inv[None, :, None, None]
                * g[None, :, None, None] + bta[None, :, None, None])

    out = jnp.maximum(bn(x, g1, b1, m1, v1), 0.0)
    out = jnp.einsum('nihw,io->nohw', out, w1[:, :, 0, 0])          # 1x1 transp. conv
    out = jnp.maximum(bn(out, g2, b2, m2, v2), 0.0)
    # KxK transposed conv by its scatter definition: i = h*stride - padding + p
    y_full = jnp.zeros((N, C, H + K - 1, W + K - 1), jnp.float32)
    for p in range(K):
        for q in range(K):
            contrib = jnp.einsum('nihw,io->nohw', out, w2[:, :, p, q])
            y_full = y_full.at[:, :, p:p + H, q:q + W].add(contrib)
    y = y_full[:, :, 1:1 + H, 1:1 + W]                              # crop padding=1
    return A_COEF * x + B_COEF * y


if __name__ == "__main__":
    key = jax.random.PRNGKey(0)
    ks = jax.random.split(key, 11)
    x = jax.random.normal(ks[0], (N, C, H, W), jnp.float32)
    w1 = jax.random.normal(ks[1], (C, C, 1, 1), jnp.float32) * 0.3
    w2 = jax.random.normal(ks[2], (C, C, K, K), jnp.float32) * 0.1
    g1 = jax.random.uniform(ks[3], (C,), jnp.float32, 0.5, 1.5)
    b1 = jax.random.normal(ks[4], (C,), jnp.float32) * 0.1
    m1 = jax.random.normal(ks[5], (C,), jnp.float32) * 0.1
    v1 = jax.random.uniform(ks[6], (C,), jnp.float32, 0.5, 1.5)
    g2 = jax.random.uniform(ks[7], (C,), jnp.float32, 0.5, 1.5)
    b2 = jax.random.normal(ks[8], (C,), jnp.float32) * 0.1
    m2 = jax.random.normal(ks[9], (C,), jnp.float32) * 0.1
    v2 = jax.random.uniform(ks[10], (C,), jnp.float32, 0.5, 1.5)
    params = (g1, b1, m1, v1, g2, b2, m2, v2, w1, w2)

    # one-time precompute (module init), hoisted out of the per-step jit
    bn, w1t, w2taps, mask = prepare_constants(params)

    out = resblock_forward(x, bn, w1t, w2taps, mask)
    out = jax.block_until_ready(out)

    ref = reference_forward(x, params)
    assert out.shape == (N, C, H, W), out.shape
    assert np.allclose(np.asarray(out), np.asarray(ref), rtol=2e-2, atol=2e-2), (
        "max abs err = %g" % float(np.max(np.abs(np.asarray(out) - np.asarray(ref)))))
    print("KERNEL_OK")
</pallas_src>

<mosaic_0001>
module attributes {stable_mosaic.version = 11 : i64} {
  func.func @resblock_kernel(%arg0: memref<8x1152xf32, #tpu.memory_space<vmem>>, %arg1: memref<1x1152xf32, #tpu.memory_space<vmem>>, %arg2: memref<8x4xf32, #tpu.memory_space<vmem>>, %arg3: memref<8x8xf32, #tpu.memory_space<vmem>>, %arg4: memref<9x8x8xf32, #tpu.memory_space<vmem>>, %arg5: memref<8x1024xf32, #tpu.memory_space<vmem>>) attributes {dimension_semantics = [], scalar_prefetch = 0 : i64, scratch_operands = 0 : i64, tpu.core_type = #tpu.core_type<tc>} {
    %c0 = arith.constant 0 : index
    %c0_0 = arith.constant 0 : index
    %0 = vector.load %arg0[%c0, %c0_0] : memref<8x1152xf32, #tpu.memory_space<vmem>>, vector<8x1152xf32>
    %c0_1 = arith.constant 0 : index
    %c0_2 = arith.constant 0 : index
    %1 = vector.load %arg1[%c0_1, %c0_2] : memref<1x1152xf32, #tpu.memory_space<vmem>>, vector<1x1152xf32>
    %c0_3 = arith.constant 0 : index
    %c0_4 = arith.constant 0 : index
    %2 = vector.load %arg2[%c0_3, %c0_4] : memref<8x4xf32, #tpu.memory_space<vmem>>, vector<8x4xf32>
    %3 = vector.extract_strided_slice %2 {offsets = [0, 0], sizes = [8, 1], strides = [1, 1]} : vector<8x4xf32> to vector<8x1xf32>
    %4 = vector.extract_strided_slice %2 {offsets = [0, 1], sizes = [8, 1], strides = [1, 1]} : vector<8x4xf32> to vector<8x1xf32>
    %5 = vector.extract_strided_slice %2 {offsets = [0, 2], sizes = [8, 1], strides = [1, 1]} : vector<8x4xf32> to vector<8x1xf32>
    %6 = vector.extract_strided_slice %2 {offsets = [0, 3], sizes = [8, 1], strides = [1, 1]} : vector<8x4xf32> to vector<8x1xf32>
    %7 = vector.broadcast %3 : vector<8x1xf32> to vector<8x1152xf32>
    %8 = arith.mulf %0, %7 : vector<8x1152xf32>
    %9 = vector.broadcast %4 : vector<8x1xf32> to vector<8x1152xf32>
    %10 = arith.addf %8, %9 : vector<8x1152xf32>
    %cst = arith.constant 0.000000e+00 : f32
    %11 = vector.broadcast %cst : f32 to vector<8x1152xf32>
    %12 = arith.maximumf %10, %11 : vector<8x1152xf32>
    %c0_5 = arith.constant 0 : index
    %c0_6 = arith.constant 0 : index
    %13 = vector.load %arg3[%c0_5, %c0_6] : memref<8x8xf32, #tpu.memory_space<vmem>>, vector<8x8xf32>
    %cst_7 = arith.constant dense<0.000000e+00> : vector<8x1152xf32>
    %14 = tpu.matmul %13, %12, %cst_7 {dimension_numbers = #tpu.dot_dimension_numbers<[1], [0], [0], [1], [0, 0, 1, 1], [], []>} : vector<8x8xf32>, vector<8x1152xf32>, vector<8x1152xf32> -> vector<8x1152xf32>
    %15 = vector.broadcast %5 : vector<8x1xf32> to vector<8x1152xf32>
    %16 = arith.mulf %14, %15 : vector<8x1152xf32>
    %17 = vector.broadcast %6 : vector<8x1xf32> to vector<8x1152xf32>
    %18 = arith.addf %16, %17 : vector<8x1152xf32>
    %cst_8 = arith.constant 0.000000e+00 : f32
    %19 = vector.broadcast %cst_8 : f32 to vector<8x1152xf32>
    %20 = arith.maximumf %18, %19 : vector<8x1152xf32>
    %21 = vector.broadcast %1 : vector<1x1152xf32> to vector<8x1152xf32>
    %22 = arith.mulf %20, %21 : vector<8x1152xf32>
    %c0_9 = arith.constant 0 : index
    %c0_10 = arith.constant 0 : index
    %c0_11 = arith.constant 0 : index
    %23 = vector.load %arg4[%c0_9, %c0_10, %c0_11] : memref<9x8x8xf32, #tpu.memory_space<vmem>>, vector<1x8x8xf32>
    %24 = vector.shape_cast %23 : vector<1x8x8xf32> to vector<8x8xf32>
    %25 = vector.extract_strided_slice %22 {offsets = [0, 0], sizes = [8, 1024], strides = [1, 1]} : vector<8x1152xf32> to vector<8x1024xf32>
    %cst_12 = arith.constant dense<0.000000e+00> : vector<8x1024xf32>
    %26 = tpu.matmul %24, %25, %cst_12 {dimension_numbers = #tpu.dot_dimension_numbers<[1], [0], [0], [1], [0, 0, 1, 1], [], []>} : vector<8x8xf32>, vector<8x1024xf32>, vector<8x1024xf32> -> vector<8x1024xf32>
    %c1 = arith.constant 1 : index
    %c0_13 = arith.constant 0 : index
    %c0_14 = arith.constant 0 : index
    %27 = vector.load %arg4[%c1, %c0_13, %c0_14] : memref<9x8x8xf32, #tpu.memory_space<vmem>>, vector<1x8x8xf32>
    %28 = vector.shape_cast %27 : vector<1x8x8xf32> to vector<8x8xf32>
    %29 = vector.extract_strided_slice %22 {offsets = [0, 1], sizes = [8, 1024], strides = [1, 1]} : vector<8x1152xf32> to vector<8x1024xf32>
    %cst_15 = arith.constant dense<0.000000e+00> : vector<8x1024xf32>
    %30 = tpu.matmul %28, %29, %cst_15 {dimension_numbers = #tpu.dot_dimension_numbers<[1], [0], [0], [1], [0, 0, 1, 1], [], []>} : vector<8x8xf32>, vector<8x1024xf32>, vector<8x1024xf32> -> vector<8x1024xf32>
    %31 = arith.addf %26, %30 : vector<8x1024xf32>
    %c2 = arith.constant 2 : index
    %c0_16 = arith.constant 0 : index
    %c0_17 = arith.constant 0 : index
    %32 = vector.load %arg4[%c2, %c0_16, %c0_17] : memref<9x8x8xf32, #tpu.memory_space<vmem>>, vector<1x8x8xf32>
    %33 = vector.shape_cast %32 : vector<1x8x8xf32> to vector<8x8xf32>
    %34 = vector.extract_strided_slice %22 {offsets = [0, 2], sizes = [8, 1024], strides = [1, 1]} : vector<8x1152xf32> to vector<8x1024xf32>
    %cst_18 = arith.constant dense<0.000000e+00> : vector<8x1024xf32>
    %35 = tpu.matmul %33, %34, %cst_18 {dimension_numbers = #tpu.dot_dimension_numbers<[1], [0], [0], [1], [0, 0, 1, 1], [], []>} : vector<8x8xf32>, vector<8x1024xf32>, vector<8x1024xf32> -> vector<8x1024xf32>
    %36 = arith.addf %31, %35 : vector<8x1024xf32>
    %c3 = arith.constant 3 : index
    %c0_19 = arith.constant 0 : index
    %c0_20 = arith.constant 0 : index
    %37 = vector.load %arg4[%c3, %c0_19, %c0_20] : memref<9x8x8xf32, #tpu.memory_space<vmem>>, vector<1x8x8xf32>
    %38 = vector.shape_cast %37 : vector<1x8x8xf32> to vector<8x8xf32>
    %39 = vector.extract_strided_slice %22 {offsets = [0, 24], sizes = [8, 1024], strides = [1, 1]} : vector<8x1152xf32> to vector<8x1024xf32>
    %cst_21 = arith.constant dense<0.000000e+00> : vector<8x1024xf32>
    %40 = tpu.matmul %38, %39, %cst_21 {dimension_numbers = #tpu.dot_dimension_numbers<[1], [0], [0], [1], [0, 0, 1, 1], [], []>} : vector<8x8xf32>, vector<8x1024xf32>, vector<8x1024xf32> -> vector<8x1024xf32>
    %41 = arith.addf %36, %40 : vector<8x1024xf32>
    %c4 = arith.constant 4 : index
    %c0_22 = arith.constant 0 : index
    %c0_23 = arith.constant 0 : index
    %42 = vector.load %arg4[%c4, %c0_22, %c0_23] : memref<9x8x8xf32, #tpu.memory_space<vmem>>, vector<1x8x8xf32>
    %43 = vector.shape_cast %42 : vector<1x8x8xf32> to vector<8x8xf32>
    %44 = vector.extract_strided_slice %22 {offsets = [0, 25], sizes = [8, 1024], strides = [1, 1]} : vector<8x1152xf32> to vector<8x1024xf32>
    %cst_24 = arith.constant dense<0.000000e+00> : vector<8x1024xf32>
    %45 = tpu.matmul %43, %44, %cst_24 {dimension_numbers = #tpu.dot_dimension_numbers<[1], [0], [0], [1], [0, 0, 1, 1], [], []>} : vector<8x8xf32>, vector<8x1024xf32>, vector<8x1024xf32> -> vector<8x1024xf32>
    %46 = arith.addf %41, %45 : vector<8x1024xf32>
    %c5 = arith.constant 5 : index
    %c0_25 = arith.constant 0 : index
    %c0_26 = arith.constant 0 : index
    %47 = vector.load %arg4[%c5, %c0_25, %c0_26] : memref<9x8x8xf32, #tpu.memory_space<vmem>>, vector<1x8x8xf32>
    %48 = vector.shape_cast %47 : vector<1x8x8xf32> to vector<8x8xf32>
    %49 = vector.extract_strided_slice %22 {offsets = [0, 26], sizes = [8, 1024], strides = [1, 1]} : vector<8x1152xf32> to vector<8x1024xf32>
    %cst_27 = arith.constant dense<0.000000e+00> : vector<8x1024xf32>
    %50 = tpu.matmul %48, %49, %cst_27 {dimension_numbers = #tpu.dot_dimension_numbers<[1], [0], [0], [1], [0, 0, 1, 1], [], []>} : vector<8x8xf32>, vector<8x1024xf32>, vector<8x1024xf32> -> vector<8x1024xf32>
    %51 = arith.addf %46, %50 : vector<8x1024xf32>
    %c6 = arith.constant 6 : index
    %c0_28 = arith.constant 0 : index
    %c0_29 = arith.constant 0 : index
    %52 = vector.load %arg4[%c6, %c0_28, %c0_29] : memref<9x8x8xf32, #tpu.memory_space<vmem>>, vector<1x8x8xf32>
    %53 = vector.shape_cast %52 : vector<1x8x8xf32> to vector<8x8xf32>
    %54 = vector.extract_strided_slice %22 {offsets = [0, 48], sizes = [8, 1024], strides = [1, 1]} : vector<8x1152xf32> to vector<8x1024xf32>
    %cst_30 = arith.constant dense<0.000000e+00> : vector<8x1024xf32>
    %55 = tpu.matmul %53, %54, %cst_30 {dimension_numbers = #tpu.dot_dimension_numbers<[1], [0], [0], [1], [0, 0, 1, 1], [], []>} : vector<8x8xf32>, vector<8x1024xf32>, vector<8x1024xf32> -> vector<8x1024xf32>
    %56 = arith.addf %51, %55 : vector<8x1024xf32>
    %c7 = arith.constant 7 : index
    %c0_31 = arith.constant 0 : index
    %c0_32 = arith.constant 0 : index
    %57 = vector.load %arg4[%c7, %c0_31, %c0_32] : memref<9x8x8xf32, #tpu.memory_space<vmem>>, vector<1x8x8xf32>
    %58 = vector.shape_cast %57 : vector<1x8x8xf32> to vector<8x8xf32>
    %59 = vector.extract_strided_slice %22 {offsets = [0, 49], sizes = [8, 1024], strides = [1, 1]} : vector<8x1152xf32> to vector<8x1024xf32>
    %cst_33 = arith.constant dense<0.000000e+00> : vector<8x1024xf32>
    %60 = tpu.matmul %58, %59, %cst_33 {dimension_numbers = #tpu.dot_dimension_numbers<[1], [0], [0], [1], [0, 0, 1, 1], [], []>} : vector<8x8xf32>, vector<8x1024xf32>, vector<8x1024xf32> -> vector<8x1024xf32>
    %61 = arith.addf %56, %60 : vector<8x1024xf32>
    %c8 = arith.constant 8 : index
    %c0_34 = arith.constant 0 : index
    %c0_35 = arith.constant 0 : index
    %62 = vector.load %arg4[%c8, %c0_34, %c0_35] : memref<9x8x8xf32, #tpu.memory_space<vmem>>, vector<1x8x8xf32>
    %63 = vector.shape_cast %62 : vector<1x8x8xf32> to vector<8x8xf32>
    %64 = vector.extract_strided_slice %22 {offsets = [0, 50], sizes = [8, 1024], strides = [1, 1]} : vector<8x1152xf32> to vector<8x1024xf32>
    %cst_36 = arith.constant dense<0.000000e+00> : vector<8x1024xf32>
    %65 = tpu.matmul %63, %64, %cst_36 {dimension_numbers = #tpu.dot_dimension_numbers<[1], [0], [0], [1], [0, 0, 1, 1], [], []>} : vector<8x8xf32>, vector<8x1024xf32>, vector<8x1024xf32> -> vector<8x1024xf32>
    %66 = arith.addf %61, %65 : vector<8x1024xf32>
    %67 = vector.extract_strided_slice %0 {offsets = [0, 25], sizes = [8, 1024], strides = [1, 1]} : vector<8x1152xf32> to vector<8x1024xf32>
    %68 = arith.addf %67, %66 : vector<8x1024xf32>
    %c0_37 = arith.constant 0 : index
    %c0_38 = arith.constant 0 : index
    %69 = vector.load %arg5[%c0_37, %c0_38] : memref<8x1024xf32, #tpu.memory_space<vmem>>, vector<8x1024xf32>
    tpu.vector_store %arg5[%c0_37, %c0_38], %68 {strides = array<i32>} : memref<8x1024xf32, #tpu.memory_space<vmem>>, vector<8x1024xf32>,
    return
  }
}

</mosaic_0001>

<llo_original>
// kernel: resblock_forward.1
$region0: #{resblock_forward.1}
  #allocation0 [shape = 'u32[]', space=smem, size = 0x4, offset = 0x4, fixed_abs, tag = 'smem constant byte address 0x4 - core index']
  #allocation1 [shape = 'u32[144,128]{1,0:T(1,128)}', space=vmem, size = 0x12000, scoped, tag = 'internal scratch']
  %s0 = inlined_call_operand.vmem [shape: f32[8,1152], index: 0, kind: input, shape index: {}]
  %s1 = inlined_call_operand.vmem [shape: f32[1,1152], index: 1, kind: input, shape index: {}]
  %s2 = inlined_call_operand.vmem [shape: f32[8,4], index: 2, kind: input, shape index: {}]
  %s3 = inlined_call_operand.vmem [shape: f32[8,8], index: 3, kind: input, shape index: {}]
  %s4 = inlined_call_operand.vmem [shape: f32[9,8,8], index: 4, kind: input, shape index: {}]
  %s5 = inlined_call_operand.vmem [shape: f32[8,1024], index: 5, kind: output, shape index: {}]
  %s6 = sld [smem:[#allocation0]]
  $region30: #{resblock_forward.1} parent=0
    _
  %s8 = ssub.s32 1, %s6
  %s9 = scalar_select 0, %s8, %s6
  // Predicated region
  $region2: #{resblock_forward.1} parent=0 // pred_check
    _
  $region3: #{resblock_forward.1} parent=0 // pred_check_branch
    %11 = sbr.rel (0) target = $region5
  $region4: #{resblock_forward.1} parent=0 // pred_region
    _
  $region5: #{resblock_forward.1} parent=0 // pred_fallthru
    _
  // Predicated region
  $region6: #{resblock_forward.1} parent=0 // pred_check
    _
  $region7: #{resblock_forward.1} parent=0 // pred_check_branch
    %13 = sbr.rel (0) target = $region9
  $region8: #{resblock_forward.1} parent=0 // pred_region
    _
  $region9: #{resblock_forward.1} parent=0 // pred_fallthru
    _
  // Predicated region
  $region10: #{resblock_forward.1} parent=0 // pred_check
    _
  $region11: #{resblock_forward.1} parent=0 // pred_check_branch
    %15 = sbr.rel (0) target = $region13
  $region12: #{resblock_forward.1} parent=0 // pred_region
    _
  $region13: #{resblock_forward.1} parent=0 // pred_fallthru
    _
  // Predicated region
  $region14: #{resblock_forward.1} parent=0 // pred_check
    _
  $region15: #{resblock_forward.1} parent=0 // pred_check_branch
    %17 = sbr.rel (0) target = $region17
  $region16: #{resblock_forward.1} parent=0 // pred_region
    _
  $region17: #{resblock_forward.1} parent=0 // pred_fallthru
    _
  // Predicated region
  $region18: #{resblock_forward.1} parent=0 // pred_check
    _
  $region19: #{resblock_forward.1} parent=0 // pred_check_branch
    %19 = sbr.rel (0) target = $region21
  $region20: #{resblock_forward.1} parent=0 // pred_region
    _
  $region21: #{resblock_forward.1} parent=0 // pred_fallthru
    _
  %v20 = vld [vmem:[%s0] sm:$0xff]
  %v21 = vld [vmem:[%s0 + $0x8] sm:$0xff]
  %v22 = vld [vmem:[%s0 + $0x10] sm:$0xff]
  %v23 = vld [vmem:[%s0 + $0x18] sm:$0xff]
  %v24 = vld [vmem:[%s0 + $0x20] sm:$0xff]
  %v25 = vld [vmem:[%s0 + $0x28] sm:$0xff]
  %v26 = vld [vmem:[%s0 + $0x30] sm:$0xff]
  %v27 = vld [vmem:[%s0 + $0x38] sm:$0xff]
  %v28 = vld [vmem:[%s0 + $0x40] sm:$0xff]
  %v29 = vld [vmem:[%s1] sm:$0xff]
  %v30 = vld [vmem:[%s1 + $0x8] sm:$0x1]
  %v31 = vld [vmem:[%s2] sm:$0xff]
  %33 = vset.pattern.permute.xlu0 0
  %34 = vperm.xlu0 %33, %v31
  %v35 = vpop.permute.xlu0 %34
  %v37 = vmul.f32 %v20, %v35
  %v38 = vmul.f32 %v21, %v35
  %v39 = vmul.f32 %v22, %v35
  %v40 = vmul.f32 %v23, %v35
  %v41 = vmul.f32 %v24, %v35
  %v42 = vmul.f32 %v25, %v35
  %v43 = vmul.f32 %v26, %v35
  %v44 = vmul.f32 %v27, %v35
  %v45 = vmul.f32 %v28, %v35
  %46 = vset.pattern.permute.xlu0 1
  %47 = vperm.xlu0 %46, %v31
  %v48 = vpop.permute.xlu0 %47
  %v50 = vadd.f32 %v37, %v48
  %v51 = vadd.f32 %v38, %v48
  %v52 = vadd.f32 %v39, %v48
  %v53 = vadd.f32 %v40, %v48
  %v54 = vadd.f32 %v41, %v48
  %v55 = vadd.f32 %v42, %v48
  %v56 = vadd.f32 %v43, %v48
  %v57 = vadd.f32 %v44, %v48
  %v58 = vadd.f32 %v45, %v48
  %v59 = vmax.f32 %v50, 0.0
  %v60 = vmax.f32 %v51, 0.0
  %v61 = vmax.f32 %v52, 0.0
  %v62 = vmax.f32 %v53, 0.0
  %v63 = vmax.f32 %v54, 0.0
  %v64 = vmax.f32 %v55, 0.0
  %v65 = vmax.f32 %v56, 0.0
  %v66 = vmax.f32 %v57, 0.0
  %v67 = vmax.f32 %v58, 0.0
  %v68 = vld [vmem:[%s3] sm:$0xff]
  %vm69 = vcmask 64512
  %v71 = vsel %vm69, %v68, 0
  %73 = vmatprep.subr.mxu0 %v60
  %74 = vmatpush1.msra.mxu0 %v59
  %75 = vmatprep.subr.mxu0 0.0
  %76 = vmatpush1.msra.mxu0 0.0
  %77 = vmatprep.subr.mxu0 0.0
  %78 = vmatpush1.msra.mxu0 0.0
  %79 = vmatprep.subr.mxu0 0.0
  %80 = vmatpush1.msra.mxu0 0.0
  %81 = vmatprep.subr.mxu0 0.0
  %82 = vmatpush1.msra.mxu0 0.0
  %83 = vmatprep.subr.mxu0 0.0
  %84 = vmatpush1.msra.mxu0 0.0
  %85 = vmatprep.subr.mxu0 0.0
  %86 = vmatpush1.msra.mxu0 0.0
  %87 = vmatprep.subr.mxu0 0.0
  %88 = vmatpush1.msra.mxu0 0.0
  %89 = vmatprep.subr.mxu0 0.0
  %90 = vmatpush1.msra.mxu0 0.0
  %91 = vmatprep.subr.mxu0 0.0
  %92 = vmatpush1.msra.mxu0 0.0
  %93 = vmatprep.subr.mxu0 0.0
  %94 = vmatpush1.msra.mxu0 0.0
  %95 = vmatprep.subr.mxu0 0.0
  %96 = vmatpush1.msra.mxu0 0.0
  %97 = vmatprep.subr.mxu0 0.0
  %98 = vmatpush1.msra.mxu0 0.0
  %99 = vmatprep.subr.mxu0 0.0
  %100 = vmatpush1.msra.mxu0 0.0
  %101 = vmatprep.subr.mxu0 0.0
  %102 = vmatpush1.msra.mxu0 0.0
  %103 = vmatprep.subr.mxu0 0.0
  %104 = vmatpush1.msra.mxu0 0.0
  %105 = vmatprep.subr.mxu0 0.0
  %106 = vmatpush1.msra.mxu0 0.0
  %107 = vmatprep.subr.mxu0 0.0
  %108 = vmatpush1.msra.mxu0 0.0
  %109 = vmatprep.subr.mxu0 0.0
  %110 = vmatpush1.msra.mxu0 0.0
  %111 = vmatprep.subr.mxu0 0.0
  %112 = vmatpush1.msra.mxu0 0.0
  %113 = vmatprep.subr.mxu0 0.0
  %114 = vmatpush1.msra.mxu0 0.0
  %115 = vmatprep.subr.mxu0 0.0
  %116 = vmatpush1.msra.mxu0 0.0
  %117 = vmatprep.subr.mxu0 0.0
  %118 = vmatpush1.msra.mxu0 0.0
  %119 = vmatprep.subr.mxu0 0.0
  %120 = vmatpush1.msra.mxu0 0.0
  %121 = vmatprep.subr.mxu0 0.0
  %122 = vmatpush1.msra.mxu0 0.0
  %123 = vmatprep.subr.mxu0 0.0
  %124 = vmatpush1.msra.mxu0 0.0
  %125 = vmatprep.subr.mxu0 0.0
  %126 = vmatpush1.msra.mxu0 0.0
  %127 = vmatprep.subr.mxu0 0.0
  %128 = vmatpush1.msra.mxu0 0.0
  %129 = vmatprep.subr.mxu0 0.0
  %130 = vmatpush1.msra.mxu0 0.0
  %131 = vmatprep.subr.mxu0 0.0
  %132 = vmatpush1.msra.mxu0 0.0
  %133 = vmatprep.subr.mxu0 0.0
  %134 = vmatpush1.msra.mxu0 0.0
  %135 = vmatprep.subr.mxu0 0.0
  %136 = vmatpush1.msra.mxu0 0.0
  %137 = vmatprep.mubr.f32.mxu0 0.0
  %138 = vmatmul.mubr.f32.gmra.mrb[0].mxu0 %v71
  %v139 = vpop.f32.mrb[0].mxu0
  %v140 = vadd.f32 0.0, %v139
  %v141 = vpop.f32.mrb[0].mxu0
  %v142 = vadd.f32 0.0, %v141
  %143 = vdwg.mxu0
  %144 = vmatprep.subr.mxu0 %v62
  %145 = vmatpush1.msra.mxu0 %v61
  %146 = vmatprep.subr.mxu0 0.0
  %147 = vmatpush1.msra.mxu0 0.0
  %148 = vmatprep.subr.mxu0 0.0
  %149 = vmatpush1.msra.mxu0 0.0
  %150 = vmatprep.subr.mxu0 0.0
  %151 = vmatpush1.msra.mxu0 0.0
  %152 = vmatprep.subr.mxu0 0.0
  %153 = vmatpush1.msra.mxu0 0.0
  %154 = vmatprep.subr.mxu0 0.0
  %155 = vmatpush1.msra.mxu0 0.0
  %156 = vmatprep.subr.mxu0 0.0
  %157 = vmatpush1.msra.mxu0 0.0
  %158 = vmatprep.subr.mxu0 0.0
  %159 = vmatpush1.msra.mxu0 0.0
  %160 = vmatprep.subr.mxu0 0.0
  %161 = vmatpush1.msra.mxu0 0.0
  %162 = vmatprep.subr.mxu0 0.0
  %163 = vmatpush1.msra.mxu0 0.0
  %164 = vmatprep.subr.mxu0 0.0
  %165 = vmatpush1.msra.mxu0 0.0
  %166 = vmatprep.subr.mxu0 0.0
  %167 = vmatpush1.msra.mxu0 0.0
  %168 = vmatprep.subr.mxu0 0.0
  %169 = vmatpush1.msra.mxu0 0.0
  %170 = vmatprep.subr.mxu0 0.0
  %171 = vmatpush1.msra.mxu0 0.0
  %172 = vmatprep.subr.mxu0 0.0
  %173 = vmatpush1.msra.mxu0 0.0
  %174 = vmatprep.subr.mxu0 0.0
  %175 = vmatpush1.msra.mxu0 0.0
  %176 = vmatprep.subr.mxu0 0.0
  %177 = vmatpush1.msra.mxu0 0.0
  %178 = vmatprep.subr.mxu0 0.0
  %179 = vmatpush1.msra.mxu0 0.0
  %180 = vmatprep.subr.mxu0 0.0
  %181 = vmatpush1.msra.mxu0 0.0
  %182 = vmatprep.subr.mxu0 0.0
  %183 = vmatpush1.msra.mxu0 0.0
  %184 = vmatprep.subr.mxu0 0.0
  %185 = vmatpush1.msra.mxu0 0.0
  %186 = vmatprep.subr.mxu0 0.0
  %187 = vmatpush1.msra.mxu0 0.0
  %188 = vmatprep.subr.mxu0 0.0
  %189 = vmatpush1.msra.mxu0 0.0
  %190 = vmatprep.subr.mxu0 0.0
  %191 = vmatpush1.msra.mxu0 0.0
  %192 = vmatprep.subr.mxu0 0.0
  %193 = vmatpush1.msra.mxu0 0.0
  %194 = vmatprep.subr.mxu0 0.0
  %195 = vmatpush1.msra.mxu0 0.0
  %196 = vmatprep.subr.mxu0 0.0
  %197 = vmatpush1.msra.mxu0 0.0
  %198 = vmatprep.subr.mxu0 0.0
  %199 = vmatpush1.msra.mxu0 0.0
  %200 = vmatprep.subr.mxu0 0.0
  %201 = vmatpush1.msra.mxu0 0.0
  %202 = vmatprep.subr.mxu0 0.0
  %203 = vmatpush1.msra.mxu0 0.0
  %204 = vmatprep.subr.mxu0 0.0
  %205 = vmatpush1.msra.mxu0 0.0
  %206 = vmatprep.subr.mxu0 0.0
  %207 = vmatpush1.msra.mxu0 0.0
  %208 = vmatprep.mubr.f32.mxu0 0.0
  %209 = vmatmul.mubr.f32.gmra.mrb[0].mxu0 %v71
  %v210 = vpop.f32.mrb[0].mxu0
  %v211 = vadd.f32 0.0, %v210
  %v212 = vpop.f32.mrb[0].mxu0
  %v213 = vadd.f32 0.0, %v212
  %214 = vdwg.mxu0
  %215 = vmatprep.subr.mxu0 %v64
  %216 = vmatpush1.msra.mxu0 %v63
  %217 = vmatprep.subr.mxu0 0.0
  %218 = vmatpush1.msra.mxu0 0.0
  %219 = vmatprep.subr.mxu0 0.0
  %220 = vmatpush1.msra.mxu0 0.0
  %221 = vmatprep.subr.mxu0 0.0
  %222 = vmatpush1.msra.mxu0 0.0
  %223 = vmatprep.subr.mxu0 0.0
  %224 = vmatpush1.msra.mxu0 0.0
  %225 = vmatprep.subr.mxu0 0.0
  %226 = vmatpush1.msra.mxu0 0.0
  %227 = vmatprep.subr.mxu0 0.0
  %228 = vmatpush1.msra.mxu0 0.0
  %229 = vmatprep.subr.mxu0 0.0
  %230 = vmatpush1.msra.mxu0 0.0
  %231 = vmatprep.subr.mxu0 0.0
  %232 = vmatpush1.msra.mxu0 0.0
  %233 = vmatprep.subr.mxu0 0.0
  %234 = vmatpush1.msra.mxu0 0.0
  %235 = vmatprep.subr.mxu0 0.0
  %236 = vmatpush1.msra.mxu0 0.0
  %237 = vmatprep.subr.mxu0 0.0
  %238 = vmatpush1.msra.mxu0 0.0
  %239 = vmatprep.subr.mxu0 0.0
  %240 = vmatpush1.msra.mxu0 0.0
  %241 = vmatprep.subr.mxu0 0.0
  %242 = vmatpush1.msra.mxu0 0.0
  %243 = vmatprep.subr.mxu0 0.0
  %244 = vmatpush1.msra.mxu0 0.0
  %245 = vmatprep.subr.mxu0 0.0
  %246 = vmatpush1.msra.mxu0 0.0
  %247 = vmatprep.subr.mxu0 0.0
  %248 = vmatpush1.msra.mxu0 0.0
  %249 = vmatprep.subr.mxu0 0.0
  %250 = vmatpush1.msra.mxu0 0.0
  %251 = vmatprep.subr.mxu0 0.0
  %252 = vmatpush1.msra.mxu0 0.0
  %253 = vmatprep.subr.mxu0 0.0
  %254 = vmatpush1.msra.mxu0 0.0
  %255 = vmatprep.subr.mxu0 0.0
  %256 = vmatpush1.msra.mxu0 0.0
  %257 = vmatprep.subr.mxu0 0.0
  %258 = vmatpush1.msra.mxu0 0.0
  %259 = vmatprep.subr.mxu0 0.0
  %260 = vmatpush1.msra.mxu0 0.0
  %261 = vmatprep.subr.mxu0 0.0
  %262 = vmatpush1.msra.mxu0 0.0
  %263 = vmatprep.subr.mxu0 0.0
  %264 = vmatpush1.msra.mxu0 0.0
  %265 = vmatprep.subr.mxu0 0.0
  %266 = vmatpush1.msra.mxu0 0.0
  %267 = vmatprep.subr.mxu0 0.0
  %268 = vmatpush1.msra.mxu0 0.0
  %269 = vmatprep.subr.mxu0 0.0
  %270 = vmatpush1.msra.mxu0 0.0
  %271 = vmatprep.subr.mxu0 0.0
  %272 = vmatpush1.msra.mxu0 0.0
  %273 = vmatprep.subr.mxu0 0.0
  %274 = vmatpush1.msra.mxu0 0.0
  %275 = vmatprep.subr.mxu0 0.0
  %276 = vmatpush1.msra.mxu0 0.0
  %277 = vmatprep.subr.mxu0 0.0
  %278 = vmatpush1.msra.mxu0 0.0
  %279 = vmatprep.mubr.f32.mxu0 0.0
  %280 = vmatmul.mubr.f32.gmra.mrb[0].mxu0 %v71
  %v281 = vpop.f32.mrb[0].mxu0
  %v282 = vadd.f32 0.0, %v281
  %v283 = vpop.f32.mrb[0].mxu0
  %v284 = vadd.f32 0.0, %v283
  %285 = vdwg.mxu0
  %286 = vmatprep.subr.mxu0 %v66
  %287 = vmatpush1.msra.mxu0 %v65
  %288 = vmatprep.subr.mxu0 0.0
  %289 = vmatpush1.msra.mxu0 0.0
  %290 = vmatprep.subr.mxu0 0.0
  %291 = vmatpush1.msra.mxu0 0.0
  %292 = vmatprep.subr.mxu0 0.0
  %293 = vmatpush1.msra.mxu0 0.0
  %294 = vmatprep.subr.mxu0 0.0
  %295 = vmatpush1.msra.mxu0 0.0
  %296 = vmatprep.subr.mxu0 0.0
  %297 = vmatpush1.msra.mxu0 0.0
  %298 = vmatprep.subr.mxu0 0.0
  %299 = vmatpush1.msra.mxu0 0.0
  %300 = vmatprep.subr.mxu0 0.0
  %301 = vmatpush1.msra.mxu0 0.0
  %302 = vmatprep.subr.mxu0 0.0
  %303 = vmatpush1.msra.mxu0 0.0
  %304 = vmatprep.subr.mxu0 0.0
  %305 = vmatpush1.msra.mxu0 0.0
  %306 = vmatprep.subr.mxu0 0.0
  %307 = vmatpush1.msra.mxu0 0.0
  %308 = vmatprep.subr.mxu0 0.0
  %309 = vmatpush1.msra.mxu0 0.0
  %310 = vmatprep.subr.mxu0 0.0
  %311 = vmatpush1.msra.mxu0 0.0
  %312 = vmatprep.subr.mxu0 0.0
  %313 = vmatpush1.msra.mxu0 0.0
  %314 = vmatprep.subr.mxu0 0.0
  %315 = vmatpush1.msra.mxu0 0.0
  %316 = vmatprep.subr.mxu0 0.0
  %317 = vmatpush1.msra.mxu0 0.0
  %318 = vmatprep.subr.mxu0 0.0
  %319 = vmatpush1.msra.mxu0 0.0
  %320 = vmatprep.subr.mxu0 0.0
  %321 = vmatpush1.msra.mxu0 0.0
  %322 = vmatprep.subr.mxu0 0.0
  %323 = vmatpush1.msra.mxu0 0.0
  %324 = vmatprep.subr.mxu0 0.0
  %325 = vmatpush1.msra.mxu0 0.0
  %326 = vmatprep.subr.mxu0 0.0
  %327 = vmatpush1.msra.mxu0 0.0
  %328 = vmatprep.subr.mxu0 0.0
  %329 = vmatpush1.msra.mxu0 0.0
  %330 = vmatprep.subr.mxu0 0.0
  %331 = vmatpush1.msra.mxu0 0.0
  %332 = vmatprep.subr.mxu0 0.0
  %333 = vmatpush1.msra.mxu0 0.0
  %334 = vmatprep.subr.mxu0 0.0
  %335 = vmatpush1.msra.mxu0 0.0
  %336 = vmatprep.subr.mxu0 0.0
  %337 = vmatpush1.msra.mxu0 0.0
  %338 = vmatprep.subr.mxu0 0.0
  %339 = vmatpush1.msra.mxu0 0.0
  %340 = vmatprep.subr.mxu0 0.0
  %341 = vmatpush1.msra.mxu0 0.0
  %342 = vmatprep.subr.mxu0 0.0
  %343 = vmatpush1.msra.mxu0 0.0
  %344 = vmatprep.subr.mxu0 0.0
  %345 = vmatpush1.msra.mxu0 0.0
  %346 = vmatprep.subr.mxu0 0.0
  %347 = vmatpush1.msra.mxu0 0.0
  %348 = vmatprep.subr.mxu0 0.0
  %349 = vmatpush1.msra.mxu0 0.0
  %350 = vmatprep.mubr.f32.mxu0 0.0
  %351 = vmatmul.mubr.f32.gmra.mrb[0].mxu0 %v71
  %v352 = vpop.f32.mrb[0].mxu0
  %v353 = vadd.f32 0.0, %v352
  %v354 = vpop.f32.mrb[0].mxu0
  %v355 = vadd.f32 0.0, %v354
  %356 = vdwg.mxu0
  %357 = vmatprep.subr.mxu0 0.0
  %358 = vmatpush1.msra.mxu0 %v67
  %359 = vmatprep.subr.mxu0 0.0
  %360 = vmatpush1.msra.mxu0 0.0
  %361 = vmatprep.subr.mxu0 0.0
  %362 = vmatpush1.msra.mxu0 0.0
  %363 = vmatprep.subr.mxu0 0.0
  %364 = vmatpush1.msra.mxu0 0.0
  %365 = vmatprep.subr.mxu0 0.0
  %366 = vmatpush1.msra.mxu0 0.0
  %367 = vmatprep.subr.mxu0 0.0
  %368 = vmatpush1.msra.mxu0 0.0
  %369 = vmatprep.subr.mxu0 0.0
  %370 = vmatpush1.msra.mxu0 0.0
  %371 = vmatprep.subr.mxu0 0.0
  %372 = vmatpush1.msra.mxu0 0.0
  %373 = vmatprep.subr.mxu0 0.0
  %374 = vmatpush1.msra.mxu0 0.0
  %375 = vmatprep.subr.mxu0 0.0
  %376 = vmatpush1.msra.mxu0 0.0
  %377 = vmatprep.subr.mxu0 0.0
  %378 = vmatpush1.msra.mxu0 0.0
  %379 = vmatprep.subr.mxu0 0.0
  %380 = vmatpush1.msra.mxu0 0.0
  %381 = vmatprep.subr.mxu0 0.0
  %382 = vmatpush1.msra.mxu0 0.0
  %383 = vmatprep.subr.mxu0 0.0
  %384 = vmatpush1.msra.mxu0 0.0
  %385 = vmatprep.subr.mxu0 0.0
  %386 = vmatpush1.msra.mxu0 0.0
  %387 = vmatprep.subr.mxu0 0.0
  %388 = vmatpush1.msra.mxu0 0.0
  %389 = vmatprep.subr.mxu0 0.0
  %390 = vmatpush1.msra.mxu0 0.0
  %391 = vmatprep.subr.mxu0 0.0
  %392 = vmatpush1.msra.mxu0 0.0
  %393 = vmatprep.subr.mxu0 0.0
  %394 = vmatpush1.msra.mxu0 0.0
  %395 = vmatprep.subr.mxu0 0.0
  %396 = vmatpush1.msra.mxu0 0.0
  %397 = vmatprep.subr.mxu0 0.0
  %398 = vmatpush1.msra.mxu0 0.0
  %399 = vmatprep.subr.mxu0 0.0
  %400 = vmatpush1.msra.mxu0 0.0
  %401 = vmatprep.subr.mxu0 0.0
  %402 = vmatpush1.msra.mxu0 0.0
  %403 = vmatprep.subr.mxu0 0.0
  %404 = vmatpush1.msra.mxu0 0.0
  %405 = vmatprep.subr.mxu0 0.0
  %406 = vmatpush1.msra.mxu0 0.0
  %407 = vmatprep.subr.mxu0 0.0
  %408 = vmatpush1.msra.mxu0 0.0
  %409 = vmatprep.subr.mxu0 0.0
  %410 = vmatpush1.msra.mxu0 0.0
  %411 = vmatprep.subr.mxu0 0.0
  %412 = vmatpush1.msra.mxu0 0.0
  %413 = vmatprep.subr.mxu0 0.0
  %414 = vmatpush1.msra.mxu0 0.0
  %415 = vmatprep.subr.mxu0 0.0
  %416 = vmatpush1.msra.mxu0 0.0
  %417 = vmatprep.subr.mxu0 0.0
  %418 = vmatpush1.msra.mxu0 0.0
  %419 = vmatprep.subr.mxu0 0.0
  %420 = vmatpush1.msra.mxu0 0.0
  %421 = vmatprep.mubr.f32.mxu0 0.0
  %422 = vmatmul.mubr.f32.gmra.mrb[0].mxu0 %v71
  %v423 = vpop.f32.mrb[0].mxu0
  %v424 = vadd.f32 0.0, %v423
  %v425 = vpop.f32.mrb[0].mxu0
  %426 = vdwg.mxu0
  %427 = vset.pattern.permute.xlu0 2
  %428 = vperm.xlu0 %427, %v31
  %v429 = vpop.permute.xlu0 %428
  %v431 = vmul.f32 %v140, %v429
  %v432 = vmul.f32 %v142, %v429
  %v433 = vmul.f32 %v211, %v429
  %v434 = vmul.f32 %v213, %v429
  %v435 = vmul.f32 %v282, %v429
  %v436 = vmul.f32 %v284, %v429
  %v437 = vmul.f32 %v353, %v429
  %v438 = vmul.f32 %v355, %v429
  %v439 = vmul.f32 %v424, %v429
  %440 = vset.pattern.permute.xlu0 3
  %441 = vperm.xlu0 %440, %v31
  %v442 = vpop.permute.xlu0 %441
  %v444 = vadd.f32 %v431, %v442
  %v445 = vadd.f32 %v432, %v442
  %v446 = vadd.f32 %v433, %v442
  %v447 = vadd.f32 %v434, %v442
  %v448 = vadd.f32 %v435, %v442
  %v449 = vadd.f32 %v436, %v442
  %v450 = vadd.f32 %v437, %v442
  %v451 = vadd.f32 %v438, %v442
  %v452 = vadd.f32 %v439, %v442
  %v453 = vmax.f32 %v444, 0.0
  %v454 = vmax.f32 %v445, 0.0
  %v455 = vmax.f32 %v446, 0.0
  %v456 = vmax.f32 %v447, 0.0
  %v457 = vmax.f32 %v448, 0.0
  %v458 = vmax.f32 %v449, 0.0
  %v459 = vmax.f32 %v450, 0.0
  %v460 = vmax.f32 %v451, 0.0
  %v461 = vmax.f32 %v452, 0.0
  %v464 = vlaneseq
  %v465 = vshrl.u32 %v464, 7
  %v466 = vsub.s32 0, %v465
  %v467 = vrot.slane %v29, %v466
  %v468 = vlaneseq
  %v469 = vshrl.u32 %v468, 7
  %v470 = vsub.s32 1, %v469
  %v471 = vrot.slane %v29, %v470
  %v472 = vlaneseq
  %v473 = vshrl.u32 %v472, 7
  %v474 = vsub.s32 2, %v473
  %v475 = vrot.slane %v29, %v474
  %v476 = vlaneseq
  %v477 = vshrl.u32 %v476, 7
  %v478 = vsub.s32 3, %v477
  %v479 = vrot.slane %v29, %v478
  %v480 = vlaneseq
  %v481 = vshrl.u32 %v480, 7
  %v482 = vsub.s32 4, %v481
  %v483 = vrot.slane %v29, %v482
  %v484 = vlaneseq
  %v485 = vshrl.u32 %v484, 7
  %v486 = vsub.s32 5, %v485
  %v487 = vrot.slane %v29, %v486
  %v488 = vlaneseq
  %v489 = vshrl.u32 %v488, 7
  %v490 = vsub.s32 6, %v489
  %v491 = vrot.slane %v29, %v490
  %v492 = vlaneseq
  %v493 = vshrl.u32 %v492, 7
  %v494 = vsub.s32 7, %v493
  %v495 = vrot.slane %v29, %v494
  %v496 = vlaneseq
  %v497 = vshrl.u32 %v496, 7
  %v498 = vsub.s32 0, %v497
  %v499 = vrot.slane %v30, %v498
  %v509 = vmul.f32 %v453, %v467
  %v510 = vmul.f32 %v454, %v471
  %v511 = vmul.f32 %v455, %v475
  %v512 = vmul.f32 %v456, %v479
  %v513 = vmul.f32 %v457, %v483
  %v514 = vmul.f32 %v458, %v487
  %v515 = vmul.f32 %v459, %v491
  %v516 = vmul.f32 %v460, %v495
  %v517 = vmul.f32 %v461, %v499
  %v518 = vld [vmem:[%s4] sm:$0xff]
  %s519 = scalar_lea.vmem %s4, 8
  %v520 = vld [vmem:[%s519] sm:$0xff]
  %530 = vrot.lane.b32.xlu0 %v509, 127
  %v531 = vpop.permute.xlu0 %530
  %532 = vrot.lane.b32.xlu0 %v510, 127
  %v533 = vpop.permute.xlu0 %532
  %534 = vrot.lane.b32.xlu0 %v511, 127
  %v535 = vpop.permute.xlu0 %534
  %536 = vrot.lane.b32.xlu0 %v512, 127
  %v537 = vpop.permute.xlu0 %536
  %538 = vrot.lane.b32.xlu0 %v513, 127
  %v539 = vpop.permute.xlu0 %538
  %540 = vrot.lane.b32.xlu0 %v514, 127
  %v541 = vpop.permute.xlu0 %540
  %542 = vrot.lane.b32.xlu0 %v515, 127
  %v543 = vpop.permute.xlu0 %542
  %544 = vrot.lane.b32.xlu0 %v516, 127
  %v545 = vpop.permute.xlu0 %544
  %546 = vrot.lane.b32.xlu0 %v517, 127
  %v547 = vpop.permute.xlu0 %546
  %vm548 = vcmask 1039360
  %v549 = vsel %vm548, %v531, %v533
  %v550 = vsel %vm548, %v533, %v535
  %v551 = vsel %vm548, %v535, %v537
  %v552 = vsel %vm548, %v537, %v539
  %v553 = vsel %vm548, %v539, %v541
  %v554 = vsel %vm548, %v541, %v543
  %v555 = vsel %vm548, %v543, %v545
  %v556 = vsel %vm548, %v545, %v547
  %v566 = vsel %vm69, %v520, 0
  %568 = vmatprep.subr.mxu0 %v550
  %569 = vmatpush1.msra.mxu0 %v549
  %570 = vmatprep.subr.mxu0 0.0
  %571 = vmatpush1.msra.mxu0 0.0
  %572 = vmatprep.subr.mxu0 0.0
  %573 = vmatpush1.msra.mxu0 0.0
  %574 = vmatprep.subr.mxu0 0.0
  %575 = vmatpush1.msra.mxu0 0.0
  %576 = vmatprep.subr.mxu0 0.0
  %577 = vmatpush1.msra.mxu0 0.0
  %578 = vmatprep.subr.mxu0 0.0
  %579 = vmatpush1.msra.mxu0 0.0
  %580 = vmatprep.subr.mxu0 0.0
  %581 = vmatpush1.msra.mxu0 0.0
  %582 = vmatprep.subr.mxu0 0.0
  %583 = vmatpush1.msra.mxu0 0.0
  %584 = vmatprep.subr.mxu0 0.0
  %585 = vmatpush1.msra.mxu0 0.0
  %586 = vmatprep.subr.mxu0 0.0
  %587 = vmatpush1.msra.mxu0 0.0
  %588 = vmatprep.subr.mxu0 0.0
  %589 = vmatpush1.msra.mxu0 0.0
  %590 = vmatprep.subr.mxu0 0.0
  %591 = vmatpush1.msra.mxu0 0.0
  %592 = vmatprep.subr.mxu0 0.0
  %593 = vmatpush1.msra.mxu0 0.0
  %594 = vmatprep.subr.mxu0 0.0
  %595 = vmatpush1.msra.mxu0 0.0
  %596 = vmatprep.subr.mxu0 0.0
  %597 = vmatpush1.msra.mxu0 0.0
  %598 = vmatprep.subr.mxu0 0.0
  %599 = vmatpush1.msra.mxu0 0.0
  %600 = vmatprep.subr.mxu0 0.0
  %601 = vmatpush1.msra.mxu0 0.0
  %602 = vmatprep.subr.mxu0 0.0
  %603 = vmatpush1.msra.mxu0 0.0
  %604 = vmatprep.subr.mxu0 0.0
  %605 = vmatpush1.msra.mxu0 0.0
  %606 = vmatprep.subr.mxu0 0.0
  %607 = vmatpush1.msra.mxu0 0.0
  %608 = vmatprep.subr.mxu0 0.0
  %609 = vmatpush1.msra.mxu0 0.0
  %610 = vmatprep.subr.mxu0 0.0
  %611 = vmatpush1.msra.mxu0 0.0
  %612 = vmatprep.subr.mxu0 0.0
  %613 = vmatpush1.msra.mxu0 0.0
  %614 = vmatprep.subr.mxu0 0.0
  %615 = vmatpush1.msra.mxu0 0.0
  %616 = vmatprep.subr.mxu0 0.0
  %617 = vmatpush1.msra.mxu0 0.0
  %618 = vmatprep.subr.mxu0 0.0
  %619 = vmatpush1.msra.mxu0 0.0
  %620 = vmatprep.subr.mxu0 0.0
  %621 = vmatpush1.msra.mxu0 0.0
  %622 = vmatprep.subr.mxu0 0.0
  %623 = vmatpush1.msra.mxu0 0.0
  %624 = vmatprep.subr.mxu0 0.0
  %625 = vmatpush1.msra.mxu0 0.0
  %626 = vmatprep.subr.mxu0 0.0
  %627 = vmatpush1.msra.mxu0 0.0
  %628 = vmatprep.subr.mxu0 0.0
  %629 = vmatpush1.msra.mxu0 0.0
  %630 = vmatprep.subr.mxu0 0.0
  %631 = vmatpush1.msra.mxu0 0.0
  %632 = vmatprep.mubr.f32.mxu0 0.0
  %633 = vmatmul.mubr.f32.gmra.mrb[0].mxu0 %v566
  %v634 = vpop.f32.mrb[0].mxu0
  %v635 = vadd.f32 0.0, %v634
  %v636 = vpop.f32.mrb[0].mxu0
  %v637 = vadd.f32 0.0, %v636
  %638 = vdwg.mxu0
  %639 = vmatprep.subr.mxu0 %v552
  %640 = vmatpush1.msra.mxu0 %v551
  %641 = vmatprep.subr.mxu0 0.0
  %642 = vmatpush1.msra.mxu0 0.0
  %643 = vmatprep.subr.mxu0 0.0
  %644 = vmatpush1.msra.mxu0 0.0
  %645 = vmatprep.subr.mxu0 0.0
  %646 = vmatpush1.msra.mxu0 0.0
  %647 = vmatprep.subr.mxu0 0.0
  %648 = vmatpush1.msra.mxu0 0.0
  %649 = vmatprep.subr.mxu0 0.0
  %650 = vmatpush1.msra.mxu0 0.0
  %651 = vmatprep.subr.mxu0 0.0
  %652 = vmatpush1.msra.mxu0 0.0
  %653 = vmatprep.subr.mxu0 0.0
  %654 = vmatpush1.msra.mxu0 0.0
  %655 = vmatprep.subr.mxu0 0.0
  %656 = vmatpush1.msra.mxu0 0.0
  %657 = vmatprep.subr.mxu0 0.0
  %658 = vmatpush1.msra.mxu0 0.0
  %659 = vmatprep.subr.mxu0 0.0
  %660 = vmatpush1.msra.mxu0 0.0
  %661 = vmatprep.subr.mxu0 0.0
  %662 = vmatpush1.msra.mxu0 0.0
  %663 = vmatprep.subr.mxu0 0.0
  %664 = vmatpush1.msra.mxu0 0.0
  %665 = vmatprep.subr.mxu0 0.0
  %666 = vmatpush1.msra.mxu0 0.0
  %667 = vmatprep.subr.mxu0 0.0
  %668 = vmatpush1.msra.mxu0 0.0
  %669 = vmatprep.subr.mxu0 0.0
  %670 = vmatpush1.msra.mxu0 0.0
  %671 = vmatprep.subr.mxu0 0.0
  %672 = vmatpush1.msra.mxu0 0.0
  %673 = vmatprep.subr.mxu0 0.0
  %674 = vmatpush1.msra.mxu0 0.0
  %675 = vmatprep.subr.mxu0 0.0
  %676 = vmatpush1.msra.mxu0 0.0
  %677 = vmatprep.subr.mxu0 0.0
  %678 = vmatpush1.msra.mxu0 0.0
  %679 = vmatprep.subr.mxu0 0.0
  %680 = vmatpush1.msra.mxu0 0.0
  %681 = vmatprep.subr.mxu0 0.0
  %682 = vmatpush1.msra.mxu0 0.0
  %683 = vmatprep.subr.mxu0 0.0
  %684 = vmatpush1.msra.mxu0 0.0
  %685 = vmatprep.subr.mxu0 0.0
  %686 = vmatpush1.msra.mxu0 0.0
  %687 = vmatprep.subr.mxu0 0.0
  %688 = vmatpush1.msra.mxu0 0.0
  %689 = vmatprep.subr.mxu0 0.0
  %690 = vmatpush1.msra.mxu0 0.0
  %691 = vmatprep.subr.mxu0 0.0
  %692 = vmatpush1.msra.mxu0 0.0
  %693 = vmatprep.subr.mxu0 0.0
  %694 = vmatpush1.msra.mxu0 0.0
  %695 = vmatprep.subr.mxu0 0.0
  %696 = vmatpush1.msra.mxu0 0.0
  %697 = vmatprep.subr.mxu0 0.0
  %698 = vmatpush1.msra.mxu0 0.0
  %699 = vmatprep.subr.mxu0 0.0
  %700 = vmatpush1.msra.mxu0 0.0
  %701 = vmatprep.subr.mxu0 0.0
  %702 = vmatpush1.msra.mxu0 0.0
  %703 = vmatprep.mubr.f32.mxu0 0.0
  %704 = vmatmul.mubr.f32.gmra.mrb[0].mxu0 %v566
  %v705 = vpop.f32.mrb[0].mxu0
  %v706 = vadd.f32 0.0, %v705
  %v707 = vpop.f32.mrb[0].mxu0
  %v708 = vadd.f32 0.0, %v707
  %709 = vdwg.mxu0
  %710 = vmatprep.subr.mxu0 %v554
  %711 = vmatpush1.msra.mxu0 %v553
  %712 = vmatprep.subr.mxu0 0.0
  %713 = vmatpush1.msra.mxu0 0.0
  %714 = vmatprep.subr.mxu0 0.0
  %715 = vmatpush1.msra.mxu0 0.0
  %716 = vmatprep.subr.mxu0 0.0
  %717 = vmatpush1.msra.mxu0 0.0
  %718 = vmatprep.subr.mxu0 0.0
  %719 = vmatpush1.msra.mxu0 0.0
  %720 = vmatprep.subr.mxu0 0.0
  %721 = vmatpush1.msra.mxu0 0.0
  %722 = vmatprep.subr.mxu0 0.0
  %723 = vmatpush1.msra.mxu0 0.0
  %724 = vmatprep.subr.mxu0 0.0
  %725 = vmatpush1.msra.mxu0 0.0
  %726 = vmatprep.subr.mxu0 0.0
  %727 = vmatpush1.msra.mxu0 0.0
  %728 = vmatprep.subr.mxu0 0.0
  %729 = vmatpush1.msra.mxu0 0.0
  %730 = vmatprep.subr.mxu0 0.0
  %731 = vmatpush1.msra.mxu0 0.0
  %732 = vmatprep.subr.mxu0 0.0
  %733 = vmatpush1.msra.mxu0 0.0
  %734 = vmatprep.subr.mxu0 0.0
  %735 = vmatpush1.msra.mxu0 0.0
  %736 = vmatprep.subr.mxu0 0.0
  %737 = vmatpush1.msra.mxu0 0.0
  %738 = vmatprep.subr.mxu0 0.0
  %739 = vmatpush1.msra.mxu0 0.0
  %740 = vmatprep.subr.mxu0 0.0
  %741 = vmatpush1.msra.mxu0 0.0
  %742 = vmatprep.subr.mxu0 0.0
  %743 = vmatpush1.msra.mxu0 0.0
  %744 = vmatprep.subr.mxu0 0.0
  %745 = vmatpush1.msra.mxu0 0.0
  %746 = vmatprep.subr.mxu0 0.0
  %747 = vmatpush1.msra.mxu0 0.0
  %748 = vmatprep.subr.mxu0 0.0
  %749 = vmatpush1.msra.mxu0 0.0
  %750 = vmatprep.subr.mxu0 0.0
  %751 = vmatpush1.msra.mxu0 0.0
  %752 = vmatprep.subr.mxu0 0.0
  %753 = vmatpush1.msra.mxu0 0.0
  %754 = vmatprep.subr.mxu0 0.0
  %755 = vmatpush1.msra.mxu0 0.0
  %756 = vmatprep.subr.mxu0 0.0
  %757 = vmatpush1.msra.mxu0 0.0
  %758 = vmatprep.subr.mxu0 0.0
  %759 = vmatpush1.msra.mxu0 0.0
  %760 = vmatprep.subr.mxu0 0.0
  %761 = vmatpush1.msra.mxu0 0.0
  %762 = vmatprep.subr.mxu0 0.0
  %763 = vmatpush1.msra.mxu0 0.0
  %764 = vmatprep.subr.mxu0 0.0
  %765 = vmatpush1.msra.mxu0 0.0
  %766 = vmatprep.subr.mxu0 0.0
  %767 = vmatpush1.msra.mxu0 0.0
  %768 = vmatprep.subr.mxu0 0.0
  %769 = vmatpush1.msra.mxu0 0.0
  %770 = vmatprep.subr.mxu0 0.0
  %771 = vmatpush1.msra.mxu0 0.0
  %772 = vmatprep.subr.mxu0 0.0
  %773 = vmatpush1.msra.mxu0 0.0
  %774 = vmatprep.mubr.f32.mxu0 0.0
  %775 = vmatmul.mubr.f32.gmra.mrb[0].mxu0 %v566
  %v776 = vpop.f32.mrb[0].mxu0
  %v777 = vadd.f32 0.0, %v776
  %v778 = vpop.f32.mrb[0].mxu0
  %v779 = vadd.f32 0.0, %v778
  %780 = vdwg.mxu0
  %781 = vmatprep.subr.mxu0 %v556
  %782 = vmatpush1.msra.mxu0 %v555
  %783 = vmatprep.subr.mxu0 0.0
  %784 = vmatpush1.msra.mxu0 0.0
  %785 = vmatprep.subr.mxu0 0.0
  %786 = vmatpush1.msra.mxu0 0.0
  %787 = vmatprep.subr.mxu0 0.0
  %788 = vmatpush1.msra.mxu0 0.0
  %789 = vmatprep.subr.mxu0 0.0
  %790 = vmatpush1.msra.mxu0 0.0
  %791 = vmatprep.subr.mxu0 0.0
  %792 = vmatpush1.msra.mxu0 0.0
  %793 = vmatprep.subr.mxu0 0.0
  %794 = vmatpush1.msra.mxu0 0.0
  %795 = vmatprep.subr.mxu0 0.0
  %796 = vmatpush1.msra.mxu0 0.0
  %797 = vmatprep.subr.mxu0 0.0
  %798 = vmatpush1.msra.mxu0 0.0
  %799 = vmatprep.subr.mxu0 0.0
  %800 = vmatpush1.msra.mxu0 0.0
  %801 = vmatprep.subr.mxu0 0.0
  %802 = vmatpush1.msra.mxu0 0.0
  %803 = vmatprep.subr.mxu0 0.0
  %804 = vmatpush1.msra.mxu0 0.0
  %805 = vmatprep.subr.mxu0 0.0
  %806 = vmatpush1.msra.mxu0 0.0
  %807 = vmatprep.subr.mxu0 0.0
  %808 = vmatpush1.msra.mxu0 0.0
  %809 = vmatprep.subr.mxu0 0.0
  %810 = vmatpush1.msra.mxu0 0.0
  %811 = vmatprep.subr.mxu0 0.0
  %812 = vmatpush1.msra.mxu0 0.0
  %813 = vmatprep.subr.mxu0 0.0
  %814 = vmatpush1.msra.mxu0 0.0
  %815 = vmatprep.subr.mxu0 0.0
  %816 = vmatpush1.msra.mxu0 0.0
  %817 = vmatprep.subr.mxu0 0.0
  %818 = vmatpush1.msra.mxu0 0.0
  %819 = vmatprep.subr.mxu0 0.0
  %820 = vmatpush1.msra.mxu0 0.0
  %821 = vmatprep.subr.mxu0 0.0
  %822 = vmatpush1.msra.mxu0 0.0
  %823 = vmatprep.subr.mxu0 0.0
  %824 = vmatpush1.msra.mxu0 0.0
  %825 = vmatprep.subr.mxu0 0.0
  %826 = vmatpush1.msra.mxu0 0.0
  %827 = vmatprep.subr.mxu0 0.0
  %828 = vmatpush1.msra.mxu0 0.0
  %829 = vmatprep.subr.mxu0 0.0
  %830 = vmatpush1.msra.mxu0 0.0
  %831 = vmatprep.subr.mxu0 0.0
  %832 = vmatpush1.msra.mxu0 0.0
  %833 = vmatprep.subr.mxu0 0.0
  %834 = vmatpush1.msra.mxu0 0.0
  %835 = vmatprep.subr.mxu0 0.0
  %836 = vmatpush1.msra.mxu0 0.0
  %837 = vmatprep.subr.mxu0 0.0
  %838 = vmatpush1.msra.mxu0 0.0
  %839 = vmatprep.subr.mxu0 0.0
  %840 = vmatpush1.msra.mxu0 0.0
  %841 = vmatprep.subr.mxu0 0.0
  %842 = vmatpush1.msra.mxu0 0.0
  %843 = vmatprep.subr.mxu0 0.0
  %844 = vmatpush1.msra.mxu0 0.0
  %845 = vmatprep.mubr.f32.mxu0 0.0
  %846 = vmatmul.mubr.f32.gmra.mrb[0].mxu0 %v566
  %v847 = vpop.f32.mrb[0].mxu0
  %v848 = vadd.f32 0.0, %v847
  %v849 = vpop.f32.mrb[0].mxu0
  %v850 = vadd.f32 0.0, %v849
  %851 = vdwg.mxu0
  %v853 = vsel %vm69, %v518, 0
  %855 = vmatprep.subr.mxu0 %v510
  %856 = vmatpush1.msra.mxu0 %v509
  %857 = vmatprep.subr.mxu0 0.0
  %858 = vmatpush1.msra.mxu0 0.0
  %859 = vmatprep.subr.mxu0 0.0
  %860 = vmatpush1.msra.mxu0 0.0
  %861 = vmatprep.subr.mxu0 0.0
  %862 = vmatpush1.msra.mxu0 0.0
  %863 = vmatprep.subr.mxu0 0.0
  %864 = vmatpush1.msra.mxu0 0.0
  %865 = vmatprep.subr.mxu0 0.0
  %866 = vmatpush1.msra.mxu0 0.0
  %867 = vmatprep.subr.mxu0 0.0
  %868 = vmatpush1.msra.mxu0 0.0
  %869 = vmatprep.subr.mxu0 0.0
  %870 = vmatpush1.msra.mxu0 0.0
  %871 = vmatprep.subr.mxu0 0.0
  %872 = vmatpush1.msra.mxu0 0.0
  %873 = vmatprep.subr.mxu0 0.0
  %874 = vmatpush1.msra.mxu0 0.0
  %875 = vmatprep.subr.mxu0 0.0
  %876 = vmatpush1.msra.mxu0 0.0
  %877 = vmatprep.subr.mxu0 0.0
  %878 = vmatpush1.msra.mxu0 0.0
  %879 = vmatprep.subr.mxu0 0.0
  %880 = vmatpush1.msra.mxu0 0.0
  %881 = vmatprep.subr.mxu0 0.0
  %882 = vmatpush1.msra.mxu0 0.0
  %883 = vmatprep.subr.mxu0 0.0
  %884 = vmatpush1.msra.mxu0 0.0
  %885 = vmatprep.subr.mxu0 0.0
  %886 = vmatpush1.msra.mxu0 0.0
  %887 = vmatprep.subr.mxu0 0.0
  %888 = vmatpush1.msra.mxu0 0.0
  %889 = vmatprep.subr.mxu0 0.0
  %890 = vmatpush1.msra.mxu0 0.0
  %891 = vmatprep.subr.mxu0 0.0
  %892 = vmatpush1.msra.mxu0 0.0
  %893 = vmatprep.subr.mxu0 0.0
  %894 = vmatpush1.msra.mxu0 0.0
  %895 = vmatprep.subr.mxu0 0.0
  %896 = vmatpush1.msra.mxu0 0.0
  %897 = vmatprep.subr.mxu0 0.0
  %898 = vmatpush1.msra.mxu0 0.0
  %899 = vmatprep.subr.mxu0 0.0
  %900 = vmatpush1.msra.mxu0 0.0
  %901 = vmatprep.subr.mxu0 0.0
  %902 = vmatpush1.msra.mxu0 0.0
  %903 = vmatprep.subr.mxu0 0.0
  %904 = vmatpush1.msra.mxu0 0.0
  %905 = vmatprep.subr.mxu0 0.0
  %906 = vmatpush1.msra.mxu0 0.0
  %907 = vmatprep.subr.mxu0 0.0
  %908 = vmatpush1.msra.mxu0 0.0
  %909 = vmatprep.subr.mxu0 0.0
  %910 = vmatpush1.msra.mxu0 0.0
  %911 = vmatprep.subr.mxu0 0.0
  %912 = vmatpush1.msra.mxu0 0.0
  %913 = vmatprep.subr.mxu0 0.0
  %914 = vmatpush1.msra.mxu0 0.0
  %915 = vmatprep.subr.mxu0 0.0
  %916 = vmatpush1.msra.mxu0 0.0
  %917 = vmatprep.subr.mxu0 0.0
  %918 = vmatpush1.msra.mxu0 0.0
  %919 = vmatprep.mubr.f32.mxu0 0.0
  %920 = vmatmul.mubr.f32.gmra.mrb[0].mxu0 %v853
  %v921 = vpop.f32.mrb[0].mxu0
  %v922 = vadd.f32 %v635, %v921
  %v923 = vpop.f32.mrb[0].mxu0
  %v924 = vadd.f32 %v637, %v923
  %925 = vdwg.mxu0
  %926 = vmatprep.subr.mxu0 %v512
  %927 = vmatpush1.msra.mxu0 %v511
  %928 = vmatprep.subr.mxu0 0.0
  %929 = vmatpush1.msra.mxu0 0.0
  %930 = vmatprep.subr.mxu0 0.0
  %931 = vmatpush1.msra.mxu0 0.0
  %932 = vmatprep.subr.mxu0 0.0
  %933 = vmatpush1.msra.mxu0 0.0
  %934 = vmatprep.subr.mxu0 0.0
  %935 = vmatpush1.msra.mxu0 0.0
  %936 = vmatprep.subr.mxu0 0.0
  %937 = vmatpush1.msra.mxu0 0.0
  %938 = vmatprep.subr.mxu0 0.0
  %939 = vmatpush1.msra.mxu0 0.0
  %940 = vmatprep.subr.mxu0 0.0
  %941 = vmatpush1.msra.mxu0 0.0
  %942 = vmatprep.subr.mxu0 0.0
  %943 = vmatpush1.msra.mxu0 0.0
  %944 = vmatprep.subr.mxu0 0.0
  %945 = vmatpush1.msra.mxu0 0.0
  %946 = vmatprep.subr.mxu0 0.0
  %947 = vmatpush1.msra.mxu0 0.0
  %948 = vmatprep.subr.mxu0 0.0
  %949 = vmatpush1.msra.mxu0 0.0
  %950 = vmatprep.subr.mxu0 0.0
  %951 = vmatpush1.msra.mxu0 0.0
  %952 = vmatprep.subr.mxu0 0.0
  %953 = vmatpush1.msra.mxu0 0.0
  %954 = vmatprep.subr.mxu0 0.0
  %955 = vmatpush1.msra.mxu0 0.0
  %956 = vmatprep.subr.mxu0 0.0
  %957 = vmatpush1.msra.mxu0 0.0
  %958 = vmatprep.subr.mxu0 0.0
  %959 = vmatpush1.msra.mxu0 0.0
  %960 = vmatprep.subr.mxu0 0.0
  %961 = vmatpush1.msra.mxu0 0.0
  %962 = vmatprep.subr.mxu0 0.0
  %963 = vmatpush1.msra.mxu0 0.0
  %964 = vmatprep.subr.mxu0 0.0
  %965 = vmatpush1.msra.mxu0 0.0
  %966 = vmatprep.subr.mxu0 0.0
  %967 = vmatpush1.msra.mxu0 0.0
  %968 = vmatprep.subr.mxu0 0.0
  %969 = vmatpush1.msra.mxu0 0.0
  %970 = vmatprep.subr.mxu0 0.0
  %971 = vmatpush1.msra.mxu0 0.0
  %972 = vmatprep.subr.mxu0 0.0
  %973 = vmatpush1.msra.mxu0 0.0
  %974 = vmatprep.subr.mxu0 0.0
  %975 = vmatpush1.msra.mxu0 0.0
  %976 = vmatprep.subr.mxu0 0.0
  %977 = vmatpush1.msra.mxu0 0.0
  %978 = vmatprep.subr.mxu0 0.0
  %979 = vmatpush1.msra.mxu0 0.0
  %980 = vmatprep.subr.mxu0 0.0
  %981 = vmatpush1.msra.mxu0 0.0
  %982 = vmatprep.subr.mxu0 0.0
  %983 = vmatpush1.msra.mxu0 0.0
  %984 = vmatprep.subr.mxu0 0.0
  %985 = vmatpush1.msra.mxu0 0.0
  %986 = vmatprep.subr.mxu0 0.0
  %987 = vmatpush1.msra.mxu0 0.0
  %988 = vmatprep.subr.mxu0 0.0
  %989 = vmatpush1.msra.mxu0 0.0
  %990 = vmatprep.mubr.f32.mxu0 0.0
  %991 = vmatmul.mubr.f32.gmra.mrb[0].mxu0 %v853
  %v992 = vpop.f32.mrb[0].mxu0
  %v993 = vadd.f32 %v706, %v992
  %v994 = vpop.f32.mrb[0].mxu0
  %v995 = vadd.f32 %v708, %v994
  %996 = vdwg.mxu0
  %997 = vmatprep.subr.mxu0 %v514
  %998 = vmatpush1.msra.mxu0 %v513
  %999 = vmatprep.subr.mxu0 0.0
  %1000 = vmatpush1.msra.mxu0 0.0
  %1001 = vmatprep.subr.mxu0 0.0
  %1002 = vmatpush1.msra.mxu0 0.0
  %1003 = vmatprep.subr.mxu0 0.0
  %1004 = vmatpush1.msra.mxu0 0.0
  %1005 = vmatprep.subr.mxu0 0.0
  %1006 = vmatpush1.msra.mxu0 0.0
  %1007 = vmatprep.subr.mxu0 0.0
  %1008 = vmatpush1.msra.mxu0 0.0
  %1009 = vmatprep.subr.mxu0 0.0
  %1010 = vmatpush1.msra.mxu0 0.0
  %1011 = vmatprep.subr.mxu0 0.0
  %1012 = vmatpush1.msra.mxu0 0.0
  %1013 = vmatprep.subr.mxu0 0.0
  %1014 = vmatpush1.msra.mxu0 0.0
  %1015 = vmatprep.subr.mxu0 0.0
  %1016 = vmatpush1.msra.mxu0 0.0
  %1017 = vmatprep.subr.mxu0 0.0
  %1018 = vmatpush1.msra.mxu0 0.0
  %1019 = vmatprep.subr.mxu0 0.0
  %1020 = vmatpush1.msra.mxu0 0.0
  %1021 = vmatprep.subr.mxu0 0.0
  %1022 = vmatpush1.msra.mxu0 0.0
  %1023 = vmatprep.subr.mxu0 0.0
  %1024 = vmatpush1.msra.mxu0 0.0
  %1025 = vmatprep.subr.mxu0 0.0
  %1026 = vmatpush1.msra.mxu0 0.0
  %1027 = vmatprep.subr.mxu0 0.0
  %1028 = vmatpush1.msra.mxu0 0.0
  %1029 = vmatprep.subr.mxu0 0.0
  %1030 = vmatpush1.msra.mxu0 0.0
  %1031 = vmatprep.subr.mxu0 0.0
  %1032 = vmatpush1.msra.mxu0 0.0
  %1033 = vmatprep.subr.mxu0 0.0
  %1034 = vmatpush1.msra.mxu0 0.0
  %1035 = vmatprep.subr.mxu0 0.0
  %1036 = vmatpush1.msra.mxu0 0.0
  %1037 = vmatprep.subr.mxu0 0.0
  %1038 = vmatpush1.msra.mxu0 0.0
  %1039 = vmatprep.subr.mxu0 0.0
  %1040 = vmatpush1.msra.mxu0 0.0
  %1041 = vmatprep.subr.mxu0 0.0
  %1042 = vmatpush1.msra.mxu0 0.0
  %1043 = vmatprep.subr.mxu0 0.0
  %1044 = vmatpush1.msra.mxu0 0.0
  %1045 = vmatprep.subr.mxu0 0.0
  %1046 = vmatpush1.msra.mxu0 0.0
  %1047 = vmatprep.subr.mxu0 0.0
  %1048 = vmatpush1.msra.mxu0 0.0
  %1049 = vmatprep.subr.mxu0 0.0
  %1050 = vmatpush1.msra.mxu0 0.0
  %1051 = vmatprep.subr.mxu0 0.0
  %1052 = vmatpush1.msra.mxu0 0.0
  %1053 = vmatprep.subr.mxu0 0.0
  %1054 = vmatpush1.msra.mxu0 0.0
  %1055 = vmatprep.subr.mxu0 0.0
  %1056 = vmatpush1.msra.mxu0 0.0
  %1057 = vmatprep.subr.mxu0 0.0
  %1058 = vmatpush1.msra.mxu0 0.0
  %1059 = vmatprep.subr.mxu0 0.0
  %1060 = vmatpush1.msra.mxu0 0.0
  %1061 = vmatprep.mubr.f32.mxu0 0.0
  %1062 = vmatmul.mubr.f32.gmra.mrb[0].mxu0 %v853
  %v1063 = vpop.f32.mrb[0].mxu0
  %v1064 = vadd.f32 %v777, %v1063
  %v1065 = vpop.f32.mrb[0].mxu0
  %v1066 = vadd.f32 %v779, %v1065
  %1067 = vdwg.mxu0
  %1068 = vmatprep.subr.mxu0 %v516
  %1069 = vmatpush1.msra.mxu0 %v515
  %1070 = vmatprep.subr.mxu0 0.0
  %1071 = vmatpush1.msra.mxu0 0.0
  %1072 = vmatprep.subr.mxu0 0.0
  %1073 = vmatpush1.msra.mxu0 0.0
  %1074 = vmatprep.subr.mxu0 0.0
  %1075 = vmatpush1.msra.mxu0 0.0
  %1076 = vmatprep.subr.mxu0 0.0
  %1077 = vmatpush1.msra.mxu0 0.0
  %1078 = vmatprep.subr.mxu0 0.0
  %1079 = vmatpush1.msra.mxu0 0.0
  %1080 = vmatprep.subr.mxu0 0.0
  %1081 = vmatpush1.msra.mxu0 0.0
  %1082 = vmatprep.subr.mxu0 0.0
  %1083 = vmatpush1.msra.mxu0 0.0
  %1084 = vmatprep.subr.mxu0 0.0
  %1085 = vmatpush1.msra.mxu0 0.0
  %1086 = vmatprep.subr.mxu0 0.0
  %1087 = vmatpush1.msra.mxu0 0.0
  %1088 = vmatprep.subr.mxu0 0.0
  %1089 = vmatpush1.msra.mxu0 0.0
  %1090 = vmatprep.subr.mxu0 0.0
  %1091 = vmatpush1.msra.mxu0 0.0
  %1092 = vmatprep.subr.mxu0 0.0
  %1093 = vmatpush1.msra.mxu0 0.0
  %1094 = vmatprep.subr.mxu0 0.0
  %1095 = vmatpush1.msra.mxu0 0.0
  %1096 = vmatprep.subr.mxu0 0.0
  %1097 = vmatpush1.msra.mxu0 0.0
  %1098 = vmatprep.subr.mxu0 0.0
  %1099 = vmatpush1.msra.mxu0 0.0
  %1100 = vmatprep.subr.mxu0 0.0
  %1101 = vmatpush1.msra.mxu0 0.0
  %1102 = vmatprep.subr.mxu0 0.0
  %1103 = vmatpush1.msra.mxu0 0.0
  %1104 = vmatprep.subr.mxu0 0.0
  %1105 = vmatpush1.msra.mxu0 0.0
  %1106 = vmatprep.subr.mxu0 0.0
  %1107 = vmatpush1.msra.mxu0 0.0
  %1108 = vmatprep.subr.mxu0 0.0
  %1109 = vmatpush1.msra.mxu0 0.0
  %1110 = vmatprep.subr.mxu0 0.0
  %1111 = vmatpush1.msra.mxu0 0.0
  %1112 = vmatprep.subr.mxu0 0.0
  %1113 = vmatpush1.msra.mxu0 0.0
  %1114 = vmatprep.subr.mxu0 0.0
  %1115 = vmatpush1.msra.mxu0 0.0
  %1116 = vmatprep.subr.mxu0 0.0
  %1117 = vmatpush1.msra.mxu0 0.0
  %1118 = vmatprep.subr.mxu0 0.0
  %1119 = vmatpush1.msra.mxu0 0.0
  %1120 = vmatprep.subr.mxu0 0.0
  %1121 = vmatpush1.msra.mxu0 0.0
  %1122 = vmatprep.subr.mxu0 0.0
  %1123 = vmatpush1.msra.mxu0 0.0
  %1124 = vmatprep.subr.mxu0 0.0
  %1125 = vmatpush1.msra.mxu0 0.0
  %1126 = vmatprep.subr.mxu0 0.0
  %1127 = vmatpush1.msra.mxu0 0.0
  %1128 = vmatprep.subr.mxu0 0.0
  %1129 = vmatpush1.msra.mxu0 0.0
  %1130 = vmatprep.subr.mxu0 0.0
  %1131 = vmatpush1.msra.mxu0 0.0
  %1132 = vmatprep.mubr.f32.mxu0 0.0
  %1133 = vmatmul.mubr.f32.gmra.mrb[0].mxu0 %v853
  %v1134 = vpop.f32.mrb[0].mxu0
  %v1135 = vadd.f32 %v848, %v1134
  %v1136 = vpop.f32.mrb[0].mxu0
  %v1137 = vadd.f32 %v850, %v1136
  %1138 = vdwg.mxu0
  %s1139 = scalar_lea.vmem %s4, 16
  %v1140 = vld [vmem:[%s1139] sm:$0xff]
  %1141 = vrot.lane.b32.xlu0 %v509, 126
  %v1142 = vpop.permute.xlu0 %1141
  %1143 = vrot.lane.b32.xlu0 %v510, 126
  %v1144 = vpop.permute.xlu0 %1143
  %1145 = vrot.lane.b32.xlu0 %v511, 126
  %v1146 = vpop.permute.xlu0 %1145
  %1147 = vrot.lane.b32.xlu0 %v512, 126
  %v1148 = vpop.permute.xlu0 %1147
  %1149 = vrot.lane.b32.xlu0 %v513, 126
  %v1150 = vpop.permute.xlu0 %1149
  %1151 = vrot.lane.b32.xlu0 %v514, 126
  %v1152 = vpop.permute.xlu0 %1151
  %1153 = vrot.lane.b32.xlu0 %v515, 126
  %v1154 = vpop.permute.xlu0 %1153
  %1155 = vrot.lane.b32.xlu0 %v516, 126
  %v1156 = vpop.permute.xlu0 %1155
  %1157 = vrot.lane.b32.xlu0 %v517, 126
  %v1158 = vpop.permute.xlu0 %1157
  %vm1159 = vcmask 1031168
  %v1160 = vsel %vm1159, %v1142, %v1144
  %v1161 = vsel %vm1159, %v1144, %v1146
  %v1162 = vsel %vm1159, %v1146, %v1148
  %v1163 = vsel %vm1159, %v1148, %v1150
  %v1164 = vsel %vm1159, %v1150, %v1152
  %v1165 = vsel %vm1159, %v1152, %v1154
  %v1166 = vsel %vm1159, %v1154, %v1156
  %v1167 = vsel %vm1159, %v1156, %v1158
  %v1177 = vsel %vm69, %v1140, 0
  %1179 = vmatprep.subr.mxu0 %v1161
  %1180 = vmatpush1.msra.mxu0 %v1160
  %1181 = vmatprep.subr.mxu0 0.0
  %1182 = vmatpush1.msra.mxu0 0.0
  %1183 = vmatprep.subr.mxu0 0.0
  %1184 = vmatpush1.msra.mxu0 0.0
  %1185 = vmatprep.subr.mxu0 0.0
  %1186 = vmatpush1.msra.mxu0 0.0
  %1187 = vmatprep.subr.mxu0 0.0
  %1188 = vmatpush1.msra.mxu0 0.0
  %1189 = vmatprep.subr.mxu0 0.0
  %1190 = vmatpush1.msra.mxu0 0.0
  %1191 = vmatprep.subr.mxu0 0.0
  %1192 = vmatpush1.msra.mxu0 0.0
  %1193 = vmatprep.subr.mxu0 0.0
  %1194 = vmatpush1.msra.mxu0 0.0
  %1195 = vmatprep.subr.mxu0 0.0
  %1196 = vmatpush1.msra.mxu0 0.0
  %1197 = vmatprep.subr.mxu0 0.0
  %1198 = vmatpush1.msra.mxu0 0.0
  %1199 = vmatprep.subr.mxu0 0.0
  %1200 = vmatpush1.msra.mxu0 0.0
  %1201 = vmatprep.subr.mxu0 0.0
  %1202 = vmatpush1.msra.mxu0 0.0
  %1203 = vmatprep.subr.mxu0 0.0
  %1204 = vmatpush1.msra.mxu0 0.0
  %1205 = vmatprep.subr.mxu0 0.0
  %1206 = vmatpush1.msra.mxu0 0.0
  %1207 = vmatprep.subr.mxu0 0.0
  %1208 = vmatpush1.msra.mxu0 0.0
  %1209 = vmatprep.subr.mxu0 0.0
  %1210 = vmatpush1.msra.mxu0 0.0
  %1211 = vmatprep.subr.mxu0 0.0
  %1212 = vmatpush1.msra.mxu0 0.0
  %1213 = vmatprep.subr.mxu0 0.0
  %1214 = vmatpush1.msra.mxu0 0.0
  %1215 = vmatprep.subr.mxu0 0.0
  %1216 = vmatpush1.msra.mxu0 0.0
  %1217 = vmatprep.subr.mxu0 0.0
  %1218 = vmatpush1.msra.mxu0 0.0
  %1219 = vmatprep.subr.mxu0 0.0
  %1220 = vmatpush1.msra.mxu0 0.0
  %1221 = vmatprep.subr.mxu0 0.0
  %1222 = vmatpush1.msra.mxu0 0.0
  %1223 = vmatprep.subr.mxu0 0.0
  %1224 = vmatpush1.msra.mxu0 0.0
  %1225 = vmatprep.subr.mxu0 0.0
  %1226 = vmatpush1.msra.mxu0 0.0
  %1227 = vmatprep.subr.mxu0 0.0
  %1228 = vmatpush1.msra.mxu0 0.0
  %1229 = vmatprep.subr.mxu0 0.0
  %1230 = vmatpush1.msra.mxu0 0.0
  %1231 = vmatprep.subr.mxu0 0.0
  %1232 = vmatpush1.msra.mxu0 0.0
  %1233 = vmatprep.subr.mxu0 0.0
  %1234 = vmatpush1.msra.mxu0 0.0
  %1235 = vmatprep.subr.mxu0 0.0
  %1236 = vmatpush1.msra.mxu0 0.0
  %1237 = vmatprep.subr.mxu0 0.0
  %1238 = vmatpush1.msra.mxu0 0.0
  %1239 = vmatprep.subr.mxu0 0.0
  %1240 = vmatpush1.msra.mxu0 0.0
  %1241 = vmatprep.subr.mxu0 0.0
  %1242 = vmatpush1.msra.mxu0 0.0
  %1243 = vmatprep.mubr.f32.mxu0 0.0
  %1244 = vmatmul.mubr.f32.gmra.mrb[0].mxu0 %v1177
  %v1245 = vpop.f32.mrb[0].mxu0
  %v1246 = vadd.f32 0.0, %v1245
  %v1247 = vpop.f32.mrb[0].mxu0
  %v1248 = vadd.f32 0.0, %v1247
  %1249 = vdwg.mxu0
  %1250 = vmatprep.subr.mxu0 %v1163
  %1251 = vmatpush1.msra.mxu0 %v1162
  %1252 = vmatprep.subr.mxu0 0.0
  %1253 = vmatpush1.msra.mxu0 0.0
  %1254 = vmatprep.subr.mxu0 0.0
  %1255 = vmatpush1.msra.mxu0 0.0
  %1256 = vmatprep.subr.mxu0 0.0
  %1257 = vmatpush1.msra.mxu0 0.0
  %1258 = vmatprep.subr.mxu0 0.0
  %1259 = vmatpush1.msra.mxu0 0.0
  %1260 = vmatprep.subr.mxu0 0.0
  %1261 = vmatpush1.msra.mxu0 0.0
  %1262 = vmatprep.subr.mxu0 0.0
  %1263 = vmatpush1.msra.mxu0 0.0
  %1264 = vmatprep.subr.mxu0 0.0
  %1265 = vmatpush1.msra.mxu0 0.0
  %1266 = vmatprep.subr.mxu0 0.0
  %1267 = vmatpush1.msra.mxu0 0.0
  %1268 = vmatprep.subr.mxu0 0.0
  %1269 = vmatpush1.msra.mxu0 0.0
  %1270 = vmatprep.subr.mxu0 0.0
  %1271 = vmatpush1.msra.mxu0 0.0
  %1272 = vmatprep.subr.mxu0 0.0
  %1273 = vmatpush1.msra.mxu0 0.0
  %1274 = vmatprep.subr.mxu0 0.0
  %1275 = vmatpush1.msra.mxu0 0.0
  %1276 = vmatprep.subr.mxu0 0.0
  %1277 = vmatpush1.msra.mxu0 0.0
  %1278 = vmatprep.subr.mxu0 0.0
  %1279 = vmatpush1.msra.mxu0 0.0
  %1280 = vmatprep.subr.mxu0 0.0
  %1281 = vmatpush1.msra.mxu0 0.0
  %1282 = vmatprep.subr.mxu0 0.0
  %1283 = vmatpush1.msra.mxu0 0.0
  %1284 = vmatprep.subr.mxu0 0.0
  %1285 = vmatpush1.msra.mxu0 0.0
  %1286 = vmatprep.subr.mxu0 0.0
  %1287 = vmatpush1.msra.mxu0 0.0
  %1288 = vmatprep.subr.mxu0 0.0
  %1289 = vmatpush1.msra.mxu0 0.0
  %1290 = vmatprep.subr.mxu0 0.0
  %1291 = vmatpush1.msra.mxu0 0.0
  %1292 = vmatprep.subr.mxu0 0.0
  %1293 = vmatpush1.msra.mxu0 0.0
  %1294 = vmatprep.subr.mxu0 0.0
  %1295 = vmatpush1.msra.mxu0 0.0
  %1296 = vmatprep.subr.mxu0 0.0
  %1297 = vmatpush1.msra.mxu0 0.0
  %1298 = vmatprep.subr.mxu0 0.0
  %1299 = vmatpush1.msra.mxu0 0.0
  %1300 = vmatprep.subr.mxu0 0.0
  %1301 = vmatpush1.msra.mxu0 0.0
  %1302 = vmatprep.subr.mxu0 0.0
  %1303 = vmatpush1.msra.mxu0 0.0
  %1304 = vmatprep.subr.mxu0 0.0
  %1305 = vmatpush1.msra.mxu0 0.0
  %1306 = vmatprep.subr.mxu0 0.0
  %1307 = vmatpush1.msra.mxu0 0.0
  %1308 = vmatprep.subr.mxu0 0.0
  %1309 = vmatpush1.msra.mxu0 0.0
  %1310 = vmatprep.subr.mxu0 0.0
  %1311 = vmatpush1.msra.mxu0 0.0
  %1312 = vmatprep.subr.mxu0 0.0
  %1313 = vmatpush1.msra.mxu0 0.0
  %1314 = vmatprep.mubr.f32.mxu0 0.0
  %1315 = vmatmul.mubr.f32.gmra.mrb[0].mxu0 %v1177
  %v1316 = vpop.f32.mrb[0].mxu0
  %v1317 = vadd.f32 0.0, %v1316
  %v1318 = vpop.f32.mrb[0].mxu0
  %v1319 = vadd.f32 0.0, %v1318
  %1320 = vdwg.mxu0
  %1321 = vmatprep.subr.mxu0 %v1165
  %1322 = vmatpush1.msra.mxu0 %v1164
  %1323 = vmatprep.subr.mxu0 0.0
  %1324 = vmatpush1.msra.mxu0 0.0
  %1325 = vmatprep.subr.mxu0 0.0
  %1326 = vmatpush1.msra.mxu0 0.0
  %1327 = vmatprep.subr.mxu0 0.0
  %1328 = vmatpush1.msra.mxu0 0.0
  %1329 = vmatprep.subr.mxu0 0.0
  %1330 = vmatpush1.msra.mxu0 0.0
  %1331 = vmatprep.subr.mxu0 0.0
  %1332 = vmatpush1.msra.mxu0 0.0
  %1333 = vmatprep.subr.mxu0 0.0
  %1334 = vmatpush1.msra.mxu0 0.0
  %1335 = vmatprep.subr.mxu0 0.0
  %1336 = vmatpush1.msra.mxu0 0.0
  %1337 = vmatprep.subr.mxu0 0.0
  %1338 = vmatpush1.msra.mxu0 0.0
  %1339 = vmatprep.subr.mxu0 0.0
  %1340 = vmatpush1.msra.mxu0 0.0
  %1341 = vmatprep.subr.mxu0 0.0
  %1342 = vmatpush1.msra.mxu0 0.0
  %1343 = vmatprep.subr.mxu0 0.0
  %1344 = vmatpush1.msra.mxu0 0.0
  %1345 = vmatprep.subr.mxu0 0.0
  %1346 = vmatpush1.msra.mxu0 0.0
  %1347 = vmatprep.subr.mxu0 0.0
  %1348 = vmatpush1.msra.mxu0 0.0
  %1349 = vmatprep.subr.mxu0 0.0
  %1350 = vmatpush1.msra.mxu0 0.0
  %1351 = vmatprep.subr.mxu0 0.0
  %1352 = vmatpush1.msra.mxu0 0.0
  %1353 = vmatprep.subr.mxu0 0.0
  %1354 = vmatpush1.msra.mxu0 0.0
  %1355 = vmatprep.subr.mxu0 0.0
  %1356 = vmatpush1.msra.mxu0 0.0
  %1357 = vmatprep.subr.mxu0 0.0
  %1358 = vmatpush1.msra.mxu0 0.0
  %1359 = vmatprep.subr.mxu0 0.0
  %1360 = vmatpush1.msra.mxu0 0.0
  %1361 = vmatprep.subr.mxu0 0.0
  %1362 = vmatpush1.msra.mxu0 0.0
  %1363 = vmatprep.subr.mxu0 0.0
  %1364 = vmatpush1.msra.mxu0 0.0
  %1365 = vmatprep.subr.mxu0 0.0
  %1366 = vmatpush1.msra.mxu0 0.0
  %1367 = vmatprep.subr.mxu0 0.0
  %1368 = vmatpush1.msra.mxu0 0.0
  %1369 = vmatprep.subr.mxu0 0.0
  %1370 = vmatpush1.msra.mxu0 0.0
  %1371 = vmatprep.subr.mxu0 0.0
  %1372 = vmatpush1.msra.mxu0 0.0
  %1373 = vmatprep.subr.mxu0 0.0
  %1374 = vmatpush1.msra.mxu0 0.0
  %1375 = vmatprep.subr.mxu0 0.0
  %1376 = vmatpush1.msra.mxu0 0.0
  %1377 = vmatprep.subr.mxu0 0.0
  %1378 = vmatpush1.msra.mxu0 0.0
  %1379 = vmatprep.subr.mxu0 0.0
  %1380 = vmatpush1.msra.mxu0 0.0
  %1381 = vmatprep.subr.mxu0 0.0
  %1382 = vmatpush1.msra.mxu0 0.0
  %1383 = vmatprep.subr.mxu0 0.0
  %1384 = vmatpush1.msra.mxu0 0.0
  %1385 = vmatprep.mubr.f32.mxu0 0.0
  %1386 = vmatmul.mubr.f32.gmra.mrb[0].mxu0 %v1177
  %v1387 = vpop.f32.mrb[0].mxu0
  %v1388 = vadd.f32 0.0, %v1387
  %v1389 = vpop.f32.mrb[0].mxu0
  %v1390 = vadd.f32 0.0, %v1389
  %1391 = vdwg.mxu0
  %1392 = vmatprep.subr.mxu0 %v1167
  %1393 = vmatpush1.msra.mxu0 %v1166
  %1394 = vmatprep.subr.mxu0 0.0
  %1395 = vmatpush1.msra.mxu0 0.0
  %1396 = vmatprep.subr.mxu0 0.0
  %1397 = vmatpush1.msra.mxu0 0.0
  %1398 = vmatprep.subr.mxu0 0.0
  %1399 = vmatpush1.msra.mxu0 0.0
  %1400 = vmatprep.subr.mxu0 0.0
  %1401 = vmatpush1.msra.mxu0 0.0
  %1402 = vmatprep.subr.mxu0 0.0
  %1403 = vmatpush1.msra.mxu0 0.0
  %1404 = vmatprep.subr.mxu0 0.0
  %1405 = vmatpush1.msra.mxu0 0.0
  %1406 = vmatprep.subr.mxu0 0.0
  %1407 = vmatpush1.msra.mxu0 0.0
  %1408 = vmatprep.subr.mxu0 0.0
  %1409 = vmatpush1.msra.mxu0 0.0
  %1410 = vmatprep.subr.mxu0 0.0
  %1411 = vmatpush1.msra.mxu0 0.0
  %1412 = vmatprep.subr.mxu0 0.0
  %1413 = vmatpush1.msra.mxu0 0.0
  %1414 = vmatprep.subr.mxu0 0.0
  %1415 = vmatpush1.msra.mxu0 0.0
  %1416 = vmatprep.subr.mxu0 0.0
  %1417 = vmatpush1.msra.mxu0 0.0
  %1418 = vmatprep.subr.mxu0 0.0
  %1419 = vmatpush1.msra.mxu0 0.0
  %1420 = vmatprep.subr.mxu0 0.0
  %1421 = vmatpush1.msra.mxu0 0.0
  %1422 = vmatprep.subr.mxu0 0.0
  %1423 = vmatpush1.msra.mxu0 0.0
  %1424 = vmatprep.subr.mxu0 0.0
  %1425 = vmatpush1.msra.mxu0 0.0
  %1426 = vmatprep.subr.mxu0 0.0
  %1427 = vmatpush1.msra.mxu0 0.0
  %1428 = vmatprep.subr.mxu0 0.0
  %1429 = vmatpush1.msra.mxu0 0.0
  %1430 = vmatprep.subr.mxu0 0.0
  %1431 = vmatpush1.msra.mxu0 0.0
  %1432 = vmatprep.subr.mxu0 0.0
  %1433 = vmatpush1.msra.mxu0 0.0
  %1434 = vmatprep.subr.mxu0 0.0
  %1435 = vmatpush1.msra.mxu0 0.0
  %1436 = vmatprep.subr.mxu0 0.0
  %1437 = vmatpush1.msra.mxu0 0.0
  %1438 = vmatprep.subr.mxu0 0.0
  %1439 = vmatpush1.msra.mxu0 0.0
  %1440 = vmatprep.subr.mxu0 0.0
  %1441 = vmatpush1.msra.mxu0 0.0
  %1442 = vmatprep.subr.mxu0 0.0
  %1443 = vmatpush1.msra.mxu0 0.0
  %1444 = vmatprep.subr.mxu0 0.0
  %1445 = vmatpush1.msra.mxu0 0.0
  %1446 = vmatprep.subr.mxu0 0.0
  %1447 = vmatpush1.msra.mxu0 0.0
  %1448 = vmatprep.subr.mxu0 0.0
  %1449 = vmatpush1.msra.mxu0 0.0
  %1450 = vmatprep.subr.mxu0 0.0
  %1451 = vmatpush1.msra.mxu0 0.0
  %1452 = vmatprep.subr.mxu0 0.0
  %1453 = vmatpush1.msra.mxu0 0.0
  %1454 = vmatprep.subr.mxu0 0.0
  %1455 = vmatpush1.msra.mxu0 0.0
  %1456 = vmatprep.mubr.f32.mxu0 0.0
  %1457 = vmatmul.mubr.f32.gmra.mrb[0].mxu0 %v1177
  %v1458 = vpop.f32.mrb[0].mxu0
  %v1459 = vadd.f32 0.0, %v1458
  %v1460 = vpop.f32.mrb[0].mxu0
  %v1461 = vadd.f32 0.0, %v1460
  %1462 = vdwg.mxu0
  %v1463 = vadd.f32 %v922, %v1246
  %v1464 = vadd.f32 %v924, %v1248
  %v1465 = vadd.f32 %v993, %v1317
  %v1466 = vadd.f32 %v995, %v1319
  %v1467 = vadd.f32 %v1064, %v1388
  %v1468 = vadd.f32 %v1066, %v1390
  %v1469 = vadd.f32 %v1135, %v1459
  %v1470 = vadd.f32 %v1137, %v1461
  %s1471 = scalar_lea.vmem %s4, 24
  %v1472 = vld [vmem:[%s1471] sm:$0xff]
  %1473 = vrot.lane.b32.xlu0 %v509, 104
  %v1474 = vpop.permute.xlu0 %1473
  %1475 = vrot.lane.b32.xlu0 %v510, 104
  %v1476 = vpop.permute.xlu0 %1475
  %1477 = vrot.lane.b32.xlu0 %v511, 104
  %v1478 = vpop.permute.xlu0 %1477
  %1479 = vrot.lane.b32.xlu0 %v512, 104
  %v1480 = vpop.permute.xlu0 %1479
  %1481 = vrot.lane.b32.xlu0 %v513, 104
  %v1482 = vpop.permute.xlu0 %1481
  %1483 = vrot.lane.b32.xlu0 %v514, 104
  %v1484 = vpop.permute.xlu0 %1483
  %1485 = vrot.lane.b32.xlu0 %v515, 104
  %v1486 = vpop.permute.xlu0 %1485
  %1487 = vrot.lane.b32.xlu0 %v516, 104
  %v1488 = vpop.permute.xlu0 %1487
  %1489 = vrot.lane.b32.xlu0 %v517, 104
  %v1490 = vpop.permute.xlu0 %1489
  %vm1491 = vcmask 850944
  %v1492 = vsel %vm1491, %v1474, %v1476
  %v1493 = vsel %vm1491, %v1476, %v1478
  %v1494 = vsel %vm1491, %v1478, %v1480
  %v1495 = vsel %vm1491, %v1480, %v1482
  %v1496 = vsel %vm1491, %v1482, %v1484
  %v1497 = vsel %vm1491, %v1484, %v1486
  %v1498 = vsel %vm1491, %v1486, %v1488
  %v1499 = vsel %vm1491, %v1488, %v1490
  %v1509 = vsel %vm69, %v1472, 0
  %1511 = vmatprep.subr.mxu0 %v1493
  %1512 = vmatpush1.msra.mxu0 %v1492
  %1513 = vmatprep.subr.mxu0 0.0
  %1514 = vmatpush1.msra.mxu0 0.0
  %1515 = vmatprep.subr.mxu0 0.0
  %1516 = vmatpush1.msra.mxu0 0.0
  %1517 = vmatprep.subr.mxu0 0.0
  %1518 = vmatpush1.msra.mxu0 0.0
  %1519 = vmatprep.subr.mxu0 0.0
  %1520 = vmatpush1.msra.mxu0 0.0
  %1521 = vmatprep.subr.mxu0 0.0
  %1522 = vmatpush1.msra.mxu0 0.0
  %1523 = vmatprep.subr.mxu0 0.0
  %1524 = vmatpush1.msra.mxu0 0.0
  %1525 = vmatprep.subr.mxu0 0.0
  %1526 = vmatpush1.msra.mxu0 0.0
  %1527 = vmatprep.subr.mxu0 0.0
  %1528 = vmatpush1.msra.mxu0 0.0
  %1529 = vmatprep.subr.mxu0 0.0
  %1530 = vmatpush1.msra.mxu0 0.0
  %1531 = vmatprep.subr.mxu0 0.0
  %1532 = vmatpush1.msra.mxu0 0.0
  %1533 = vmatprep.subr.mxu0 0.0
  %1534 = vmatpush1.msra.mxu0 0.0
  %1535 = vmatprep.subr.mxu0 0.0
  %1536 = vmatpush1.msra.mxu0 0.0
  %1537 = vmatprep.subr.mxu0 0.0
  %1538 = vmatpush1.msra.mxu0 0.0
  %1539 = vmatprep.subr.mxu0 0.0
  %1540 = vmatpush1.msra.mxu0 0.0
  %1541 = vmatprep.subr.mxu0 0.0
  %1542 = vmatpush1.msra.mxu0 0.0
  %1543 = vmatprep.subr.mxu0 0.0
  %1544 = vmatpush1.msra.mxu0 0.0
  %1545 = vmatprep.subr.mxu0 0.0
  %1546 = vmatpush1.msra.mxu0 0.0
  %1547 = vmatprep.subr.mxu0 0.0
  %1548 = vmatpush1.msra.mxu0 0.0
  %1549 = vmatprep.subr.mxu0 0.0
  %1550 = vmatpush1.msra.mxu0 0.0
  %1551 = vmatprep.subr.mxu0 0.0
  %1552 = vmatpush1.msra.mxu0 0.0
  %1553 = vmatprep.subr.mxu0 0.0
  %1554 = vmatpush1.msra.mxu0 0.0
  %1555 = vmatprep.subr.mxu0 0.0
  %1556 = vmatpush1.msra.mxu0 0.0
  %1557 = vmatprep.subr.mxu0 0.0
  %1558 = vmatpush1.msra.mxu0 0.0
  %1559 = vmatprep.subr.mxu0 0.0
  %1560 = vmatpush1.msra.mxu0 0.0
  %1561 = vmatprep.subr.mxu0 0.0
  %1562 = vmatpush1.msra.mxu0 0.0
  %1563 = vmatprep.subr.mxu0 0.0
  %1564 = vmatpush1.msra.mxu0 0.0
  %1565 = vmatprep.subr.mxu0 0.0
  %1566 = vmatpush1.msra.mxu0 0.0
  %1567 = vmatprep.subr.mxu0 0.0
  %1568 = vmatpush1.msra.mxu0 0.0
  %1569 = vmatprep.subr.mxu0 0.0
  %1570 = vmatpush1.msra.mxu0 0.0
  %1571 = vmatprep.subr.mxu0 0.0
  %1572 = vmatpush1.msra.mxu0 0.0
  %1573 = vmatprep.subr.mxu0 0.0
  %1574 = vmatpush1.msra.mxu0 0.0
  %1575 = vmatprep.mubr.f32.mxu0 0.0
  %1576 = vmatmul.mubr.f32.gmra.mrb[0].mxu0 %v1509
  %v1577 = vpop.f32.mrb[0].mxu0
  %v1578 = vadd.f32 0.0, %v1577
  %v1579 = vpop.f32.mrb[0].mxu0
  %v1580 = vadd.f32 0.0, %v1579
  %1581 = vdwg.mxu0
  %1582 = vmatprep.subr.mxu0 %v1495
  %1583 = vmatpush1.msra.mxu0 %v1494
  %1584 = vmatprep.subr.mxu0 0.0
  %1585 = vmatpush1.msra.mxu0 0.0
  %1586 = vmatprep.subr.mxu0 0.0
  %1587 = vmatpush1.msra.mxu0 0.0
  %1588 = vmatprep.subr.mxu0 0.0
  %1589 = vmatpush1.msra.mxu0 0.0
  %1590 = vmatprep.subr.mxu0 0.0
  %1591 = vmatpush1.msra.mxu0 0.0
  %1592 = vmatprep.subr.mxu0 0.0
  %1593 = vmatpush1.msra.mxu0 0.0
  %1594 = vmatprep.subr.mxu0 0.0
  %1595 = vmatpush1.msra.mxu0 0.0
  %1596 = vmatprep.subr.mxu0 0.0
  %1597 = vmatpush1.msra.mxu0 0.0
  %1598 = vmatprep.subr.mxu0 0.0
  %1599 = vmatpush1.msra.mxu0 0.0
  %1600 = vmatprep.subr.mxu0 0.0
  %1601 = vmatpush1.msra.mxu0 0.0
  %1602 = vmatprep.subr.mxu0 0.0
  %1603 = vmatpush1.msra.mxu0 0.0
  %1604 = vmatprep.subr.mxu0 0.0
  %1605 = vmatpush1.msra.mxu0 0.0
  %1606 = vmatprep.subr.mxu0 0.0
  %1607 = vmatpush1.msra.mxu0 0.0
  %1608 = vmatprep.subr.mxu0 0.0
  %1609 = vmatpush1.msra.mxu0 0.0
  %1610 = vmatprep.subr.mxu0 0.0
  %1611 = vmatpush1.msra.mxu0 0.0
  %1612 = vmatprep.subr.mxu0 0.0
  %1613 = vmatpush1.msra.mxu0 0.0
  %1614 = vmatprep.subr.mxu0 0.0
  %1615 = vmatpush1.msra.mxu0 0.0
  %1616 = vmatprep.subr.mxu0 0.0
  %1617 = vmatpush1.msra.mxu0 0.0
  %1618 = vmatprep.subr.mxu0 0.0
  %1619 = vmatpush1.msra.mxu0 0.0
  %1620 = vmatprep.subr.mxu0 0.0
  %1621 = vmatpush1.msra.mxu0 0.0
  %1622 = vmatprep.subr.mxu0 0.0
  %1623 = vmatpush1.msra.mxu0 0.0
  %1624 = vmatprep.subr.mxu0 0.0
  %1625 = vmatpush1.msra.mxu0 0.0
  %1626 = vmatprep.subr.mxu0 0.0
  %1627 = vmatpush1.msra.mxu0 0.0
  %1628 = vmatprep.subr.mxu0 0.0
  %1629 = vmatpush1.msra.mxu0 0.0
  %1630 = vmatprep.subr.mxu0 0.0
  %1631 = vmatpush1.msra.mxu0 0.0
  %1632 = vmatprep.subr.mxu0 0.0
  %1633 = vmatpush1.msra.mxu0 0.0
  %1634 = vmatprep.subr.mxu0 0.0
  %1635 = vmatpush1.msra.mxu0 0.0
  %1636 = vmatprep.subr.mxu0 0.0
  %1637 = vmatpush1.msra.mxu0 0.0
  %1638 = vmatprep.subr.mxu0 0.0
  %1639 = vmatpush1.msra.mxu0 0.0
  %1640 = vmatprep.subr.mxu0 0.0
  %1641 = vmatpush1.msra.mxu0 0.0
  %1642 = vmatprep.subr.mxu0 0.0
  %1643 = vmatpush1.msra.mxu0 0.0
  %1644 = vmatprep.subr.mxu0 0.0
  %1645 = vmatpush1.msra.mxu0 0.0
  %1646 = vmatprep.mubr.f32.mxu0 0.0
  %1647 = vmatmul.mubr.f32.gmra.mrb[0].mxu0 %v1509
  %v1648 = vpop.f32.mrb[0].mxu0
  %v1649 = vadd.f32 0.0, %v1648
  %v1650 = vpop.f32.mrb[0].mxu0
  %v1651 = vadd.f32 0.0, %v1650
  %1652 = vdwg.mxu0
  %1653 = vmatprep.subr.mxu0 %v1497
  %1654 = vmatpush1.msra.mxu0 %v1496
  %1655 = vmatprep.subr.mxu0 0.0
  %1656 = vmatpush1.msra.mxu0 0.0
  %1657 = vmatprep.subr.mxu0 0.0
  %1658 = vmatpush1.msra.mxu0 0.0
  %1659 = vmatprep.subr.mxu0 0.0
  %1660 = vmatpush1.msra.mxu0 0.0
  %1661 = vmatprep.subr.mxu0 0.0
  %1662 = vmatpush1.msra.mxu0 0.0
  %1663 = vmatprep.subr.mxu0 0.0
  %1664 = vmatpush1.msra.mxu0 0.0
  %1665 = vmatprep.subr.mxu0 0.0
  %1666 = vmatpush1.msra.mxu0 0.0
  %1667 = vmatprep.subr.mxu0 0.0
  %1668 = vmatpush1.msra.mxu0 0.0
  %1669 = vmatprep.subr.mxu0 0.0
  %1670 = vmatpush1.msra.mxu0 0.0
  %1671 = vmatprep.subr.mxu0 0.0
  %1672 = vmatpush1.msra.mxu0 0.0
  %1673 = vmatprep.subr.mxu0 0.0
  %1674 = vmatpush1.msra.mxu0 0.0
  %1675 = vmatprep.subr.mxu0 0.0
  %1676 = vmatpush1.msra.mxu0 0.0
  %1677 = vmatprep.subr.mxu0 0.0
  %1678 = vmatpush1.msra.mxu0 0.0
  %1679 = vmatprep.subr.mxu0 0.0
  %1680 = vmatpush1.msra.mxu0 0.0
  %1681 = vmatprep.subr.mxu0 0.0
  %1682 = vmatpush1.msra.mxu0 0.0
  %1683 = vmatprep.subr.mxu0 0.0
  %1684 = vmatpush1.msra.mxu0 0.0
  %1685 = vmatprep.subr.mxu0 0.0
  %1686 = vmatpush1.msra.mxu0 0.0
  %1687 = vmatprep.subr.mxu0 0.0
  %1688 = vmatpush1.msra.mxu0 0.0
  %1689 = vmatprep.subr.mxu0 0.0
  %1690 = vmatpush1.msra.mxu0 0.0
  %1691 = vmatprep.subr.mxu0 0.0
  %1692 = vmatpush1.msra.mxu0 0.0
  %1693 = vmatprep.subr.mxu0 0.0
  %1694 = vmatpush1.msra.mxu0 0.0
  %1695 = vmatprep.subr.mxu0 0.0
  %1696 = vmatpush1.msra.mxu0 0.0
  %1697 = vmatprep.subr.mxu0 0.0
  %1698 = vmatpush1.msra.mxu0 0.0
  %1699 = vmatprep.subr.mxu0 0.0
  %1700 = vmatpush1.msra.mxu0 0.0
  %1701 = vmatprep.subr.mxu0 0.0
  %1702 = vmatpush1.msra.mxu0 0.0
  %1703 = vmatprep.subr.mxu0 0.0
  %1704 = vmatpush1.msra.mxu0 0.0
  %1705 = vmatprep.subr.mxu0 0.0
  %1706 = vmatpush1.msra.mxu0 0.0
  %1707 = vmatprep.subr.mxu0 0.0
  %1708 = vmatpush1.msra.mxu0 0.0
  %1709 = vmatprep.subr.mxu0 0.0
  %1710 = vmatpush1.msra.mxu0 0.0
  %1711 = vmatprep.subr.mxu0 0.0
  %1712 = vmatpush1.msra.mxu0 0.0
  %1713 = vmatprep.subr.mxu0 0.0
  %1714 = vmatpush1.msra.mxu0 0.0
  %1715 = vmatprep.subr.mxu0 0.0
  %1716 = vmatpush1.msra.mxu0 0.0
  %1717 = vmatprep.mubr.f32.mxu0 0.0
  %1718 = vmatmul.mubr.f32.gmra.mrb[0].mxu0 %v1509
  %v1719 = vpop.f32.mrb[0].mxu0
  %v1720 = vadd.f32 0.0, %v1719
  %v1721 = vpop.f32.mrb[0].mxu0
  %v1722 = vadd.f32 0.0, %v1721
  %1723 = vdwg.mxu0
  %1724 = vmatprep.subr.mxu0 %v1499
  %1725 = vmatpush1.msra.mxu0 %v1498
  %1726 = vmatprep.subr.mxu0 0.0
  %1727 = vmatpush1.msra.mxu0 0.0
  %1728 = vmatprep.subr.mxu0 0.0
  %1729 = vmatpush1.msra.mxu0 0.0
  %1730 = vmatprep.subr.mxu0 0.0
  %1731 = vmatpush1.msra.mxu0 0.0
  %1732 = vmatprep.subr.mxu0 0.0
  %1733 = vmatpush1.msra.mxu0 0.0
  %1734 = vmatprep.subr.mxu0 0.0
  %1735 = vmatpush1.msra.mxu0 0.0
  %1736 = vmatprep.subr.mxu0 0.0
  %1737 = vmatpush1.msra.mxu0 0.0
  %1738 = vmatprep.subr.mxu0 0.0
  %1739 = vmatpush1.msra.mxu0 0.0
  %1740 = vmatprep.subr.mxu0 0.0
  %1741 = vmatpush1.msra.mxu0 0.0
  %1742 = vmatprep.subr.mxu0 0.0
  %1743 = vmatpush1.msra.mxu0 0.0
  %1744 = vmatprep.subr.mxu0 0.0
  %1745 = vmatpush1.msra.mxu0 0.0
  %1746 = vmatprep.subr.mxu0 0.0
  %1747 = vmatpush1.msra.mxu0 0.0
  %1748 = vmatprep.subr.mxu0 0.0
  %1749 = vmatpush1.msra.mxu0 0.0
  %1750 = vmatprep.subr.mxu0 0.0
  %1751 = vmatpush1.msra.mxu0 0.0
  %1752 = vmatprep.subr.mxu0 0.0
  %1753 = vmatpush1.msra.mxu0 0.0
  %1754 = vmatprep.subr.mxu0 0.0
  %1755 = vmatpush1.msra.mxu0 0.0
  %1756 = vmatprep.subr.mxu0 0.0
  %1757 = vmatpush1.msra.mxu0 0.0
  %1758 = vmatprep.subr.mxu0 0.0
  %1759 = vmatpush1.msra.mxu0 0.0
  %1760 = vmatprep.subr.mxu0 0.0
  %1761 = vmatpush1.msra.mxu0 0.0
  %1762 = vmatprep.subr.mxu0 0.0
  %1763 = vmatpush1.msra.mxu0 0.0
  %1764 = vmatprep.subr.mxu0 0.0
  %1765 = vmatpush1.msra.mxu0 0.0
  %1766 = vmatprep.subr.mxu0 0.0
  %1767 = vmatpush1.msra.mxu0 0.0
  %1768 = vmatprep.subr.mxu0 0.0
  %1769 = vmatpush1.msra.mxu0 0.0
  %1770 = vmatprep.subr.mxu0 0.0
  %1771 = vmatpush1.msra.mxu0 0.0
  %1772 = vmatprep.subr.mxu0 0.0
  %1773 = vmatpush1.msra.mxu0 0.0
  %1774 = vmatprep.subr.mxu0 0.0
  %1775 = vmatpush1.msra.mxu0 0.0
  %1776 = vmatprep.subr.mxu0 0.0
  %1777 = vmatpush1.msra.mxu0 0.0
  %1778 = vmatprep.subr.mxu0 0.0
  %1779 = vmatpush1.msra.mxu0 0.0
  %1780 = vmatprep.subr.mxu0 0.0
  %1781 = vmatpush1.msra.mxu0 0.0
  %1782 = vmatprep.subr.mxu0 0.0
  %1783 = vmatpush1.msra.mxu0 0.0
  %1784 = vmatprep.subr.mxu0 0.0
  %1785 = vmatpush1.msra.mxu0 0.0
  %1786 = vmatprep.subr.mxu0 0.0
  %1787 = vmatpush1.msra.mxu0 0.0
  %1788 = vmatprep.mubr.f32.mxu0 0.0
  %1789 = vmatmul.mubr.f32.gmra.mrb[0].mxu0 %v1509
  %v1790 = vpop.f32.mrb[0].mxu0
  %v1791 = vadd.f32 0.0, %v1790
  %v1792 = vpop.f32.mrb[0].mxu0
  %v1793 = vadd.f32 0.0, %v1792
  %1794 = vdwg.mxu0
  %v1795 = vadd.f32 %v1463, %v1578
  %v1796 = vadd.f32 %v1464, %v1580
  %v1797 = vadd.f32 %v1465, %v1649
  %v1798 = vadd.f32 %v1466, %v1651
  %v1799 = vadd.f32 %v1467, %v1720
  %v1800 = vadd.f32 %v1468, %v1722
  %v1801 = vadd.f32 %v1469, %v1791
  %v1802 = vadd.f32 %v1470, %v1793
  %s1803 = scalar_lea.vmem %s4, 32
  %v1804 = vld [vmem:[%s1803] sm:$0xff]
  %1805 = vrot.lane.b32.xlu0 %v509, 103
  %v1806 = vpop.permute.xlu0 %1805
  %1807 = vrot.lane.b32.xlu0 %v510, 103
  %v1808 = vpop.permute.xlu0 %1807
  %1809 = vrot.lane.b32.xlu0 %v511, 103
  %v1810 = vpop.permute.xlu0 %1809
  %1811 = vrot.lane.b32.xlu0 %v512, 103
  %v1812 = vpop.permute.xlu0 %1811
  %1813 = vrot.lane.b32.xlu0 %v513, 103
  %v1814 = vpop.permute.xlu0 %1813
  %1815 = vrot.lane.b32.xlu0 %v514, 103
  %v1816 = vpop.permute.xlu0 %1815
  %1817 = vrot.lane.b32.xlu0 %v515, 103
  %v1818 = vpop.permute.xlu0 %1817
  %1819 = vrot.lane.b32.xlu0 %v516, 103
  %v1820 = vpop.permute.xlu0 %1819
  %1821 = vrot.lane.b32.xlu0 %v517, 103
  %v1822 = vpop.permute.xlu0 %1821
  %vm1823 = vcmask 842752
  %v1824 = vsel %vm1823, %v1806, %v1808
  %v1825 = vsel %vm1823, %v1808, %v1810
  %v1826 = vsel %vm1823, %v1810, %v1812
  %v1827 = vsel %vm1823, %v1812, %v1814
  %v1828 = vsel %vm1823, %v1814, %v1816
  %v1829 = vsel %vm1823, %v1816, %v1818
  %v1830 = vsel %vm1823, %v1818, %v1820
  %v1831 = vsel %vm1823, %v1820, %v1822
  %v1841 = vsel %vm69, %v1804, 0
  %1843 = vmatprep.subr.mxu0 %v1825
  %1844 = vmatpush1.msra.mxu0 %v1824
  %1845 = vmatprep.subr.mxu0 0.0
  %1846 = vmatpush1.msra.mxu0 0.0
  %1847 = vmatprep.subr.mxu0 0.0
  %1848 = vmatpush1.msra.mxu0 0.0
  %1849 = vmatprep.subr.mxu0 0.0
  %1850 = vmatpush1.msra.mxu0 0.0
  %1851 = vmatprep.subr.mxu0 0.0
  %1852 = vmatpush1.msra.mxu0 0.0
  %1853 = vmatprep.subr.mxu0 0.0
  %1854 = vmatpush1.msra.mxu0 0.0
  %1855 = vmatprep.subr.mxu0 0.0
  %1856 = vmatpush1.msra.mxu0 0.0
  %1857 = vmatprep.subr.mxu0 0.0
  %1858 = vmatpush1.msra.mxu0 0.0
  %1859 = vmatprep.subr.mxu0 0.0
  %1860 = vmatpush1.msra.mxu0 0.0
  %1861 = vmatprep.subr.mxu0 0.0
  %1862 = vmatpush1.msra.mxu0 0.0
  %1863 = vmatprep.subr.mxu0 0.0
  %1864 = vmatpush1.msra.mxu0 0.0
  %1865 = vmatprep.subr.mxu0 0.0
  %1866 = vmatpush1.msra.mxu0 0.0
  %1867 = vmatprep.subr.mxu0 0.0
  %1868 = vmatpush1.msra.mxu0 0.0
  %1869 = vmatprep.subr.mxu0 0.0
  %1870 = vmatpush1.msra.mxu0 0.0
  %1871 = vmatprep.subr.mxu0 0.0
  %1872 = vmatpush1.msra.mxu0 0.0
  %1873 = vmatprep.subr.mxu0 0.0
  %1874 = vmatpush1.msra.mxu0 0.0
  %1875 = vmatprep.subr.mxu0 0.0
  %1876 = vmatpush1.msra.mxu0 0.0
  %1877 = vmatprep.subr.mxu0 0.0
  %1878 = vmatpush1.msra.mxu0 0.0
  %1879 = vmatprep.subr.mxu0 0.0
  %1880 = vmatpush1.msra.mxu0 0.0
  %1881 = vmatprep.subr.mxu0 0.0
  %1882 = vmatpush1.msra.mxu0 0.0
  %1883 = vmatprep.subr.mxu0 0.0
  %1884 = vmatpush1.msra.mxu0 0.0
  %1885 = vmatprep.subr.mxu0 0.0
  %1886 = vmatpush1.msra.mxu0 0.0
  %1887 = vmatprep.subr.mxu0 0.0
  %1888 = vmatpush1.msra.mxu0 0.0
  %1889 = vmatprep.subr.mxu0 0.0
  %1890 = vmatpush1.msra.mxu0 0.0
  %1891 = vmatprep.subr.mxu0 0.0
  %1892 = vmatpush1.msra.mxu0 0.0
  %1893 = vmatprep.subr.mxu0 0.0
  %1894 = vmatpush1.msra.mxu0 0.0
  %1895 = vmatprep.subr.mxu0 0.0
  %1896 = vmatpush1.msra.mxu0 0.0
  %1897 = vmatprep.subr.mxu0 0.0
  %1898 = vmatpush1.msra.mxu0 0.0
  %1899 = vmatprep.subr.mxu0 0.0
  %1900 = vmatpush1.msra.mxu0 0.0
  %1901 = vmatprep.subr.mxu0 0.0
  %1902 = vmatpush1.msra.mxu0 0.0
  %1903 = vmatprep.subr.mxu0 0.0
  %1904 = vmatpush1.msra.mxu0 0.0
  %1905 = vmatprep.subr.mxu0 0.0
  %1906 = vmatpush1.msra.mxu0 0.0
  %1907 = vmatprep.mubr.f32.mxu0 0.0
  %1908 = vmatmul.mubr.f32.gmra.mrb[0].mxu0 %v1841
  %v1909 = vpop.f32.mrb[0].mxu0
  %v1910 = vadd.f32 0.0, %v1909
  %v1911 = vpop.f32.mrb[0].mxu0
  %v1912 = vadd.f32 0.0, %v1911
  %1913 = vdwg.mxu0
  %1914 = vmatprep.subr.mxu0 %v1827
  %1915 = vmatpush1.msra.mxu0 %v1826
  %1916 = vmatprep.subr.mxu0 0.0
  %1917 = vmatpush1.msra.mxu0 0.0
  %1918 = vmatprep.subr.mxu0 0.0
  %1919 = vmatpush1.msra.mxu0 0.0
  %1920 = vmatprep.subr.mxu0 0.0
  %1921 = vmatpush1.msra.mxu0 0.0
  %1922 = vmatprep.subr.mxu0 0.0
  %1923 = vmatpush1.msra.mxu0 0.0
  %1924 = vmatprep.subr.mxu0 0.0
  %1925 = vmatpush1.msra.mxu0 0.0
  %1926 = vmatprep.subr.mxu0 0.0
  %1927 = vmatpush1.msra.mxu0 0.0
  %1928 = vmatprep.subr.mxu0 0.0
  %1929 = vmatpush1.msra.mxu0 0.0
  %1930 = vmatprep.subr.mxu0 0.0
  %1931 = vmatpush1.msra.mxu0 0.0
  %1932 = vmatprep.subr.mxu0 0.0
  %1933 = vmatpush1.msra.mxu0 0.0
  %1934 = vmatprep.subr.mxu0 0.0
  %1935 = vmatpush1.msra.mxu0 0.0
  %1936 = vmatprep.subr.mxu0 0.0
  %1937 = vmatpush1.msra.mxu0 0.0
  %1938 = vmatprep.subr.mxu0 0.0
  %1939 = vmatpush1.msra.mxu0 0.0
  %1940 = vmatprep.subr.mxu0 0.0
  %1941 = vmatpush1.msra.mxu0 0.0
  %1942 = vmatprep.subr.mxu0 0.0
  %1943 = vmatpush1.msra.mxu0 0.0
  %1944 = vmatprep.subr.mxu0 0.0
  %1945 = vmatpush1.msra.mxu0 0.0
  %1946 = vmatprep.subr.mxu0 0.0
  %1947 = vmatpush1.msra.mxu0 0.0
  %1948 = vmatprep.subr.mxu0 0.0
  %1949 = vmatpush1.msra.mxu0 0.0
  %1950 = vmatprep.subr.mxu0 0.0
  %1951 = vmatpush1.msra.mxu0 0.0
  %1952 = vmatprep.subr.mxu0 0.0
  %1953 = vmatpush1.msra.mxu0 0.0
  %1954 = vmatprep.subr.mxu0 0.0
  %1955 = vmatpush1.msra.mxu0 0.0
  %1956 = vmatprep.subr.mxu0 0.0
  %1957 = vmatpush1.msra.mxu0 0.0
  %1958 = vmatprep.subr.mxu0 0.0
  %1959 = vmatpush1.msra.mxu0 0.0
  %1960 = vmatprep.subr.mxu0 0.0
  %1961 = vmatpush1.msra.mxu0 0.0
  %1962 = vmatprep.subr.mxu0 0.0
  %1963 = vmatpush1.msra.mxu0 0.0
  %1964 = vmatprep.subr.mxu0 0.0
  %1965 = vmatpush1.msra.mxu0 0.0
  %1966 = vmatprep.subr.mxu0 0.0
  %1967 = vmatpush1.msra.mxu0 0.0
  %1968 = vmatprep.subr.mxu0 0.0
  %1969 = vmatpush1.msra.mxu0 0.0
  %1970 = vmatprep.subr.mxu0 0.0
  %1971 = vmatpush1.msra.mxu0 0.0
  %1972 = vmatprep.subr.mxu0 0.0
  %1973 = vmatpush1.msra.mxu0 0.0
  %1974 = vmatprep.subr.mxu0 0.0
  %1975 = vmatpush1.msra.mxu0 0.0
  %1976 = vmatprep.subr.mxu0 0.0
  %1977 = vmatpush1.msra.mxu0 0.0
  %1978 = vmatprep.mubr.f32.mxu0 0.0
  %1979 = vmatmul.mubr.f32.gmra.mrb[0].mxu0 %v1841
  %v1980 = vpop.f32.mrb[0].mxu0
  %v1981 = vadd.f32 0.0, %v1980
  %v1982 = vpop.f32.mrb[0].mxu0
  %v1983 = vadd.f32 0.0, %v1982
  %1984 = vdwg.mxu0
  %1985 = vmatprep.subr.mxu0 %v1829
  %1986 = vmatpush1.msra.mxu0 %v1828
  %1987 = vmatprep.subr.mxu0 0.0
  %1988 = vmatpush1.msra.mxu0 0.0
  %1989 = vmatprep.subr.mxu0 0.0
  %1990 = vmatpush1.msra.mxu0 0.0
  %1991 = vmatprep.subr.mxu0 0.0
  %1992 = vmatpush1.msra.mxu0 0.0
  %1993 = vmatprep.subr.mxu0 0.0
  %1994 = vmatpush1.msra.mxu0 0.0
  %1995 = vmatprep.subr.mxu0 0.0
  %1996 = vmatpush1.msra.mxu0 0.0
  %1997 = vmatprep.subr.mxu0 0.0
  %1998 = vmatpush1.msra.mxu0 0.0
  %1999 = vmatprep.subr.mxu0 0.0
  %2000 = vmatpush1.msra.mxu0 0.0
  %2001 = vmatprep.subr.mxu0 0.0
  %2002 = vmatpush1.msra.mxu0 0.0
  %2003 = vmatprep.subr.mxu0 0.0
  %2004 = vmatpush1.msra.mxu0 0.0
  %2005 = vmatprep.subr.mxu0 0.0
  %2006 = vmatpush1.msra.mxu0 0.0
  %2007 = vmatprep.subr.mxu0 0.0
  %2008 = vmatpush1.msra.mxu0 0.0
  %2009 = vmatprep.subr.mxu0 0.0
  %2010 = vmatpush1.msra.mxu0 0.0
  %2011 = vmatprep.subr.mxu0 0.0
  %2012 = vmatpush1.msra.mxu0 0.0
  %2013 = vmatprep.subr.mxu0 0.0
  %2014 = vmatpush1.msra.mxu0 0.0
  %2015 = vmatprep.subr.mxu0 0.0
  %2016 = vmatpush1.msra.mxu0 0.0
  %2017 = vmatprep.subr.mxu0 0.0
  %2018 = vmatpush1.msra.mxu0 0.0
  %2019 = vmatprep.subr.mxu0 0.0
  %2020 = vmatpush1.msra.mxu0 0.0
  %2021 = vmatprep.subr.mxu0 0.0
  %2022 = vmatpush1.msra.mxu0 0.0
  %2023 = vmatprep.subr.mxu0 0.0
  %2024 = vmatpush1.msra.mxu0 0.0
  %2025 = vmatprep.subr.mxu0 0.0
  %2026 = vmatpush1.msra.mxu0 0.0
  %2027 = vmatprep.subr.mxu0 0.0
  %2028 = vmatpush1.msra.mxu0 0.0
  %2029 = vmatprep.subr.mxu0 0.0
  %2030 = vmatpush1.msra.mxu0 0.0
  %2031 = vmatprep.subr.mxu0 0.0
  %2032 = vmatpush1.msra.mxu0 0.0
  %2033 = vmatprep.subr.mxu0 0.0
  %2034 = vmatpush1.msra.mxu0 0.0
  %2035 = vmatprep.subr.mxu0 0.0
  %2036 = vmatpush1.msra.mxu0 0.0
  %2037 = vmatprep.subr.mxu0 0.0
  %2038 = vmatpush1.msra.mxu0 0.0
  %2039 = vmatprep.subr.mxu0 0.0
  %2040 = vmatpush1.msra.mxu0 0.0
  %2041 = vmatprep.subr.mxu0 0.0
  %2042 = vmatpush1.msra.mxu0 0.0
  %2043 = vmatprep.subr.mxu0 0.0
  %2044 = vmatpush1.msra.mxu0 0.0
  %2045 = vmatprep.subr.mxu0 0.0
  %2046 = vmatpush1.msra.mxu0 0.0
  %2047 = vmatprep.subr.mxu0 0.0
  %2048 = vmatpush1.msra.mxu0 0.0
  %2049 = vmatprep.mubr.f32.mxu0 0.0
  %2050 = vmatmul.mubr.f32.gmra.mrb[0].mxu0 %v1841
  %v2051 = vpop.f32.mrb[0].mxu0
  %v2052 = vadd.f32 0.0, %v2051
  %v2053 = vpop.f32.mrb[0].mxu0
  %v2054 = vadd.f32 0.0, %v2053
  %2055 = vdwg.mxu0
  %2056 = vmatprep.subr.mxu0 %v1831
  %2057 = vmatpush1.msra.mxu0 %v1830
  %2058 = vmatprep.subr.mxu0 0.0
  %2059 = vmatpush1.msra.mxu0 0.0
  %2060 = vmatprep.subr.mxu0 0.0
  %2061 = vmatpush1.msra.mxu0 0.0
  %2062 = vmatprep.subr.mxu0 0.0
  %2063 = vmatpush1.msra.mxu0 0.0
  %2064 = vmatprep.subr.mxu0 0.0
  %2065 = vmatpush1.msra.mxu0 0.0
  %2066 = vmatprep.subr.mxu0 0.0
  %2067 = vmatpush1.msra.mxu0 0.0
  %2068 = vmatprep.subr.mxu0 0.0
  %2069 = vmatpush1.msra.mxu0 0.0
  %2070 = vmatprep.subr.mxu0 0.0
  %2071 = vmatpush1.msra.mxu0 0.0
  %2072 = vmatprep.subr.mxu0 0.0
  %2073 = vmatpush1.msra.mxu0 0.0
  %2074 = vmatprep.subr.mxu0 0.0
  %2075 = vmatpush1.msra.mxu0 0.0
  %2076 = vmatprep.subr.mxu0 0.0
  %2077 = vmatpush1.msra.mxu0 0.0
  %2078 = vmatprep.subr.mxu0 0.0
  %2079 = vmatpush1.msra.mxu0 0.0
  %2080 = vmatprep.subr.mxu0 0.0
  %2081 = vmatpush1.msra.mxu0 0.0
  %2082 = vmatprep.subr.mxu0 0.0
  %2083 = vmatpush1.msra.mxu0 0.0
  %2084 = vmatprep.subr.mxu0 0.0
  %2085 = vmatpush1.msra.mxu0 0.0
  %2086 = vmatprep.subr.mxu0 0.0
  %2087 = vmatpush1.msra.mxu0 0.0
  %2088 = vmatprep.subr.mxu0 0.0
  %2089 = vmatpush1.msra.mxu0 0.0
  %2090 = vmatprep.subr.mxu0 0.0
  %2091 = vmatpush1.msra.mxu0 0.0
  %2092 = vmatprep.subr.mxu0 0.0
  %2093 = vmatpush1.msra.mxu0 0.0
  %2094 = vmatprep.subr.mxu0 0.0
  %2095 = vmatpush1.msra.mxu0 0.0
  %2096 = vmatprep.subr.mxu0 0.0
  %2097 = vmatpush1.msra.mxu0 0.0
  %2098 = vmatprep.subr.mxu0 0.0
  %2099 = vmatpush1.msra.mxu0 0.0
  %2100 = vmatprep.subr.mxu0 0.0
  %2101 = vmatpush1.msra.mxu0 0.0
  %2102 = vmatprep.subr.mxu0 0.0
  %2103 = vmatpush1.msra.mxu0 0.0
  %2104 = vmatprep.subr.mxu0 0.0
  %2105 = vmatpush1.msra.mxu0 0.0
  %2106 = vmatprep.subr.mxu0 0.0
  %2107 = vmatpush1.msra.mxu0 0.0
  %2108 = vmatprep.subr.mxu0 0.0
  %2109 = vmatpush1.msra.mxu0 0.0
  %2110 = vmatprep.subr.mxu0 0.0
  %2111 = vmatpush1.msra.mxu0 0.0
  %2112 = vmatprep.subr.mxu0 0.0
  %2113 = vmatpush1.msra.mxu0 0.0
  %2114 = vmatprep.subr.mxu0 0.0
  %2115 = vmatpush1.msra.mxu0 0.0
  %2116 = vmatprep.subr.mxu0 0.0
  %2117 = vmatpush1.msra.mxu0 0.0
  %2118 = vmatprep.subr.mxu0 0.0
  %2119 = vmatpush1.msra.mxu0 0.0
  %2120 = vmatprep.mubr.f32.mxu0 0.0
  %2121 = vmatmul.mubr.f32.gmra.mrb[0].mxu0 %v1841
  %v2122 = vpop.f32.mrb[0].mxu0
  %v2123 = vadd.f32 0.0, %v2122
  %v2124 = vpop.f32.mrb[0].mxu0
  %v2125 = vadd.f32 0.0, %v2124
  %2126 = vdwg.mxu0
  %v2127 = vadd.f32 %v1795, %v1910
  %v2128 = vadd.f32 %v1796, %v1912
  %v2129 = vadd.f32 %v1797, %v1981
  %v2130 = vadd.f32 %v1798, %v1983
  %v2131 = vadd.f32 %v1799, %v2052
  %v2132 = vadd.f32 %v1800, %v2054
  %v2133 = vadd.f32 %v1801, %v2123
  %v2134 = vadd.f32 %v1802, %v2125
  %s2135 = scalar_lea.vmem %s4, 40
  %v2136 = vld [vmem:[%s2135] sm:$0xff]
  %2137 = vrot.lane.b32.xlu0 %v509, 102
  %v2138 = vpop.permute.xlu0 %2137
  %2139 = vrot.lane.b32.xlu0 %v510, 102
  %v2140 = vpop.permute.xlu0 %2139
  %2141 = vrot.lane.b32.xlu0 %v511, 102
  %v2142 = vpop.permute.xlu0 %2141
  %2143 = vrot.lane.b32.xlu0 %v512, 102
  %v2144 = vpop.permute.xlu0 %2143
  %2145 = vrot.lane.b32.xlu0 %v513, 102
  %v2146 = vpop.permute.xlu0 %2145
  %2147 = vrot.lane.b32.xlu0 %v514, 102
  %v2148 = vpop.permute.xlu0 %2147
  %2149 = vrot.lane.b32.xlu0 %v515, 102
  %v2150 = vpop.permute.xlu0 %2149
  %2151 = vrot.lane.b32.xlu0 %v516, 102
  %v2152 = vpop.permute.xlu0 %2151
  %2153 = vrot.lane.b32.xlu0 %v517, 102
  %v2154 = vpop.permute.xlu0 %2153
  %vm2155 = vcmask 834560
  %v2156 = vsel %vm2155, %v2138, %v2140
  %v2157 = vsel %vm2155, %v2140, %v2142
  %v2158 = vsel %vm2155, %v2142, %v2144
  %v2159 = vsel %vm2155, %v2144, %v2146
  %v2160 = vsel %vm2155, %v2146, %v2148
  %v2161 = vsel %vm2155, %v2148, %v2150
  %v2162 = vsel %vm2155, %v2150, %v2152
  %v2163 = vsel %vm2155, %v2152, %v2154
  %v2173 = vsel %vm69, %v2136, 0
  %2175 = vmatprep.subr.mxu0 %v2157
  %2176 = vmatpush1.msra.mxu0 %v2156
  %2177 = vmatprep.subr.mxu0 0.0
  %2178 = vmatpush1.msra.mxu0 0.0
  %2179 = vmatprep.subr.mxu0 0.0
  %2180 = vmatpush1.msra.mxu0 0.0
  %2181 = vmatprep.subr.mxu0 0.0
  %2182 = vmatpush1.msra.mxu0 0.0
  %2183 = vmatprep.subr.mxu0 0.0
  %2184 = vmatpush1.msra.mxu0 0.0
  %2185 = vmatprep.subr.mxu0 0.0
  %2186 = vmatpush1.msra.mxu0 0.0
  %2187 = vmatprep.subr.mxu0 0.0
  %2188 = vmatpush1.msra.mxu0 0.0
  %2189 = vmatprep.subr.mxu0 0.0
  %2190 = vmatpush1.msra.mxu0 0.0
  %2191 = vmatprep.subr.mxu0 0.0
  %2192 = vmatpush1.msra.mxu0 0.0
  %2193 = vmatprep.subr.mxu0 0.0
  %2194 = vmatpush1.msra.mxu0 0.0
  %2195 = vmatprep.subr.mxu0 0.0
  %2196 = vmatpush1.msra.mxu0 0.0
  %2197 = vmatprep.subr.mxu0 0.0
  %2198 = vmatpush1.msra.mxu0 0.0
  %2199 = vmatprep.subr.mxu0 0.0
  %2200 = vmatpush1.msra.mxu0 0.0
  %2201 = vmatprep.subr.mxu0 0.0
  %2202 = vmatpush1.msra.mxu0 0.0
  %2203 = vmatprep.subr.mxu0 0.0
  %2204 = vmatpush1.msra.mxu0 0.0
  %2205 = vmatprep.subr.mxu0 0.0
  %2206 = vmatpush1.msra.mxu0 0.0
  %2207 = vmatprep.subr.mxu0 0.0
  %2208 = vmatpush1.msra.mxu0 0.0
  %2209 = vmatprep.subr.mxu0 0.0
  %2210 = vmatpush1.msra.mxu0 0.0
  %2211 = vmatprep.subr.mxu0 0.0
  %2212 = vmatpush1.msra.mxu0 0.0
  %2213 = vmatprep.subr.mxu0 0.0
  %2214 = vmatpush1.msra.mxu0 0.0
  %2215 = vmatprep.subr.mxu0 0.0
  %2216 = vmatpush1.msra.mxu0 0.0
  %2217 = vmatprep.subr.mxu0 0.0
  %2218 = vmatpush1.msra.mxu0 0.0
  %2219 = vmatprep.subr.mxu0 0.0
  %2220 = vmatpush1.msra.mxu0 0.0
  %2221 = vmatprep.subr.mxu0 0.0
  %2222 = vmatpush1.msra.mxu0 0.0
  %2223 = vmatprep.subr.mxu0 0.0
  %2224 = vmatpush1.msra.mxu0 0.0
  %2225 = vmatprep.subr.mxu0 0.0
  %2226 = vmatpush1.msra.mxu0 0.0
  %2227 = vmatprep.subr.mxu0 0.0
  %2228 = vmatpush1.msra.mxu0 0.0
  %2229 = vmatprep.subr.mxu0 0.0
  %2230 = vmatpush1.msra.mxu0 0.0
  %2231 = vmatprep.subr.mxu0 0.0
  %2232 = vmatpush1.msra.mxu0 0.0
  %2233 = vmatprep.subr.mxu0 0.0
  %2234 = vmatpush1.msra.mxu0 0.0
  %2235 = vmatprep.subr.mxu0 0.0
  %2236 = vmatpush1.msra.mxu0 0.0
  %2237 = vmatprep.subr.mxu0 0.0
  %2238 = vmatpush1.msra.mxu0 0.0
  %2239 = vmatprep.mubr.f32.mxu0 0.0
  %2240 = vmatmul.mubr.f32.gmra.mrb[0].mxu0 %v2173
  %v2241 = vpop.f32.mrb[0].mxu0
  %v2242 = vadd.f32 0.0, %v2241
  %v2243 = vpop.f32.mrb[0].mxu0
  %v2244 = vadd.f32 0.0, %v2243
  %2245 = vdwg.mxu0
  %2246 = vmatprep.subr.mxu0 %v2159
  %2247 = vmatpush1.msra.mxu0 %v2158
  %2248 = vmatprep.subr.mxu0 0.0
  %2249 = vmatpush1.msra.mxu0 0.0
  %2250 = vmatprep.subr.mxu0 0.0
  %2251 = vmatpush1.msra.mxu0 0.0
  %2252 = vmatprep.subr.mxu0 0.0
  %2253 = vmatpush1.msra.mxu0 0.0
  %2254 = vmatprep.subr.mxu0 0.0
  %2255 = vmatpush1.msra.mxu0 0.0
  %2256 = vmatprep.subr.mxu0 0.0
  %2257 = vmatpush1.msra.mxu0 0.0
  %2258 = vmatprep.subr.mxu0 0.0
  %2259 = vmatpush1.msra.mxu0 0.0
  %2260 = vmatprep.subr.mxu0 0.0
  %2261 = vmatpush1.msra.mxu0 0.0
  %2262 = vmatprep.subr.mxu0 0.0
  %2263 = vmatpush1.msra.mxu0 0.0
  %2264 = vmatprep.subr.mxu0 0.0
  %2265 = vmatpush1.msra.mxu0 0.0
  %2266 = vmatprep.subr.mxu0 0.0
  %2267 = vmatpush1.msra.mxu0 0.0
  %2268 = vmatprep.subr.mxu0 0.0
  %2269 = vmatpush1.msra.mxu0 0.0
  %2270 = vmatprep.subr.mxu0 0.0
  %2271 = vmatpush1.msra.mxu0 0.0
  %2272 = vmatprep.subr.mxu0 0.0
  %2273 = vmatpush1.msra.mxu0 0.0
  %2274 = vmatprep.subr.mxu0 0.0
  %2275 = vmatpush1.msra.mxu0 0.0
  %2276 = vmatprep.subr.mxu0 0.0
  %2277 = vmatpush1.msra.mxu0 0.0
  %2278 = vmatprep.subr.mxu0 0.0
  %2279 = vmatpush1.msra.mxu0 0.0
  %2280 = vmatprep.subr.mxu0 0.0
  %2281 = vmatpush1.msra.mxu0 0.0
  %2282 = vmatprep.subr.mxu0 0.0
  %2283 = vmatpush1.msra.mxu0 0.0
  %2284 = vmatprep.subr.mxu0 0.0
  %2285 = vmatpush1.msra.mxu0 0.0
  %2286 = vmatprep.subr.mxu0 0.0
  %2287 = vmatpush1.msra.mxu0 0.0
  %2288 = vmatprep.subr.mxu0 0.0
  %2289 = vmatpush1.msra.mxu0 0.0
  %2290 = vmatprep.subr.mxu0 0.0
  %2291 = vmatpush1.msra.mxu0 0.0
  %2292 = vmatprep.subr.mxu0 0.0
  %2293 = vmatpush1.msra.mxu0 0.0
  %2294 = vmatprep.subr.mxu0 0.0
  %2295 = vmatpush1.msra.mxu0 0.0
  %2296 = vmatprep.subr.mxu0 0.0
  %2297 = vmatpush1.msra.mxu0 0.0
  %2298 = vmatprep.subr.mxu0 0.0
  %2299 = vmatpush1.msra.mxu0 0.0
  %2300 = vmatprep.subr.mxu0 0.0
  %2301 = vmatpush1.msra.mxu0 0.0
  %2302 = vmatprep.subr.mxu0 0.0
  %2303 = vmatpush1.msra.mxu0 0.0
  %2304 = vmatprep.subr.mxu0 0.0
  %2305 = vmatpush1.msra.mxu0 0.0
  %2306 = vmatprep.subr.mxu0 0.0
  %2307 = vmatpush1.msra.mxu0 0.0
  %2308 = vmatprep.subr.mxu0 0.0
  %2309 = vmatpush1.msra.mxu0 0.0
  %2310 = vmatprep.mubr.f32.mxu0 0.0
  %2311 = vmatmul.mubr.f32.gmra.mrb[0].mxu0 %v2173
  %v2312 = vpop.f32.mrb[0].mxu0
  %v2313 = vadd.f32 0.0, %v2312
  %v2314 = vpop.f32.mrb[0].mxu0
  %v2315 = vadd.f32 0.0, %v2314
  %2316 = vdwg.mxu0
  %2317 = vmatprep.subr.mxu0 %v2161
  %2318 = vmatpush1.msra.mxu0 %v2160
  %2319 = vmatprep.subr.mxu0 0.0
  %2320 = vmatpush1.msra.mxu0 0.0
  %2321 = vmatprep.subr.mxu0 0.0
  %2322 = vmatpush1.msra.mxu0 0.0
  %2323 = vmatprep.subr.mxu0 0.0
  %2324 = vmatpush1.msra.mxu0 0.0
  %2325 = vmatprep.subr.mxu0 0.0
  %2326 = vmatpush1.msra.mxu0 0.0
  %2327 = vmatprep.subr.mxu0 0.0
  %2328 = vmatpush1.msra.mxu0 0.0
  %2329 = vmatprep.subr.mxu0 0.0
  %2330 = vmatpush1.msra.mxu0 0.0
  %2331 = vmatprep.subr.mxu0 0.0
  %2332 = vmatpush1.msra.mxu0 0.0
  %2333 = vmatprep.subr.mxu0 0.0
  %2334 = vmatpush1.msra.mxu0 0.0
  %2335 = vmatprep.subr.mxu0 0.0
  %2336 = vmatpush1.msra.mxu0 0.0
  %2337 = vmatprep.subr.mxu0 0.0
  %2338 = vmatpush1.msra.mxu0 0.0
  %2339 = vmatprep.subr.mxu0 0.0
  %2340 = vmatpush1.msra.mxu0 0.0
  %2341 = vmatprep.subr.mxu0 0.0
  %2342 = vmatpush1.msra.mxu0 0.0
  %2343 = vmatprep.subr.mxu0 0.0
  %2344 = vmatpush1.msra.mxu0 0.0
  %2345 = vmatprep.subr.mxu0 0.0
  %2346 = vmatpush1.msra.mxu0 0.0
  %2347 = vmatprep.subr.mxu0 0.0
  %2348 = vmatpush1.msra.mxu0 0.0
  %2349 = vmatprep.subr.mxu0 0.0
  %2350 = vmatpush1.msra.mxu0 0.0
  %2351 = vmatprep.subr.mxu0 0.0
  %2352 = vmatpush1.msra.mxu0 0.0
  %2353 = vmatprep.subr.mxu0 0.0
  %2354 = vmatpush1.msra.mxu0 0.0
  %2355 = vmatprep.subr.mxu0 0.0
  %2356 = vmatpush1.msra.mxu0 0.0
  %2357 = vmatprep.subr.mxu0 0.0
  %2358 = vmatpush1.msra.mxu0 0.0
  %2359 = vmatprep.subr.mxu0 0.0
  %2360 = vmatpush1.msra.mxu0 0.0
  %2361 = vmatprep.subr.mxu0 0.0
  %2362 = vmatpush1.msra.mxu0 0.0
  %2363 = vmatprep.subr.mxu0 0.0
  %2364 = vmatpush1.msra.mxu0 0.0
  %2365 = vmatprep.subr.mxu0 0.0
  %2366 = vmatpush1.msra.mxu0 0.0
  %2367 = vmatprep.subr.mxu0 0.0
  %2368 = vmatpush1.msra.mxu0 0.0
  %2369 = vmatprep.subr.mxu0 0.0
  %2370 = vmatpush1.msra.mxu0 0.0
  %2371 = vmatprep.subr.mxu0 0.0
  %2372 = vmatpush1.msra.mxu0 0.0
  %2373 = vmatprep.subr.mxu0 0.0
  %2374 = vmatpush1.msra.mxu0 0.0
  %2375 = vmatprep.subr.mxu0 0.0
  %2376 = vmatpush1.msra.mxu0 0.0
  %2377 = vmatprep.subr.mxu0 0.0
  %2378 = vmatpush1.msra.mxu0 0.0
  %2379 = vmatprep.subr.mxu0 0.0
  %2380 = vmatpush1.msra.mxu0 0.0
  %2381 = vmatprep.mubr.f32.mxu0 0.0
  %2382 = vmatmul.mubr.f32.gmra.mrb[0].mxu0 %v2173
  %v2383 = vpop.f32.mrb[0].mxu0
  %v2384 = vadd.f32 0.0, %v2383
  %v2385 = vpop.f32.mrb[0].mxu0
  %v2386 = vadd.f32 0.0, %v2385
  %2387 = vdwg.mxu0
  %2388 = vmatprep.subr.mxu0 %v2163
  %2389 = vmatpush1.msra.mxu0 %v2162
  %2390 = vmatprep.subr.mxu0 0.0
  %2391 = vmatpush1.msra.mxu0 0.0
  %2392 = vmatprep.subr.mxu0 0.0
  %2393 = vmatpush1.msra.mxu0 0.0
  %2394 = vmatprep.subr.mxu0 0.0
  %2395 = vmatpush1.msra.mxu0 0.0
  %2396 = vmatprep.subr.mxu0 0.0
  %2397 = vmatpush1.msra.mxu0 0.0
  %2398 = vmatprep.subr.mxu0 0.0
  %2399 = vmatpush1.msra.mxu0 0.0
  %2400 = vmatprep.subr.mxu0 0.0
  %2401 = vmatpush1.msra.mxu0 0.0
  %2402 = vmatprep.subr.mxu0 0.0
  %2403 = vmatpush1.msra.mxu0 0.0
  %2404 = vmatprep.subr.mxu0 0.0
  %2405 = vmatpush1.msra.mxu0 0.0
  %2406 = vmatprep.subr.mxu0 0.0
  %2407 = vmatpush1.msra.mxu0 0.0
  %2408 = vmatprep.subr.mxu0 0.0
  %2409 = vmatpush1.msra.mxu0 0.0
  %2410 = vmatprep.subr.mxu0 0.0
  %2411 = vmatpush1.msra.mxu0 0.0
  %2412 = vmatprep.subr.mxu0 0.0
  %2413 = vmatpush1.msra.mxu0 0.0
  %2414 = vmatprep.subr.mxu0 0.0
  %2415 = vmatpush1.msra.mxu0 0.0
  %2416 = vmatprep.subr.mxu0 0.0
  %2417 = vmatpush1.msra.mxu0 0.0
  %2418 = vmatprep.subr.mxu0 0.0
  %2419 = vmatpush1.msra.mxu0 0.0
  %2420 = vmatprep.subr.mxu0 0.0
  %2421 = vmatpush1.msra.mxu0 0.0
  %2422 = vmatprep.subr.mxu0 0.0
  %2423 = vmatpush1.msra.mxu0 0.0
  %2424 = vmatprep.subr.mxu0 0.0
  %2425 = vmatpush1.msra.mxu0 0.0
  %2426 = vmatprep.subr.mxu0 0.0
  %2427 = vmatpush1.msra.mxu0 0.0
  %2428 = vmatprep.subr.mxu0 0.0
  %2429 = vmatpush1.msra.mxu0 0.0
  %2430 = vmatprep.subr.mxu0 0.0
  %2431 = vmatpush1.msra.mxu0 0.0
  %2432 = vmatprep.subr.mxu0 0.0
  %2433 = vmatpush1.msra.mxu0 0.0
  %2434 = vmatprep.subr.mxu0 0.0
  %2435 = vmatpush1.msra.mxu0 0.0
  %2436 = vmatprep.subr.mxu0 0.0
  %2437 = vmatpush1.msra.mxu0 0.0
  %2438 = vmatprep.subr.mxu0 0.0
  %2439 = vmatpush1.msra.mxu0 0.0
  %2440 = vmatprep.subr.mxu0 0.0
  %2441 = vmatpush1.msra.mxu0 0.0
  %2442 = vmatprep.subr.mxu0 0.0
  %2443 = vmatpush1.msra.mxu0 0.0
  %2444 = vmatprep.subr.mxu0 0.0
  %2445 = vmatpush1.msra.mxu0 0.0
  %2446 = vmatprep.subr.mxu0 0.0
  %2447 = vmatpush1.msra.mxu0 0.0
  %2448 = vmatprep.subr.mxu0 0.0
  %2449 = vmatpush1.msra.mxu0 0.0
  %2450 = vmatprep.subr.mxu0 0.0
  %2451 = vmatpush1.msra.mxu0 0.0
  %2452 = vmatprep.mubr.f32.mxu0 0.0
  %2453 = vmatmul.mubr.f32.gmra.mrb[0].mxu0 %v2173
  %v2454 = vpop.f32.mrb[0].mxu0
  %v2455 = vadd.f32 0.0, %v2454
  %v2456 = vpop.f32.mrb[0].mxu0
  %v2457 = vadd.f32 0.0, %v2456
  %2458 = vdwg.mxu0
  %v2459 = vadd.f32 %v2127, %v2242
  %v2460 = vadd.f32 %v2128, %v2244
  %v2461 = vadd.f32 %v2129, %v2313
  %v2462 = vadd.f32 %v2130, %v2315
  %v2463 = vadd.f32 %v2131, %v2384
  %v2464 = vadd.f32 %v2132, %v2386
  %v2465 = vadd.f32 %v2133, %v2455
  %v2466 = vadd.f32 %v2134, %v2457
  %s2467 = scalar_lea.vmem %s4, 48
  %v2468 = vld [vmem:[%s2467] sm:$0xff]
  %2469 = vrot.lane.b32.xlu0 %v509, 80
  %v2470 = vpop.permute.xlu0 %2469
  %2471 = vrot.lane.b32.xlu0 %v510, 80
  %v2472 = vpop.permute.xlu0 %2471
  %2473 = vrot.lane.b32.xlu0 %v511, 80
  %v2474 = vpop.permute.xlu0 %2473
  %2475 = vrot.lane.b32.xlu0 %v512, 80
  %v2476 = vpop.permute.xlu0 %2475
  %2477 = vrot.lane.b32.xlu0 %v513, 80
  %v2478 = vpop.permute.xlu0 %2477
  %2479 = vrot.lane.b32.xlu0 %v514, 80
  %v2480 = vpop.permute.xlu0 %2479
  %2481 = vrot.lane.b32.xlu0 %v515, 80
  %v2482 = vpop.permute.xlu0 %2481
  %2483 = vrot.lane.b32.xlu0 %v516, 80
  %v2484 = vpop.permute.xlu0 %2483
  %2485 = vrot.lane.b32.xlu0 %v517, 80
  %v2486 = vpop.permute.xlu0 %2485
  %vm2487 = vcmask 654336
  %v2488 = vsel %vm2487, %v2470, %v2472
  %v2489 = vsel %vm2487, %v2472, %v2474
  %v2490 = vsel %vm2487, %v2474, %v2476
  %v2491 = vsel %vm2487, %v2476, %v2478
  %v2492 = vsel %vm2487, %v2478, %v2480
  %v2493 = vsel %vm2487, %v2480, %v2482
  %v2494 = vsel %vm2487, %v2482, %v2484
  %v2495 = vsel %vm2487, %v2484, %v2486
  %v2505 = vsel %vm69, %v2468, 0
  %2507 = vmatprep.subr.mxu0 %v2489
  %2508 = vmatpush1.msra.mxu0 %v2488
  %2509 = vmatprep.subr.mxu0 0.0
  %2510 = vmatpush1.msra.mxu0 0.0
  %2511 = vmatprep.subr.mxu0 0.0
  %2512 = vmatpush1.msra.mxu0 0.0
  %2513 = vmatprep.subr.mxu0 0.0
  %2514 = vmatpush1.msra.mxu0 0.0
  %2515 = vmatprep.subr.mxu0 0.0
  %2516 = vmatpush1.msra.mxu0 0.0
  %2517 = vmatprep.subr.mxu0 0.0
  %2518 = vmatpush1.msra.mxu0 0.0
  %2519 = vmatprep.subr.mxu0 0.0
  %2520 = vmatpush1.msra.mxu0 0.0
  %2521 = vmatprep.subr.mxu0 0.0
  %2522 = vmatpush1.msra.mxu0 0.0
  %2523 = vmatprep.subr.mxu0 0.0
  %2524 = vmatpush1.msra.mxu0 0.0
  %2525 = vmatprep.subr.mxu0 0.0
  %2526 = vmatpush1.msra.mxu0 0.0
  %2527 = vmatprep.subr.mxu0 0.0
  %2528 = vmatpush1.msra.mxu0 0.0
  %2529 = vmatprep.subr.mxu0 0.0
  %2530 = vmatpush1.msra.mxu0 0.0
  %2531 = vmatprep.subr.mxu0 0.0
  %2532 = vmatpush1.msra.mxu0 0.0
  %2533 = vmatprep.subr.mxu0 0.0
  %2534 = vmatpush1.msra.mxu0 0.0
  %2535 = vmatprep.subr.mxu0 0.0
  %2536 = vmatpush1.msra.mxu0 0.0
  %2537 = vmatprep.subr.mxu0 0.0
  %2538 = vmatpush1.msra.mxu0 0.0
  %2539 = vmatprep.subr.mxu0 0.0
  %2540 = vmatpush1.msra.mxu0 0.0
  %2541 = vmatprep.subr.mxu0 0.0
  %2542 = vmatpush1.msra.mxu0 0.0
  %2543 = vmatprep.subr.mxu0 0.0
  %2544 = vmatpush1.msra.mxu0 0.0
  %2545 = vmatprep.subr.mxu0 0.0
  %2546 = vmatpush1.msra.mxu0 0.0
  %2547 = vmatprep.subr.mxu0 0.0
  %2548 = vmatpush1.msra.mxu0 0.0
  %2549 = vmatprep.subr.mxu0 0.0
  %2550 = vmatpush1.msra.mxu0 0.0
  %2551 = vmatprep.subr.mxu0 0.0
  %2552 = vmatpush1.msra.mxu0 0.0
  %2553 = vmatprep.subr.mxu0 0.0
  %2554 = vmatpush1.msra.mxu0 0.0
  %2555 = vmatprep.subr.mxu0 0.0
  %2556 = vmatpush1.msra.mxu0 0.0
  %2557 = vmatprep.subr.mxu0 0.0
  %2558 = vmatpush1.msra.mxu0 0.0
  %2559 = vmatprep.subr.mxu0 0.0
  %2560 = vmatpush1.msra.mxu0 0.0
  %2561 = vmatprep.subr.mxu0 0.0
  %2562 = vmatpush1.msra.mxu0 0.0
  %2563 = vmatprep.subr.mxu0 0.0
  %2564 = vmatpush1.msra.mxu0 0.0
  %2565 = vmatprep.subr.mxu0 0.0
  %2566 = vmatpush1.msra.mxu0 0.0
  %2567 = vmatprep.subr.mxu0 0.0
  %2568 = vmatpush1.msra.mxu0 0.0
  %2569 = vmatprep.subr.mxu0 0.0
  %2570 = vmatpush1.msra.mxu0 0.0
  %2571 = vmatprep.mubr.f32.mxu0 0.0
  %2572 = vmatmul.mubr.f32.gmra.mrb[0].mxu0 %v2505
  %v2573 = vpop.f32.mrb[0].mxu0
  %v2574 = vadd.f32 0.0, %v2573
  %v2575 = vpop.f32.mrb[0].mxu0
  %v2576 = vadd.f32 0.0, %v2575
  %2577 = vdwg.mxu0
  %2578 = vmatprep.subr.mxu0 %v2491
  %2579 = vmatpush1.msra.mxu0 %v2490
  %2580 = vmatprep.subr.mxu0 0.0
  %2581 = vmatpush1.msra.mxu0 0.0
  %2582 = vmatprep.subr.mxu0 0.0
  %2583 = vmatpush1.msra.mxu0 0.0
  %2584 = vmatprep.subr.mxu0 0.0
  %2585 = vmatpush1.msra.mxu0 0.0
  %2586 = vmatprep.subr.mxu0 0.0
  %2587 = vmatpush1.msra.mxu0 0.0
  %2588 = vmatprep.subr.mxu0 0.0
  %2589 = vmatpush1.msra.mxu0 0.0
  %2590 = vmatprep.subr.mxu0 0.0
  %2591 = vmatpush1.msra.mxu0 0.0
  %2592 = vmatprep.subr.mxu0 0.0
  %2593 = vmatpush1.msra.mxu0 0.0
  %2594 = vmatprep.subr.mxu0 0.0
  %2595 = vmatpush1.msra.mxu0 0.0
  %2596 = vmatprep.subr.mxu0 0.0
  %2597 = vmatpush1.msra.mxu0 0.0
  %2598 = vmatprep.subr.mxu0 0.0
  %2599 = vmatpush1.msra.mxu0 0.0
  %2600 = vmatprep.subr.mxu0 0.0
  %2601 = vmatpush1.msra.mxu0 0.0
  %2602 = vmatprep.subr.mxu0 0.0
  %2603 = vmatpush1.msra.mxu0 0.0
  %2604 = vmatprep.subr.mxu0 0.0
  %2605 = vmatpush1.msra.mxu0 0.0
  %2606 = vmatprep.subr.mxu0 0.0
  %2607 = vmatpush1.msra.mxu0 0.0
  %2608 = vmatprep.subr.mxu0 0.0
  %2609 = vmatpush1.msra.mxu0 0.0
  %2610 = vmatprep.subr.mxu0 0.0
  %2611 = vmatpush1.msra.mxu0 0.0
  %2612 = vmatprep.subr.mxu0 0.0
  %2613 = vmatpush1.msra.mxu0 0.0
  %2614 = vmatprep.subr.mxu0 0.0
  %2615 = vmatpush1.msra.mxu0 0.0
  %2616 = vmatprep.subr.mxu0 0.0
  %2617 = vmatpush1.msra.mxu0 0.0
  %2618 = vmatprep.subr.mxu0 0.0
  %2619 = vmatpush1.msra.mxu0 0.0
  %2620 = vmatprep.subr.mxu0 0.0
  %2621 = vmatpush1.msra.mxu0 0.0
  %2622 = vmatprep.subr.mxu0 0.0
  %2623 = vmatpush1.msra.mxu0 0.0
  %2624 = vmatprep.subr.mxu0 0.0
  %2625 = vmatpush1.msra.mxu0 0.0
  %2626 = vmatprep.subr.mxu0 0.0
  %2627 = vmatpush1.msra.mxu0 0.0
  %2628 = vmatprep.subr.mxu0 0.0
  %2629 = vmatpush1.msra.mxu0 0.0
  %2630 = vmatprep.subr.mxu0 0.0
  %2631 = vmatpush1.msra.mxu0 0.0
  %2632 = vmatprep.subr.mxu0 0.0
  %2633 = vmatpush1.msra.mxu0 0.0
  %2634 = vmatprep.subr.mxu0 0.0
  %2635 = vmatpush1.msra.mxu0 0.0
  %2636 = vmatprep.subr.mxu0 0.0
  %2637 = vmatpush1.msra.mxu0 0.0
  %2638 = vmatprep.subr.mxu0 0.0
  %2639 = vmatpush1.msra.mxu0 0.0
  %2640 = vmatprep.subr.mxu0 0.0
  %2641 = vmatpush1.msra.mxu0 0.0
  %2642 = vmatprep.mubr.f32.mxu0 0.0
  %2643 = vmatmul.mubr.f32.gmra.mrb[0].mxu0 %v2505
  %v2644 = vpop.f32.mrb[0].mxu0
  %v2645 = vadd.f32 0.0, %v2644
  %v2646 = vpop.f32.mrb[0].mxu0
  %v2647 = vadd.f32 0.0, %v2646
  %2648 = vdwg.mxu0
  %2649 = vmatprep.subr.mxu0 %v2493
  %2650 = vmatpush1.msra.mxu0 %v2492
  %2651 = vmatprep.subr.mxu0 0.0
  %2652 = vmatpush1.msra.mxu0 0.0
  %2653 = vmatprep.subr.mxu0 0.0
  %2654 = vmatpush1.msra.mxu0 0.0
  %2655 = vmatprep.subr.mxu0 0.0
  %2656 = vmatpush1.msra.mxu0 0.0
  %2657 = vmatprep.subr.mxu0 0.0
  %2658 = vmatpush1.msra.mxu0 0.0
  %2659 = vmatprep.subr.mxu0 0.0
  %2660 = vmatpush1.msra.mxu0 0.0
  %2661 = vmatprep.subr.mxu0 0.0
  %2662 = vmatpush1.msra.mxu0 0.0
  %2663 = vmatprep.subr.mxu0 0.0
  %2664 = vmatpush1.msra.mxu0 0.0
  %2665 = vmatprep.subr.mxu0 0.0
  %2666 = vmatpush1.msra.mxu0 0.0
  %2667 = vmatprep.subr.mxu0 0.0
  %2668 = vmatpush1.msra.mxu0 0.0
  %2669 = vmatprep.subr.mxu0 0.0
  %2670 = vmatpush1.msra.mxu0 0.0
  %2671 = vmatprep.subr.mxu0 0.0
  %2672 = vmatpush1.msra.mxu0 0.0
  %2673 = vmatprep.subr.mxu0 0.0
  %2674 = vmatpush1.msra.mxu0 0.0
  %2675 = vmatprep.subr.mxu0 0.0
  %2676 = vmatpush1.msra.mxu0 0.0
  %2677 = vmatprep.subr.mxu0 0.0
  %2678 = vmatpush1.msra.mxu0 0.0
  %2679 = vmatprep.subr.mxu0 0.0
  %2680 = vmatpush1.msra.mxu0 0.0
  %2681 = vmatprep.subr.mxu0 0.0
  %2682 = vmatpush1.msra.mxu0 0.0
  %2683 = vmatprep.subr.mxu0 0.0
  %2684 = vmatpush1.msra.mxu0 0.0
  %2685 = vmatprep.subr.mxu0 0.0
  %2686 = vmatpush1.msra.mxu0 0.0
  %2687 = vmatprep.subr.mxu0 0.0
  %2688 = vmatpush1.msra.mxu0 0.0
  %2689 = vmatprep.subr.mxu0 0.0
  %2690 = vmatpush1.msra.mxu0 0.0
  %2691 = vmatprep.subr.mxu0 0.0
  %2692 = vmatpush1.msra.mxu0 0.0
  %2693 = vmatprep.subr.mxu0 0.0
  %2694 = vmatpush1.msra.mxu0 0.0
  %2695 = vmatprep.subr.mxu0 0.0
  %2696 = vmatpush1.msra.mxu0 0.0
  %2697 = vmatprep.subr.mxu0 0.0
  %2698 = vmatpush1.msra.mxu0 0.0
  %2699 = vmatprep.subr.mxu0 0.0
  %2700 = vmatpush1.msra.mxu0 0.0
  %2701 = vmatprep.subr.mxu0 0.0
  %2702 = vmatpush1.msra.mxu0 0.0
  %2703 = vmatprep.subr.mxu0 0.0
  %2704 = vmatpush1.msra.mxu0 0.0
  %2705 = vmatprep.subr.mxu0 0.0
  %2706 = vmatpush1.msra.mxu0 0.0
  %2707 = vmatprep.subr.mxu0 0.0
  %2708 = vmatpush1.msra.mxu0 0.0
  %2709 = vmatprep.subr.mxu0 0.0
  %2710 = vmatpush1.msra.mxu0 0.0
  %2711 = vmatprep.subr.mxu0 0.0
  %2712 = vmatpush1.msra.mxu0 0.0
  %2713 = vmatprep.mubr.f32.mxu0 0.0
  %2714 = vmatmul.mubr.f32.gmra.mrb[0].mxu0 %v2505
  %v2715 = vpop.f32.mrb[0].mxu0
  %v2716 = vadd.f32 0.0, %v2715
  %v2717 = vpop.f32.mrb[0].mxu0
  %v2718 = vadd.f32 0.0, %v2717
  %2719 = vdwg.mxu0
  %2720 = vmatprep.subr.mxu0 %v2495
  %2721 = vmatpush1.msra.mxu0 %v2494
  %2722 = vmatprep.subr.mxu0 0.0
  %2723 = vmatpush1.msra.mxu0 0.0
  %2724 = vmatprep.subr.mxu0 0.0
  %2725 = vmatpush1.msra.mxu0 0.0
  %2726 = vmatprep.subr.mxu0 0.0
  %2727 = vmatpush1.msra.mxu0 0.0
  %2728 = vmatprep.subr.mxu0 0.0
  %2729 = vmatpush1.msra.mxu0 0.0
  %2730 = vmatprep.subr.mxu0 0.0
  %2731 = vmatpush1.msra.mxu0 0.0
  %2732 = vmatprep.subr.mxu0 0.0
  %2733 = vmatpush1.msra.mxu0 0.0
  %2734 = vmatprep.subr.mxu0 0.0
  %2735 = vmatpush1.msra.mxu0 0.0
  %2736 = vmatprep.subr.mxu0 0.0
  %2737 = vmatpush1.msra.mxu0 0.0
  %2738 = vmatprep.subr.mxu0 0.0
  %2739 = vmatpush1.msra.mxu0 0.0
  %2740 = vmatprep.subr.mxu0 0.0
  %2741 = vmatpush1.msra.mxu0 0.0
  %2742 = vmatprep.subr.mxu0 0.0
  %2743 = vmatpush1.msra.mxu0 0.0
  %2744 = vmatprep.subr.mxu0 0.0
  %2745 = vmatpush1.msra.mxu0 0.0
  %2746 = vmatprep.subr.mxu0 0.0
  %2747 = vmatpush1.msra.mxu0 0.0
  %2748 = vmatprep.subr.mxu0 0.0
  %2749 = vmatpush1.msra.mxu0 0.0
  %2750 = vmatprep.subr.mxu0 0.0
  %2751 = vmatpush1.msra.mxu0 0.0
  %2752 = vmatprep.subr.mxu0 0.0
  %2753 = vmatpush1.msra.mxu0 0.0
  %2754 = vmatprep.subr.mxu0 0.0
  %2755 = vmatpush1.msra.mxu0 0.0
  %2756 = vmatprep.subr.mxu0 0.0
  %2757 = vmatpush1.msra.mxu0 0.0
  %2758 = vmatprep.subr.mxu0 0.0
  %2759 = vmatpush1.msra.mxu0 0.0
  %2760 = vmatprep.subr.mxu0 0.0
  %2761 = vmatpush1.msra.mxu0 0.0
  %2762 = vmatprep.subr.mxu0 0.0
  %2763 = vmatpush1.msra.mxu0 0.0
  %2764 = vmatprep.subr.mxu0 0.0
  %2765 = vmatpush1.msra.mxu0 0.0
  %2766 = vmatprep.subr.mxu0 0.0
  %2767 = vmatpush1.msra.mxu0 0.0
  %2768 = vmatprep.subr.mxu0 0.0
  %2769 = vmatpush1.msra.mxu0 0.0
  %2770 = vmatprep.subr.mxu0 0.0
  %2771 = vmatpush1.msra.mxu0 0.0
  %2772 = vmatprep.subr.mxu0 0.0
  %2773 = vmatpush1.msra.mxu0 0.0
  %2774 = vmatprep.subr.mxu0 0.0
  %2775 = vmatpush1.msra.mxu0 0.0
  %2776 = vmatprep.subr.mxu0 0.0
  %2777 = vmatpush1.msra.mxu0 0.0
  %2778 = vmatprep.subr.mxu0 0.0
  %2779 = vmatpush1.msra.mxu0 0.0
  %2780 = vmatprep.subr.mxu0 0.0
  %2781 = vmatpush1.msra.mxu0 0.0
  %2782 = vmatprep.subr.mxu0 0.0
  %2783 = vmatpush1.msra.mxu0 0.0
  %2784 = vmatprep.mubr.f32.mxu0 0.0
  %2785 = vmatmul.mubr.f32.gmra.mrb[0].mxu0 %v2505
  %v2786 = vpop.f32.mrb[0].mxu0
  %v2787 = vadd.f32 0.0, %v2786
  %v2788 = vpop.f32.mrb[0].mxu0
  %v2789 = vadd.f32 0.0, %v2788
  %2790 = vdwg.mxu0
  %v2791 = vadd.f32 %v2459, %v2574
  %v2792 = vadd.f32 %v2460, %v2576
  %v2793 = vadd.f32 %v2461, %v2645
  %v2794 = vadd.f32 %v2462, %v2647
  %v2795 = vadd.f32 %v2463, %v2716
  %v2796 = vadd.f32 %v2464, %v2718
  %v2797 = vadd.f32 %v2465, %v2787
  %v2798 = vadd.f32 %v2466, %v2789
  %s2799 = scalar_lea.vmem %s4, 56
  %v2800 = vld [vmem:[%s2799] sm:$0xff]
  %2801 = vrot.lane.b32.xlu0 %v509, 79
  %v2802 = vpop.permute.xlu0 %2801
  %2803 = vrot.lane.b32.xlu0 %v510, 79
  %v2804 = vpop.permute.xlu0 %2803
  %2805 = vrot.lane.b32.xlu0 %v511, 79
  %v2806 = vpop.permute.xlu0 %2805
  %2807 = vrot.lane.b32.xlu0 %v512, 79
  %v2808 = vpop.permute.xlu0 %2807
  %2809 = vrot.lane.b32.xlu0 %v513, 79
  %v2810 = vpop.permute.xlu0 %2809
  %2811 = vrot.lane.b32.xlu0 %v514, 79
  %v2812 = vpop.permute.xlu0 %2811
  %2813 = vrot.lane.b32.xlu0 %v515, 79
  %v2814 = vpop.permute.xlu0 %2813
  %2815 = vrot.lane.b32.xlu0 %v516, 79
  %v2816 = vpop.permute.xlu0 %2815
  %2817 = vrot.lane.b32.xlu0 %v517, 79
  %v2818 = vpop.permute.xlu0 %2817
  %vm2819 = vcmask 646144
  %v2820 = vsel %vm2819, %v2802, %v2804
  %v2821 = vsel %vm2819, %v2804, %v2806
  %v2822 = vsel %vm2819, %v2806, %v2808
  %v2823 = vsel %vm2819, %v2808, %v2810
  %v2824 = vsel %vm2819, %v2810, %v2812
  %v2825 = vsel %vm2819, %v2812, %v2814
  %v2826 = vsel %vm2819, %v2814, %v2816
  %v2827 = vsel %vm2819, %v2816, %v2818
  %v2837 = vsel %vm69, %v2800, 0
  %2839 = vmatprep.subr.mxu0 %v2821
  %2840 = vmatpush1.msra.mxu0 %v2820
  %2841 = vmatprep.subr.mxu0 0.0
  %2842 = vmatpush1.msra.mxu0 0.0
  %2843 = vmatprep.subr.mxu0 0.0
  %2844 = vmatpush1.msra.mxu0 0.0
  %2845 = vmatprep.subr.mxu0 0.0
  %2846 = vmatpush1.msra.mxu0 0.0
  %2847 = vmatprep.subr.mxu0 0.0
  %2848 = vmatpush1.msra.mxu0 0.0
  %2849 = vmatprep.subr.mxu0 0.0
  %2850 = vmatpush1.msra.mxu0 0.0
  %2851 = vmatprep.subr.mxu0 0.0
  %2852 = vmatpush1.msra.mxu0 0.0
  %2853 = vmatprep.subr.mxu0 0.0
  %2854 = vmatpush1.msra.mxu0 0.0
  %2855 = vmatprep.subr.mxu0 0.0
  %2856 = vmatpush1.msra.mxu0 0.0
  %2857 = vmatprep.subr.mxu0 0.0
  %2858 = vmatpush1.msra.mxu0 0.0
  %2859 = vmatprep.subr.mxu0 0.0
  %2860 = vmatpush1.msra.mxu0 0.0
  %2861 = vmatprep.subr.mxu0 0.0
  %2862 = vmatpush1.msra.mxu0 0.0
  %2863 = vmatprep.subr.mxu0 0.0
  %2864 = vmatpush1.msra.mxu0 0.0
  %2865 = vmatprep.subr.mxu0 0.0
  %2866 = vmatpush1.msra.mxu0 0.0
  %2867 = vmatprep.subr.mxu0 0.0
  %2868 = vmatpush1.msra.mxu0 0.0
  %2869 = vmatprep.subr.mxu0 0.0
  %2870 = vmatpush1.msra.mxu0 0.0
  %2871 = vmatprep.subr.mxu0 0.0
  %2872 = vmatpush1.msra.mxu0 0.0
  %2873 = vmatprep.subr.mxu0 0.0
  %2874 = vmatpush1.msra.mxu0 0.0
  %2875 = vmatprep.subr.mxu0 0.0
  %2876 = vmatpush1.msra.mxu0 0.0
  %2877 = vmatprep.subr.mxu0 0.0
  %2878 = vmatpush1.msra.mxu0 0.0
  %2879 = vmatprep.subr.mxu0 0.0
  %2880 = vmatpush1.msra.mxu0 0.0
  %2881 = vmatprep.subr.mxu0 0.0
  %2882 = vmatpush1.msra.mxu0 0.0
  %2883 = vmatprep.subr.mxu0 0.0
  %2884 = vmatpush1.msra.mxu0 0.0
  %2885 = vmatprep.subr.mxu0 0.0
  %2886 = vmatpush1.msra.mxu0 0.0
  %2887 = vmatprep.subr.mxu0 0.0
  %2888 = vmatpush1.msra.mxu0 0.0
  %2889 = vmatprep.subr.mxu0 0.0
  %2890 = vmatpush1.msra.mxu0 0.0
  %2891 = vmatprep.subr.mxu0 0.0
  %2892 = vmatpush1.msra.mxu0 0.0
  %2893 = vmatprep.subr.mxu0 0.0
  %2894 = vmatpush1.msra.mxu0 0.0
  %2895 = vmatprep.subr.mxu0 0.0
  %2896 = vmatpush1.msra.mxu0 0.0
  %2897 = vmatprep.subr.mxu0 0.0
  %2898 = vmatpush1.msra.mxu0 0.0
  %2899 = vmatprep.subr.mxu0 0.0
  %2900 = vmatpush1.msra.mxu0 0.0
  %2901 = vmatprep.subr.mxu0 0.0
  %2902 = vmatpush1.msra.mxu0 0.0
  %2903 = vmatprep.mubr.f32.mxu0 0.0
  %2904 = vmatmul.mubr.f32.gmra.mrb[0].mxu0 %v2837
  %v2905 = vpop.f32.mrb[0].mxu0
  %v2906 = vadd.f32 0.0, %v2905
  %v2907 = vpop.f32.mrb[0].mxu0
  %v2908 = vadd.f32 0.0, %v2907
  %2909 = vdwg.mxu0
  %2910 = vmatprep.subr.mxu0 %v2823
  %2911 = vmatpush1.msra.mxu0 %v2822
  %2912 = vmatprep.subr.mxu0 0.0
  %2913 = vmatpush1.msra.mxu0 0.0
  %2914 = vmatprep.subr.mxu0 0.0
  %2915 = vmatpush1.msra.mxu0 0.0
  %2916 = vmatprep.subr.mxu0 0.0
  %2917 = vmatpush1.msra.mxu0 0.0
  %2918 = vmatprep.subr.mxu0 0.0
  %2919 = vmatpush1.msra.mxu0 0.0
  %2920 = vmatprep.subr.mxu0 0.0
  %2921 = vmatpush1.msra.mxu0 0.0
  %2922 = vmatprep.subr.mxu0 0.0
  %2923 = vmatpush1.msra.mxu0 0.0
  %2924 = vmatprep.subr.mxu0 0.0
  %2925 = vmatpush1.msra.mxu0 0.0
  %2926 = vmatprep.subr.mxu0 0.0
  %2927 = vmatpush1.msra.mxu0 0.0
  %2928 = vmatprep.subr.mxu0 0.0
  %2929 = vmatpush1.msra.mxu0 0.0
  %2930 = vmatprep.subr.mxu0 0.0
  %2931 = vmatpush1.msra.mxu0 0.0
  %2932 = vmatprep.subr.mxu0 0.0
  %2933 = vmatpush1.msra.mxu0 0.0
  %2934 = vmatprep.subr.mxu0 0.0
  %2935 = vmatpush1.msra.mxu0 0.0
  %2936 = vmatprep.subr.mxu0 0.0
  %2937 = vmatpush1.msra.mxu0 0.0
  %2938 = vmatprep.subr.mxu0 0.0
  %2939 = vmatpush1.msra.mxu0 0.0
  %2940 = vmatprep.subr.mxu0 0.0
  %2941 = vmatpush1.msra.mxu0 0.0
  %2942 = vmatprep.subr.mxu0 0.0
  %2943 = vmatpush1.msra.mxu0 0.0
  %2944 = vmatprep.subr.mxu0 0.0
  %2945 = vmatpush1.msra.mxu0 0.0
  %2946 = vmatprep.subr.mxu0 0.0
  %2947 = vmatpush1.msra.mxu0 0.0
  %2948 = vmatprep.subr.mxu0 0.0
  %2949 = vmatpush1.msra.mxu0 0.0
  %2950 = vmatprep.subr.mxu0 0.0
  %2951 = vmatpush1.msra.mxu0 0.0
  %2952 = vmatprep.subr.mxu0 0.0
  %2953 = vmatpush1.msra.mxu0 0.0
  %2954 = vmatprep.subr.mxu0 0.0
  %2955 = vmatpush1.msra.mxu0 0.0
  %2956 = vmatprep.subr.mxu0 0.0
  %2957 = vmatpush1.msra.mxu0 0.0
  %2958 = vmatprep.subr.mxu0 0.0
  %2959 = vmatpush1.msra.mxu0 0.0
  %2960 = vmatprep.subr.mxu0 0.0
  %2961 = vmatpush1.msra.mxu0 0.0
  %2962 = vmatprep.subr.mxu0 0.0
  %2963 = vmatpush1.msra.mxu0 0.0
  %2964 = vmatprep.subr.mxu0 0.0
  %2965 = vmatpush1.msra.mxu0 0.0
  %2966 = vmatprep.subr.mxu0 0.0
  %2967 = vmatpush1.msra.mxu0 0.0
  %2968 = vmatprep.subr.mxu0 0.0
  %2969 = vmatpush1.msra.mxu0 0.0
  %2970 = vmatprep.subr.mxu0 0.0
  %2971 = vmatpush1.msra.mxu0 0.0
  %2972 = vmatprep.subr.mxu0 0.0
  %2973 = vmatpush1.msra.mxu0 0.0
  %2974 = vmatprep.mubr.f32.mxu0 0.0
  %2975 = vmatmul.mubr.f32.gmra.mrb[0].mxu0 %v2837
  %v2976 = vpop.f32.mrb[0].mxu0
  %v2977 = vadd.f32 0.0, %v2976
  %v2978 = vpop.f32.mrb[0].mxu0
  %v2979 = vadd.f32 0.0, %v2978
  %2980 = vdwg.mxu0
  %2981 = vmatprep.subr.mxu0 %v2825
  %2982 = vmatpush1.msra.mxu0 %v2824
  %2983 = vmatprep.subr.mxu0 0.0
  %2984 = vmatpush1.msra.mxu0 0.0
  %2985 = vmatprep.subr.mxu0 0.0
  %2986 = vmatpush1.msra.mxu0 0.0
  %2987 = vmatprep.subr.mxu0 0.0
  %2988 = vmatpush1.msra.mxu0 0.0
  %2989 = vmatprep.subr.mxu0 0.0
  %2990 = vmatpush1.msra.mxu0 0.0
  %2991 = vmatprep.subr.mxu0 0.0
  %2992 = vmatpush1.msra.mxu0 0.0
  %2993 = vmatprep.subr.mxu0 0.0
  %2994 = vmatpush1.msra.mxu0 0.0
  %2995 = vmatprep.subr.mxu0 0.0
  %2996 = vmatpush1.msra.mxu0 0.0
  %2997 = vmatprep.subr.mxu0 0.0
  %2998 = vmatpush1.msra.mxu0 0.0
  %2999 = vmatprep.subr.mxu0 0.0
  %3000 = vmatpush1.msra.mxu0 0.0
  %3001 = vmatprep.subr.mxu0 0.0
  %3002 = vmatpush1.msra.mxu0 0.0
  %3003 = vmatprep.subr.mxu0 0.0
  %3004 = vmatpush1.msra.mxu0 0.0
  %3005 = vmatprep.subr.mxu0 0.0
  %3006 = vmatpush1.msra.mxu0 0.0
  %3007 = vmatprep.subr.mxu0 0.0
  %3008 = vmatpush1.msra.mxu0 0.0
  %3009 = vmatprep.subr.mxu0 0.0
  %3010 = vmatpush1.msra.mxu0 0.0
  %3011 = vmatprep.subr.mxu0 0.0
  %3012 = vmatpush1.msra.mxu0 0.0
  %3013 = vmatprep.subr.mxu0 0.0
  %3014 = vmatpush1.msra.mxu0 0.0
  %3015 = vmatprep.subr.mxu0 0.0
  %3016 = vmatpush1.msra.mxu0 0.0
  %3017 = vmatprep.subr.mxu0 0.0
  %3018 = vmatpush1.msra.mxu0 0.0
  %3019 = vmatprep.subr.mxu0 0.0
  %3020 = vmatpush1.msra.mxu0 0.0
  %3021 = vmatprep.subr.mxu0 0.0
  %3022 = vmatpush1.msra.mxu0 0.0
  %3023 = vmatprep.subr.mxu0 0.0
  %3024 = vmatpush1.msra.mxu0 0.0
  %3025 = vmatprep.subr.mxu0 0.0
  %3026 = vmatpush1.msra.mxu0 0.0
  %3027 = vmatprep.subr.mxu0 0.0
  %3028 = vmatpush1.msra.mxu0 0.0
  %3029 = vmatprep.subr.mxu0 0.0
  %3030 = vmatpush1.msra.mxu0 0.0
  %3031 = vmatprep.subr.mxu0 0.0
  %3032 = vmatpush1.msra.mxu0 0.0
  %3033 = vmatprep.subr.mxu0 0.0
  %3034 = vmatpush1.msra.mxu0 0.0
  %3035 = vmatprep.subr.mxu0 0.0
  %3036 = vmatpush1.msra.mxu0 0.0
  %3037 = vmatprep.subr.mxu0 0.0
  %3038 = vmatpush1.msra.mxu0 0.0
  %3039 = vmatprep.subr.mxu0 0.0
  %3040 = vmatpush1.msra.mxu0 0.0
  %3041 = vmatprep.subr.mxu0 0.0
  %3042 = vmatpush1.msra.mxu0 0.0
  %3043 = vmatprep.subr.mxu0 0.0
  %3044 = vmatpush1.msra.mxu0 0.0
  %3045 = vmatprep.mubr.f32.mxu0 0.0
  %3046 = vmatmul.mubr.f32.gmra.mrb[0].mxu0 %v2837
  %v3047 = vpop.f32.mrb[0].mxu0
  %v3048 = vadd.f32 0.0, %v3047
  %v3049 = vpop.f32.mrb[0].mxu0
  %v3050 = vadd.f32 0.0, %v3049
  %3051 = vdwg.mxu0
  %3052 = vmatprep.subr.mxu0 %v2827
  %3053 = vmatpush1.msra.mxu0 %v2826
  %3054 = vmatprep.subr.mxu0 0.0
  %3055 = vmatpush1.msra.mxu0 0.0
  %3056 = vmatprep.subr.mxu0 0.0
  %3057 = vmatpush1.msra.mxu0 0.0
  %3058 = vmatprep.subr.mxu0 0.0
  %3059 = vmatpush1.msra.mxu0 0.0
  %3060 = vmatprep.subr.mxu0 0.0
  %3061 = vmatpush1.msra.mxu0 0.0
  %3062 = vmatprep.subr.mxu0 0.0
  %3063 = vmatpush1.msra.mxu0 0.0
  %3064 = vmatprep.subr.mxu0 0.0
  %3065 = vmatpush1.msra.mxu0 0.0
  %3066 = vmatprep.subr.mxu0 0.0
  %3067 = vmatpush1.msra.mxu0 0.0
  %3068 = vmatprep.subr.mxu0 0.0
  %3069 = vmatpush1.msra.mxu0 0.0
  %3070 = vmatprep.subr.mxu0 0.0
  %3071 = vmatpush1.msra.mxu0 0.0
  %3072 = vmatprep.subr.mxu0 0.0
  %3073 = vmatpush1.msra.mxu0 0.0
  %3074 = vmatprep.subr.mxu0 0.0
  %3075 = vmatpush1.msra.mxu0 0.0
  %3076 = vmatprep.subr.mxu0 0.0
  %3077 = vmatpush1.msra.mxu0 0.0
  %3078 = vmatprep.subr.mxu0 0.0
  %3079 = vmatpush1.msra.mxu0 0.0
  %3080 = vmatprep.subr.mxu0 0.0
  %3081 = vmatpush1.msra.mxu0 0.0
  %3082 = vmatprep.subr.mxu0 0.0
  %3083 = vmatpush1.msra.mxu0 0.0
  %3084 = vmatprep.subr.mxu0 0.0
  %3085 = vmatpush1.msra.mxu0 0.0
  %3086 = vmatprep.subr.mxu0 0.0
  %3087 = vmatpush1.msra.mxu0 0.0
  %3088 = vmatprep.subr.mxu0 0.0
  %3089 = vmatpush1.msra.mxu0 0.0
  %3090 = vmatprep.subr.mxu0 0.0
  %3091 = vmatpush1.msra.mxu0 0.0
  %3092 = vmatprep.subr.mxu0 0.0
  %3093 = vmatpush1.msra.mxu0 0.0
  %3094 = vmatprep.subr.mxu0 0.0
  %3095 = vmatpush1.msra.mxu0 0.0
  %3096 = vmatprep.subr.mxu0 0.0
  %3097 = vmatpush1.msra.mxu0 0.0
  %3098 = vmatprep.subr.mxu0 0.0
  %3099 = vmatpush1.msra.mxu0 0.0
  %3100 = vmatprep.subr.mxu0 0.0
  %3101 = vmatpush1.msra.mxu0 0.0
  %3102 = vmatprep.subr.mxu0 0.0
  %3103 = vmatpush1.msra.mxu0 0.0
  %3104 = vmatprep.subr.mxu0 0.0
  %3105 = vmatpush1.msra.mxu0 0.0
  %3106 = vmatprep.subr.mxu0 0.0
  %3107 = vmatpush1.msra.mxu0 0.0
  %3108 = vmatprep.subr.mxu0 0.0
  %3109 = vmatpush1.msra.mxu0 0.0
  %3110 = vmatprep.subr.mxu0 0.0
  %3111 = vmatpush1.msra.mxu0 0.0
  %3112 = vmatprep.subr.mxu0 0.0
  %3113 = vmatpush1.msra.mxu0 0.0
  %3114 = vmatprep.subr.mxu0 0.0
  %3115 = vmatpush1.msra.mxu0 0.0
  %3116 = vmatprep.mubr.f32.mxu0 0.0
  %3117 = vmatmul.mubr.f32.gmra.mrb[0].mxu0 %v2837
  %v3118 = vpop.f32.mrb[0].mxu0
  %v3119 = vadd.f32 0.0, %v3118
  %v3120 = vpop.f32.mrb[0].mxu0
  %v3121 = vadd.f32 0.0, %v3120
  %3122 = vdwg.mxu0
  %v3123 = vadd.f32 %v2791, %v2906
  %v3124 = vadd.f32 %v2792, %v2908
  %v3125 = vadd.f32 %v2793, %v2977
  %v3126 = vadd.f32 %v2794, %v2979
  %v3127 = vadd.f32 %v2795, %v3048
  %v3128 = vadd.f32 %v2796, %v3050
  %v3129 = vadd.f32 %v2797, %v3119
  %v3130 = vadd.f32 %v2798, %v3121
  %s3131 = scalar_lea.vmem %s4, 64
  %v3132 = vld [vmem:[%s3131] sm:$0xff]
  %3133 = vrot.lane.b32.xlu0 %v509, 78
  %v3134 = vpop.permute.xlu0 %3133
  %3135 = vrot.lane.b32.xlu0 %v510, 78
  %v3136 = vpop.permute.xlu0 %3135
  %3137 = vrot.lane.b32.xlu0 %v511, 78
  %v3138 = vpop.permute.xlu0 %3137
  %3139 = vrot.lane.b32.xlu0 %v512, 78
  %v3140 = vpop.permute.xlu0 %3139
  %3141 = vrot.lane.b32.xlu0 %v513, 78
  %v3142 = vpop.permute.xlu0 %3141
  %3143 = vrot.lane.b32.xlu0 %v514, 78
  %v3144 = vpop.permute.xlu0 %3143
  %3145 = vrot.lane.b32.xlu0 %v515, 78
  %v3146 = vpop.permute.xlu0 %3145
  %3147 = vrot.lane.b32.xlu0 %v516, 78
  %v3148 = vpop.permute.xlu0 %3147
  %3149 = vrot.lane.b32.xlu0 %v517, 78
  %v3150 = vpop.permute.xlu0 %3149
  %vm3151 = vcmask 637952
  %v3152 = vsel %vm3151, %v3134, %v3136
  %v3153 = vsel %vm3151, %v3136, %v3138
  %v3154 = vsel %vm3151, %v3138, %v3140
  %v3155 = vsel %vm3151, %v3140, %v3142
  %v3156 = vsel %vm3151, %v3142, %v3144
  %v3157 = vsel %vm3151, %v3144, %v3146
  %v3158 = vsel %vm3151, %v3146, %v3148
  %v3159 = vsel %vm3151, %v3148, %v3150
  %v3169 = vsel %vm69, %v3132, 0
  %3171 = vmatprep.subr.mxu0 %v3153
  %3172 = vmatpush1.msra.mxu0 %v3152
  %3173 = vmatprep.subr.mxu0 0.0
  %3174 = vmatpush1.msra.mxu0 0.0
  %3175 = vmatprep.subr.mxu0 0.0
  %3176 = vmatpush1.msra.mxu0 0.0
  %3177 = vmatprep.subr.mxu0 0.0
  %3178 = vmatpush1.msra.mxu0 0.0
  %3179 = vmatprep.subr.mxu0 0.0
  %3180 = vmatpush1.msra.mxu0 0.0
  %3181 = vmatprep.subr.mxu0 0.0
  %3182 = vmatpush1.msra.mxu0 0.0
  %3183 = vmatprep.subr.mxu0 0.0
  %3184 = vmatpush1.msra.mxu0 0.0
  %3185 = vmatprep.subr.mxu0 0.0
  %3186 = vmatpush1.msra.mxu0 0.0
  %3187 = vmatprep.subr.mxu0 0.0
  %3188 = vmatpush1.msra.mxu0 0.0
  %3189 = vmatprep.subr.mxu0 0.0
  %3190 = vmatpush1.msra.mxu0 0.0
  %3191 = vmatprep.subr.mxu0 0.0
  %3192 = vmatpush1.msra.mxu0 0.0
  %3193 = vmatprep.subr.mxu0 0.0
  %3194 = vmatpush1.msra.mxu0 0.0
  %3195 = vmatprep.subr.mxu0 0.0
  %3196 = vmatpush1.msra.mxu0 0.0
  %3197 = vmatprep.subr.mxu0 0.0
  %3198 = vmatpush1.msra.mxu0 0.0
  %3199 = vmatprep.subr.mxu0 0.0
  %3200 = vmatpush1.msra.mxu0 0.0
  %3201 = vmatprep.subr.mxu0 0.0
  %3202 = vmatpush1.msra.mxu0 0.0
  %3203 = vmatprep.subr.mxu0 0.0
  %3204 = vmatpush1.msra.mxu0 0.0
  %3205 = vmatprep.subr.mxu0 0.0
  %3206 = vmatpush1.msra.mxu0 0.0
  %3207 = vmatprep.subr.mxu0 0.0
  %3208 = vmatpush1.msra.mxu0 0.0
  %3209 = vmatprep.subr.mxu0 0.0
  %3210 = vmatpush1.msra.mxu0 0.0
  %3211 = vmatprep.subr.mxu0 0.0
  %3212 = vmatpush1.msra.mxu0 0.0
  %3213 = vmatprep.subr.mxu0 0.0
  %3214 = vmatpush1.msra.mxu0 0.0
  %3215 = vmatprep.subr.mxu0 0.0
  %3216 = vmatpush1.msra.mxu0 0.0
  %3217 = vmatprep.subr.mxu0 0.0
  %3218 = vmatpush1.msra.mxu0 0.0
  %3219 = vmatprep.subr.mxu0 0.0
  %3220 = vmatpush1.msra.mxu0 0.0
  %3221 = vmatprep.subr.mxu0 0.0
  %3222 = vmatpush1.msra.mxu0 0.0
  %3223 = vmatprep.subr.mxu0 0.0
  %3224 = vmatpush1.msra.mxu0 0.0
  %3225 = vmatprep.subr.mxu0 0.0
  %3226 = vmatpush1.msra.mxu0 0.0
  %3227 = vmatprep.subr.mxu0 0.0
  %3228 = vmatpush1.msra.mxu0 0.0
  %3229 = vmatprep.subr.mxu0 0.0
  %3230 = vmatpush1.msra.mxu0 0.0
  %3231 = vmatprep.subr.mxu0 0.0
  %3232 = vmatpush1.msra.mxu0 0.0
  %3233 = vmatprep.subr.mxu0 0.0
  %3234 = vmatpush1.msra.mxu0 0.0
  %3235 = vmatprep.mubr.f32.mxu0 0.0
  %3236 = vmatmul.mubr.f32.gmra.mrb[0].mxu0 %v3169
  %v3237 = vpop.f32.mrb[0].mxu0
  %v3238 = vadd.f32 0.0, %v3237
  %v3239 = vpop.f32.mrb[0].mxu0
  %v3240 = vadd.f32 0.0, %v3239
  %3241 = vdwg.mxu0
  %3242 = vmatprep.subr.mxu0 %v3155
  %3243 = vmatpush1.msra.mxu0 %v3154
  %3244 = vmatprep.subr.mxu0 0.0
  %3245 = vmatpush1.msra.mxu0 0.0
  %3246 = vmatprep.subr.mxu0 0.0
  %3247 = vmatpush1.msra.mxu0 0.0
  %3248 = vmatprep.subr.mxu0 0.0
  %3249 = vmatpush1.msra.mxu0 0.0
  %3250 = vmatprep.subr.mxu0 0.0
  %3251 = vmatpush1.msra.mxu0 0.0
  %3252 = vmatprep.subr.mxu0 0.0
  %3253 = vmatpush1.msra.mxu0 0.0
  %3254 = vmatprep.subr.mxu0 0.0
  %3255 = vmatpush1.msra.mxu0 0.0
  %3256 = vmatprep.subr.mxu0 0.0
  %3257 = vmatpush1.msra.mxu0 0.0
  %3258 = vmatprep.subr.mxu0 0.0
  %3259 = vmatpush1.msra.mxu0 0.0
  %3260 = vmatprep.subr.mxu0 0.0
  %3261 = vmatpush1.msra.mxu0 0.0
  %3262 = vmatprep.subr.mxu0 0.0
  %3263 = vmatpush1.msra.mxu0 0.0
  %3264 = vmatprep.subr.mxu0 0.0
  %3265 = vmatpush1.msra.mxu0 0.0
  %3266 = vmatprep.subr.mxu0 0.0
  %3267 = vmatpush1.msra.mxu0 0.0
  %3268 = vmatprep.subr.mxu0 0.0
  %3269 = vmatpush1.msra.mxu0 0.0
  %3270 = vmatprep.subr.mxu0 0.0
  %3271 = vmatpush1.msra.mxu0 0.0
  %3272 = vmatprep.subr.mxu0 0.0
  %3273 = vmatpush1.msra.mxu0 0.0
  %3274 = vmatprep.subr.mxu0 0.0
  %3275 = vmatpush1.msra.mxu0 0.0
  %3276 = vmatprep.subr.mxu0 0.0
  %3277 = vmatpush1.msra.mxu0 0.0
  %3278 = vmatprep.subr.mxu0 0.0
  %3279 = vmatpush1.msra.mxu0 0.0
  %3280 = vmatprep.subr.mxu0 0.0
  %3281 = vmatpush1.msra.mxu0 0.0
  %3282 = vmatprep.subr.mxu0 0.0
  %3283 = vmatpush1.msra.mxu0 0.0
  %3284 = vmatprep.subr.mxu0 0.0
  %3285 = vmatpush1.msra.mxu0 0.0
  %3286 = vmatprep.subr.mxu0 0.0
  %3287 = vmatpush1.msra.mxu0 0.0
  %3288 = vmatprep.subr.mxu0 0.0
  %3289 = vmatpush1.msra.mxu0 0.0
  %3290 = vmatprep.subr.mxu0 0.0
  %3291 = vmatpush1.msra.mxu0 0.0
  %3292 = vmatprep.subr.mxu0 0.0
  %3293 = vmatpush1.msra.mxu0 0.0
  %3294 = vmatprep.subr.mxu0 0.0
  %3295 = vmatpush1.msra.mxu0 0.0
  %3296 = vmatprep.subr.mxu0 0.0
  %3297 = vmatpush1.msra.mxu0 0.0
  %3298 = vmatprep.subr.mxu0 0.0
  %3299 = vmatpush1.msra.mxu0 0.0
  %3300 = vmatprep.subr.mxu0 0.0
  %3301 = vmatpush1.msra.mxu0 0.0
  %3302 = vmatprep.subr.mxu0 0.0
  %3303 = vmatpush1.msra.mxu0 0.0
  %3304 = vmatprep.subr.mxu0 0.0
  %3305 = vmatpush1.msra.mxu0 0.0
  %3306 = vmatprep.mubr.f32.mxu0 0.0
  %3307 = vmatmul.mubr.f32.gmra.mrb[0].mxu0 %v3169
  %v3308 = vpop.f32.mrb[0].mxu0
  %v3309 = vadd.f32 0.0, %v3308
  %v3310 = vpop.f32.mrb[0].mxu0
  %v3311 = vadd.f32 0.0, %v3310
  %3312 = vdwg.mxu0
  %3313 = vmatprep.subr.mxu0 %v3157
  %3314 = vmatpush1.msra.mxu0 %v3156
  %3315 = vmatprep.subr.mxu0 0.0
  %3316 = vmatpush1.msra.mxu0 0.0
  %3317 = vmatprep.subr.mxu0 0.0
  %3318 = vmatpush1.msra.mxu0 0.0
  %3319 = vmatprep.subr.mxu0 0.0
  %3320 = vmatpush1.msra.mxu0 0.0
  %3321 = vmatprep.subr.mxu0 0.0
  %3322 = vmatpush1.msra.mxu0 0.0
  %3323 = vmatprep.subr.mxu0 0.0
  %3324 = vmatpush1.msra.mxu0 0.0
  %3325 = vmatprep.subr.mxu0 0.0
  %3326 = vmatpush1.msra.mxu0 0.0
  %3327 = vmatprep.subr.mxu0 0.0
  %3328 = vmatpush1.msra.mxu0 0.0
  %3329 = vmatprep.subr.mxu0 0.0
  %3330 = vmatpush1.msra.mxu0 0.0
  %3331 = vmatprep.subr.mxu0 0.0
  %3332 = vmatpush1.msra.mxu0 0.0
  %3333 = vmatprep.subr.mxu0 0.0
  %3334 = vmatpush1.msra.mxu0 0.0
  %3335 = vmatprep.subr.mxu0 0.0
  %3336 = vmatpush1.msra.mxu0 0.0
  %3337 = vmatprep.subr.mxu0 0.0
  %3338 = vmatpush1.msra.mxu0 0.0
  %3339 = vmatprep.subr.mxu0 0.0
  %3340 = vmatpush1.msra.mxu0 0.0
  %3341 = vmatprep.subr.mxu0 0.0
  %3342 = vmatpush1.msra.mxu0 0.0
  %3343 = vmatprep.subr.mxu0 0.0
  %3344 = vmatpush1.msra.mxu0 0.0
  %3345 = vmatprep.subr.mxu0 0.0
  %3346 = vmatpush1.msra.mxu0 0.0
  %3347 = vmatprep.subr.mxu0 0.0
  %3348 = vmatpush1.msra.mxu0 0.0
  %3349 = vmatprep.subr.mxu0 0.0
  %3350 = vmatpush1.msra.mxu0 0.0
  %3351 = vmatprep.subr.mxu0 0.0
  %3352 = vmatpush1.msra.mxu0 0.0
  %3353 = vmatprep.subr.mxu0 0.0
  %3354 = vmatpush1.msra.mxu0 0.0
  %3355 = vmatprep.subr.mxu0 0.0
  %3356 = vmatpush1.msra.mxu0 0.0
  %3357 = vmatprep.subr.mxu0 0.0
  %3358 = vmatpush1.msra.mxu0 0.0
  %3359 = vmatprep.subr.mxu0 0.0
  %3360 = vmatpush1.msra.mxu0 0.0
  %3361 = vmatprep.subr.mxu0 0.0
  %3362 = vmatpush1.msra.mxu0 0.0
  %3363 = vmatprep.subr.mxu0 0.0
  %3364 = vmatpush1.msra.mxu0 0.0
  %3365 = vmatprep.subr.mxu0 0.0
  %3366 = vmatpush1.msra.mxu0 0.0
  %3367 = vmatprep.subr.mxu0 0.0
  %3368 = vmatpush1.msra.mxu0 0.0
  %3369 = vmatprep.subr.mxu0 0.0
  %3370 = vmatpush1.msra.mxu0 0.0
  %3371 = vmatprep.subr.mxu0 0.0
  %3372 = vmatpush1.msra.mxu0 0.0
  %3373 = vmatprep.subr.mxu0 0.0
  %3374 = vmatpush1.msra.mxu0 0.0
  %3375 = vmatprep.subr.mxu0 0.0
  %3376 = vmatpush1.msra.mxu0 0.0
  %3377 = vmatprep.mubr.f32.mxu0 0.0
  %3378 = vmatmul.mubr.f32.gmra.mrb[0].mxu0 %v3169
  %v3379 = vpop.f32.mrb[0].mxu0
  %v3380 = vadd.f32 0.0, %v3379
  %v3381 = vpop.f32.mrb[0].mxu0
  %v3382 = vadd.f32 0.0, %v3381
  %3383 = vdwg.mxu0
  %3384 = vmatprep.subr.mxu0 %v3159
  %3385 = vmatpush1.msra.mxu0 %v3158
  %3386 = vmatprep.subr.mxu0 0.0
  %3387 = vmatpush1.msra.mxu0 0.0
  %3388 = vmatprep.subr.mxu0 0.0
  %3389 = vmatpush1.msra.mxu0 0.0
  %3390 = vmatprep.subr.mxu0 0.0
  %3391 = vmatpush1.msra.mxu0 0.0
  %3392 = vmatprep.subr.mxu0 0.0
  %3393 = vmatpush1.msra.mxu0 0.0
  %3394 = vmatprep.subr.mxu0 0.0
  %3395 = vmatpush1.msra.mxu0 0.0
  %3396 = vmatprep.subr.mxu0 0.0
  %3397 = vmatpush1.msra.mxu0 0.0
  %3398 = vmatprep.subr.mxu0 0.0
  %3399 = vmatpush1.msra.mxu0 0.0
  %3400 = vmatprep.subr.mxu0 0.0
  %3401 = vmatpush1.msra.mxu0 0.0
  %3402 = vmatprep.subr.mxu0 0.0
  %3403 = vmatpush1.msra.mxu0 0.0
  %3404 = vmatprep.subr.mxu0 0.0
  %3405 = vmatpush1.msra.mxu0 0.0
  %3406 = vmatprep.subr.mxu0 0.0
  %3407 = vmatpush1.msra.mxu0 0.0
  %3408 = vmatprep.subr.mxu0 0.0
  %3409 = vmatpush1.msra.mxu0 0.0
  %3410 = vmatprep.subr.mxu0 0.0
  %3411 = vmatpush1.msra.mxu0 0.0
  %3412 = vmatprep.subr.mxu0 0.0
  %3413 = vmatpush1.msra.mxu0 0.0
  %3414 = vmatprep.subr.mxu0 0.0
  %3415 = vmatpush1.msra.mxu0 0.0
  %3416 = vmatprep.subr.mxu0 0.0
  %3417 = vmatpush1.msra.mxu0 0.0
  %3418 = vmatprep.subr.mxu0 0.0
  %3419 = vmatpush1.msra.mxu0 0.0
  %3420 = vmatprep.subr.mxu0 0.0
  %3421 = vmatpush1.msra.mxu0 0.0
  %3422 = vmatprep.subr.mxu0 0.0
  %3423 = vmatpush1.msra.mxu0 0.0
  %3424 = vmatprep.subr.mxu0 0.0
  %3425 = vmatpush1.msra.mxu0 0.0
  %3426 = vmatprep.subr.mxu0 0.0
  %3427 = vmatpush1.msra.mxu0 0.0
  %3428 = vmatprep.subr.mxu0 0.0
  %3429 = vmatpush1.msra.mxu0 0.0
  %3430 = vmatprep.subr.mxu0 0.0
  %3431 = vmatpush1.msra.mxu0 0.0
  %3432 = vmatprep.subr.mxu0 0.0
  %3433 = vmatpush1.msra.mxu0 0.0
  %3434 = vmatprep.subr.mxu0 0.0
  %3435 = vmatpush1.msra.mxu0 0.0
  %3436 = vmatprep.subr.mxu0 0.0
  %3437 = vmatpush1.msra.mxu0 0.0
  %3438 = vmatprep.subr.mxu0 0.0
  %3439 = vmatpush1.msra.mxu0 0.0
  %3440 = vmatprep.subr.mxu0 0.0
  %3441 = vmatpush1.msra.mxu0 0.0
  %3442 = vmatprep.subr.mxu0 0.0
  %3443 = vmatpush1.msra.mxu0 0.0
  %3444 = vmatprep.subr.mxu0 0.0
  %3445 = vmatpush1.msra.mxu0 0.0
  %3446 = vmatprep.subr.mxu0 0.0
  %3447 = vmatpush1.msra.mxu0 0.0
  %3448 = vmatprep.mubr.f32.mxu0 0.0
  %3449 = vmatmul.mubr.f32.gmra.mrb[0].mxu0 %v3169
  %v3450 = vpop.f32.mrb[0].mxu0
  %v3451 = vadd.f32 0.0, %v3450
  %v3452 = vpop.f32.mrb[0].mxu0
  %v3453 = vadd.f32 0.0, %v3452
  %3454 = vdwg.mxu0
  %v3455 = vadd.f32 %v3123, %v3238
  %v3456 = vadd.f32 %v3124, %v3240
  %v3457 = vadd.f32 %v3125, %v3309
  %v3458 = vadd.f32 %v3126, %v3311
  %v3459 = vadd.f32 %v3127, %v3380
  %v3460 = vadd.f32 %v3128, %v3382
  %v3461 = vadd.f32 %v3129, %v3451
  %v3462 = vadd.f32 %v3130, %v3453
  %3471 = vrot.lane.b32.xlu0 %v3455, 25
  %v3472 = vpop.permute.xlu0 %3471
  %3473 = vrot.lane.b32.xlu0 %v3456, 25
  %v3474 = vpop.permute.xlu0 %3473
  %3475 = vrot.lane.b32.xlu0 %v3457, 25
  %v3476 = vpop.permute.xlu0 %3475
  %3477 = vrot.lane.b32.xlu0 %v3458, 25
  %v3478 = vpop.permute.xlu0 %3477
  %3479 = vrot.lane.b32.xlu0 %v3459, 25
  %v3480 = vpop.permute.xlu0 %3479
  %3481 = vrot.lane.b32.xlu0 %v3460, 25
  %v3482 = vpop.permute.xlu0 %3481
  %3483 = vrot.lane.b32.xlu0 %v3461, 25
  %v3484 = vpop.permute.xlu0 %3483
  %3485 = vrot.lane.b32.xlu0 %v3462, 25
  %v3486 = vpop.permute.xlu0 %3485
  %vm3487 = vcmask 203776
  %v3488 = vsel %vm3487, %v3472, %v3474
  %v3489 = vsel %vm3487, %v3474, %v3476
  %v3490 = vsel %vm3487, %v3476, %v3478
  %v3491 = vsel %vm3487, %v3478, %v3480
  %v3492 = vsel %vm3487, %v3480, %v3482
  %v3493 = vsel %vm3487, %v3482, %v3484
  %v3494 = vsel %vm3487, %v3484, %v3486
  %v3504 = vadd.f32 %v20, %v3472
  %v3505 = vadd.f32 %v21, %v3488
  %v3506 = vadd.f32 %v22, %v3489
  %v3507 = vadd.f32 %v23, %v3490
  %v3508 = vadd.f32 %v24, %v3491
  %v3509 = vadd.f32 %v25, %v3492
  %v3510 = vadd.f32 %v26, %v3493
  %v3511 = vadd.f32 %v27, %v3494
  %v3512 = vadd.f32 %v28, %v3486
  %3522 = vrot.lane.b32.xlu0 %v3504, 103
  %v3523 = vpop.permute.xlu0 %3522
  %3524 = vrot.lane.b32.xlu0 %v3505, 103
  %v3525 = vpop.permute.xlu0 %3524
  %3526 = vrot.lane.b32.xlu0 %v3506, 103
  %v3527 = vpop.permute.xlu0 %3526
  %3528 = vrot.lane.b32.xlu0 %v3507, 103
  %v3529 = vpop.permute.xlu0 %3528
  %3530 = vrot.lane.b32.xlu0 %v3508, 103
  %v3531 = vpop.permute.xlu0 %3530
  %3532 = vrot.lane.b32.xlu0 %v3509, 103
  %v3533 = vpop.permute.xlu0 %3532
  %3534 = vrot.lane.b32.xlu0 %v3510, 103
  %v3535 = vpop.permute.xlu0 %3534
  %3536 = vrot.lane.b32.xlu0 %v3511, 103
  %v3537 = vpop.permute.xlu0 %3536
  %3538 = vrot.lane.b32.xlu0 %v3512, 103
  %v3539 = vpop.permute.xlu0 %3538
  %v3540 = vsel %vm1823, %v3523, %v3525
  %v3541 = vsel %vm1823, %v3525, %v3527
  %v3542 = vsel %vm1823, %v3527, %v3529
  %v3543 = vsel %vm1823, %v3529, %v3531
  %v3544 = vsel %vm1823, %v3531, %v3533
  %v3545 = vsel %vm1823, %v3533, %v3535
  %v3546 = vsel %vm1823, %v3535, %v3537
  %v3547 = vsel %vm1823, %v3537, %v3539
  %3556 = vst [vmem:[%s5] sm:$0xff] %v3540
  %3557 = vst [vmem:[%s5 + $0x8] sm:$0xff] %v3541
  %3558 = vst [vmem:[%s5 + $0x10] sm:$0xff] %v3542
  %3559 = vst [vmem:[%s5 + $0x18] sm:$0xff] %v3543
  %3560 = vst [vmem:[%s5 + $0x20] sm:$0xff] %v3544
  %3561 = vst [vmem:[%s5 + $0x28] sm:$0xff] %v3545
  %3562 = vst [vmem:[%s5 + $0x30] sm:$0xff] %v3546
  %3563 = vst [vmem:[%s5 + $0x38] sm:$0xff] %v3547
  // Predicated region
  $region22: #{resblock_forward.1} parent=0 // pred_check
    _
  $region23: #{resblock_forward.1} parent=0 // pred_check_branch
    %3565 = sbr.rel (0) target = $region25
  $region24: #{resblock_forward.1} parent=0 // pred_region
    _
  $region25: #{resblock_forward.1} parent=0 // pred_fallthru
    _
  // Predicated region
  $region26: #{resblock_forward.1} parent=0 // pred_check
    _
  $region27: #{resblock_forward.1} parent=0 // pred_check_branch
    %3567 = sbr.rel (0) target = $region29
  $region28: #{resblock_forward.1} parent=0 // pred_region
    _
  $region29: #{resblock_forward.1} parent=0 // pred_fallthru
    _

</llo_original>
